<compile_context>
chip_gen: v6e
topology: v6e:2x2x1
jax: 0.10.0
libtpu: 0.0.40
codegen_flags: <defaults>
</compile_context>

<pallas_src>
import jax
import jax.numpy as jnp
import numpy as np
from jax import lax
from jax.experimental import pallas as pl
from jax.experimental.pallas import tpu as pltpu


# ----------------------------- Fused Pallas kernel ------------------------------


def _make_fused_lstm_kernel(num_layers, T, H):
    """Builds the fused kernel body for fixed (num_layers, T, H).

    Kernel refs (in order):
      x_ref:                  (T, B, D0)  time-major padded input
      per layer l:            wih (D_l, 4H), whh (H, 4H), b (1, 4H)
      wpred_ref:              (H, O)
      bpred_ref:              (1, O)
      out_ref:                (B, O)
      act_ref (scratch):      (T, B, H)   inter-layer activations (VMEM)
    Gate order along the 4H lane axis is i, f, g, o (PyTorch convention).
    """

    def kernel(*refs):
        x_ref = refs[0]
        layer_refs = refs[1:1 + 3 * num_layers]
        wpred_ref = refs[1 + 3 * num_layers]
        bpred_ref = refs[2 + 3 * num_layers]
        out_ref = refs[3 + 3 * num_layers]
        act_ref = refs[4 + 3 * num_layers]

        B = out_ref.shape[0]
        h_last = jnp.zeros((B, H), jnp.float32)

        for layer in range(num_layers):
            # Grid-invariant weights: loaded once, resident in VMEM/vregs.
            wih = layer_refs[3 * layer][...]       # (D, 4H)
            whh = layer_refs[3 * layer + 1][...]   # (H, 4H)
            b = layer_refs[3 * layer + 2][...]     # (1, 4H)
            in_ref = x_ref if layer == 0 else act_ref
            write_act = layer < num_layers - 1     # last layer only needs the carry

            def step(t, carry, in_ref=in_ref, wih=wih, whh=whh, b=b,
                     write_act=write_act):
                h_prev, c_prev = carry
                x_t = in_ref[t]                                     # (B, D)
                # Two fused matmuls, lane-dense N = 4H.
                gates = (
                    jnp.dot(x_t, wih, preferred_element_type=jnp.float32)
                    + jnp.dot(h_prev, whh, preferred_element_type=jnp.float32)
                    + b
                )                                                   # (B, 4H)
                i_g = jax.nn.sigmoid(gates[:, 0 * H:1 * H])
                f_g = jax.nn.sigmoid(gates[:, 1 * H:2 * H])
                g_g = jnp.tanh(gates[:, 2 * H:3 * H])
                o_g = jax.nn.sigmoid(gates[:, 3 * H:4 * H])
                c_new = f_g * c_prev + i_g * g_g
                h_new = o_g * jnp.tanh(c_new)
                if write_act:
                    act_ref[t] = h_new       # feeds the next layer (stays in VMEM)
                return (h_new, c_new)

            h0 = jnp.zeros((B, H), jnp.float32)
            c0 = jnp.zeros((B, H), jnp.float32)
            h_last, _ = lax.fori_loop(0, T, step, (h0, c0), unroll=True)

        # Final Linear head fused into the same kernel; single output store.
        out_ref[...] = (
            jnp.dot(h_last, wpred_ref[...], preferred_element_type=jnp.float32)
            + bpred_ref[...]
        )

    return kernel


# ----------------------------------- Wrapper -------------------------------------


def _lstm_model_forward(x, layer_params, w_pred, b_pred):
    """Mirrors the PyTorch LSTM module forward.

    x: (B, T, input_size) batch_first  ->  (B, 1, input_size)
    layer_params: tuple of (wih (D,4H), whh (H,4H), b (1,4H)) per layer.
    w_pred: (H, input_size), b_pred: (1, input_size).
    """
    B, T, _ = x.shape
    H = layer_params[0][1].shape[0]
    O = w_pred.shape[-1]
    num_layers = len(layer_params)

    # Pad batch to a multiple of 8 sublanes; extra rows are discarded afterwards.
    B_pad = ((B + 7) // 8) * 8
    x_tm = jnp.transpose(x, (1, 0, 2))                       # (T, B, D) time-major
    if B_pad != B:
        x_tm = jnp.pad(x_tm, ((0, 0), (0, B_pad - B), (0, 0)))

    args = [x_tm]
    for (wih, whh, b) in layer_params:
        args += [wih, whh, b]
    args += [w_pred, b_pred]

    y = pl.pallas_call(
        _make_fused_lstm_kernel(num_layers, T, H),
        out_shape=jax.ShapeDtypeStruct((B_pad, O), jnp.float32),
        scratch_shapes=[pltpu.VMEM((T, B_pad, H), jnp.float32)],
    )(*args)
    return y[:B, None, :]                                     # (B, 1, input_size)


lstm_model_forward = jax.jit(_lstm_model_forward)


# ------------------------- Parameter construction ---------------------------


def make_params(key, input_size, hidden_size, num_layers):
    """Deterministic params in PyTorch layout, plus fused kernel layout."""
    H = hidden_size
    bound = 1.0 / np.sqrt(H)
    torch_layers = []
    kernel_layers = []
    for layer in range(num_layers):
        D = input_size if layer == 0 else H
        key, k1, k2, k3, k4 = jax.random.split(key, 5)
        w_ih = jax.random.uniform(k1, (4 * H, D), jnp.float32, -bound, bound)
        w_hh = jax.random.uniform(k2, (4 * H, H), jnp.float32, -bound, bound)
        b_ih = jax.random.uniform(k3, (4 * H,), jnp.float32, -bound, bound)
        b_hh = jax.random.uniform(k4, (4 * H,), jnp.float32, -bound, bound)
        torch_layers.append((w_ih, w_hh, b_ih, b_hh))
        # Fused kernel layout: inputs on rows, gates (i,f,g,o) concatenated along lanes.
        kernel_layers.append(
            (w_ih.T, w_hh.T, (b_ih + b_hh).reshape(1, 4 * H))
        )
    key, k5, k6 = jax.random.split(key, 3)
    w_pred_t = jax.random.uniform(k5, (input_size, H), jnp.float32, -bound, bound)
    b_pred_t = jax.random.uniform(k6, (input_size,), jnp.float32, -bound, bound)
    w_pred_k = w_pred_t.T                       # (H, input_size)
    b_pred_k = b_pred_t.reshape(1, input_size)  # (1, input_size)
    return torch_layers, tuple(kernel_layers), (w_pred_t, b_pred_t), (w_pred_k, b_pred_k)


# --------------------------- Pure-JAX reference ------------------------------


def ref_forward(x, torch_layers, w_pred_t, b_pred_t, hidden_size):
    B, T, _ = x.shape
    H = hidden_size
    inp = x
    for (w_ih, w_hh, b_ih, b_hh) in torch_layers:
        h = jnp.zeros((B, H), jnp.float32)
        c = jnp.zeros((B, H), jnp.float32)
        outs = []
        for t in range(T):
            gates = inp[:, t] @ w_ih.T + b_ih + h @ w_hh.T + b_hh
            i = jax.nn.sigmoid(gates[:, 0:H])
            f = jax.nn.sigmoid(gates[:, H:2 * H])
            g = jnp.tanh(gates[:, 2 * H:3 * H])
            o = jax.nn.sigmoid(gates[:, 3 * H:4 * H])
            c = f * c + i * g
            h = o * jnp.tanh(c)
            outs.append(h)
        inp = jnp.stack(outs, axis=1)
    last = inp[:, -1, :]
    return (last @ w_pred_t.T + b_pred_t).reshape(B, 1, -1)


# ----------------------------------- Main ------------------------------------

if __name__ == "__main__":
    B, T = 2, 8
    input_size, hidden_size, num_layers = 16, 32, 2

    key = jax.random.PRNGKey(0)
    key, kx = jax.random.split(key)
    x = jax.random.normal(kx, (B, T, input_size), jnp.float32)

    torch_layers, kernel_layers, (w_pred_t, b_pred_t), (w_pred_k, b_pred_k) = make_params(
        key, input_size, hidden_size, num_layers
    )

    out = lstm_model_forward(x, kernel_layers, w_pred_k, b_pred_k)
    out = jax.block_until_ready(out)

    ref = ref_forward(x, torch_layers, w_pred_t, b_pred_t, hidden_size)
    assert out.shape == (B, 1, input_size), out.shape
    np.testing.assert_allclose(np.asarray(out), np.asarray(ref), atol=1e-4, rtol=1e-4)

    print("KERNEL_OK")
</pallas_src>

<mosaic_0001>
module attributes {stable_mosaic.version = 11 : i64} {
  func.func @kernel(%arg0: memref<8x8x16xf32, #tpu.memory_space<vmem>>, %arg1: memref<16x128xf32, #tpu.memory_space<vmem>>, %arg2: memref<32x128xf32, #tpu.memory_space<vmem>>, %arg3: memref<1x128xf32, #tpu.memory_space<vmem>>, %arg4: memref<32x128xf32, #tpu.memory_space<vmem>>, %arg5: memref<32x128xf32, #tpu.memory_space<vmem>>, %arg6: memref<1x128xf32, #tpu.memory_space<vmem>>, %arg7: memref<32x16xf32, #tpu.memory_space<vmem>>, %arg8: memref<1x16xf32, #tpu.memory_space<vmem>>, %arg9: memref<8x16xf32, #tpu.memory_space<vmem>>, %arg10: memref<8x8x32xf32, #tpu.memory_space<vmem>>) attributes {dimension_semantics = [], scalar_prefetch = 0 : i64, scratch_operands = 1 : i64, tpu.core_type = #tpu.core_type<tc>} {
    %c0 = arith.constant 0 : index
    %c0_0 = arith.constant 0 : index
    %0 = vector.load %arg1[%c0, %c0_0] : memref<16x128xf32, #tpu.memory_space<vmem>>, vector<16x128xf32>
    %c0_1 = arith.constant 0 : index
    %c0_2 = arith.constant 0 : index
    %1 = vector.load %arg2[%c0_1, %c0_2] : memref<32x128xf32, #tpu.memory_space<vmem>>, vector<32x128xf32>
    %c0_3 = arith.constant 0 : index
    %c0_4 = arith.constant 0 : index
    %2 = vector.load %arg3[%c0_3, %c0_4] : memref<1x128xf32, #tpu.memory_space<vmem>>, vector<1x128xf32>
    %cst = arith.constant 0.000000e+00 : f32
    %3 = vector.broadcast %cst : f32 to vector<8x32xf32>
    %cst_5 = arith.constant 0.000000e+00 : f32
    %4 = vector.broadcast %cst_5 : f32 to vector<8x32xf32>
    %c0_i32 = arith.constant 0 : i32
    %5 = arith.index_cast %c0_i32 : i32 to index
    %c0_6 = arith.constant 0 : index
    %c0_7 = arith.constant 0 : index
    %6 = vector.load %arg0[%5, %c0_6, %c0_7] : memref<8x8x16xf32, #tpu.memory_space<vmem>>, vector<1x8x16xf32>
    %7 = vector.shape_cast %6 : vector<1x8x16xf32> to vector<8x16xf32>
    %cst_8 = arith.constant dense<0.000000e+00> : vector<8x128xf32>
    %8 = tpu.matmul %7, %0, %cst_8 {dimension_numbers = #tpu.dot_dimension_numbers<[1], [0], [0], [1], [0, 0, 1, 1], [], []>} : vector<8x16xf32>, vector<16x128xf32>, vector<8x128xf32> -> vector<8x128xf32>
    %cst_9 = arith.constant dense<0.000000e+00> : vector<8x128xf32>
    %9 = tpu.matmul %3, %1, %cst_9 {dimension_numbers = #tpu.dot_dimension_numbers<[1], [0], [0], [1], [0, 0, 1, 1], [], []>} : vector<8x32xf32>, vector<32x128xf32>, vector<8x128xf32> -> vector<8x128xf32>
    %10 = arith.addf %8, %9 : vector<8x128xf32>
    %11 = vector.broadcast %2 : vector<1x128xf32> to vector<8x128xf32>
    %12 = arith.addf %10, %11 : vector<8x128xf32>
    %13 = vector.extract_strided_slice %12 {offsets = [0, 0], sizes = [8, 32], strides = [1, 1]} : vector<8x128xf32> to vector<8x32xf32>
    %14 = arith.negf %13 : vector<8x32xf32>
    %15 = math.exp %14 : vector<8x32xf32>
    %cst_10 = arith.constant 1.000000e+00 : f32
    %16 = vector.broadcast %cst_10 : f32 to vector<8x32xf32>
    %17 = arith.addf %16, %15 : vector<8x32xf32>
    %18 = arith.divf %16, %17 : vector<8x32xf32>
    %19 = vector.extract_strided_slice %12 {offsets = [0, 32], sizes = [8, 32], strides = [1, 1]} : vector<8x128xf32> to vector<8x32xf32>
    %20 = arith.negf %19 : vector<8x32xf32>
    %21 = math.exp %20 : vector<8x32xf32>
    %cst_11 = arith.constant 1.000000e+00 : f32
    %22 = vector.broadcast %cst_11 : f32 to vector<8x32xf32>
    %23 = arith.addf %22, %21 : vector<8x32xf32>
    %24 = arith.divf %22, %23 : vector<8x32xf32>
    %25 = vector.extract_strided_slice %12 {offsets = [0, 64], sizes = [8, 32], strides = [1, 1]} : vector<8x128xf32> to vector<8x32xf32>
    %26 = math.tanh %25 : vector<8x32xf32>
    %27 = vector.extract_strided_slice %12 {offsets = [0, 96], sizes = [8, 32], strides = [1, 1]} : vector<8x128xf32> to vector<8x32xf32>
    %28 = arith.negf %27 : vector<8x32xf32>
    %29 = math.exp %28 : vector<8x32xf32>
    %cst_12 = arith.constant 1.000000e+00 : f32
    %30 = vector.broadcast %cst_12 : f32 to vector<8x32xf32>
    %31 = arith.addf %30, %29 : vector<8x32xf32>
    %32 = arith.divf %30, %31 : vector<8x32xf32>
    %33 = arith.mulf %24, %4 : vector<8x32xf32>
    %34 = arith.mulf %18, %26 : vector<8x32xf32>
    %35 = arith.addf %33, %34 : vector<8x32xf32>
    %36 = math.tanh %35 : vector<8x32xf32>
    %37 = arith.mulf %32, %36 : vector<8x32xf32>
    %38 = arith.index_cast %c0_i32 : i32 to index
    %c0_13 = arith.constant 0 : index
    %c0_14 = arith.constant 0 : index
    %39 = vector.load %arg10[%38, %c0_13, %c0_14] : memref<8x8x32xf32, #tpu.memory_space<vmem>>, vector<1x8x32xf32>
    %40 = vector.shape_cast %39 : vector<1x8x32xf32> to vector<8x32xf32>
    %41 = vector.shape_cast %37 : vector<8x32xf32> to vector<1x8x32xf32>
    tpu.vector_store %arg10[%38, %c0_13, %c0_14], %41 {strides = array<i32>} : memref<8x8x32xf32, #tpu.memory_space<vmem>>, vector<1x8x32xf32>,
    %c1_i32 = arith.constant 1 : i32
    %42 = arith.index_cast %c1_i32 : i32 to index
    %c0_15 = arith.constant 0 : index
    %c0_16 = arith.constant 0 : index
    %43 = vector.load %arg0[%42, %c0_15, %c0_16] : memref<8x8x16xf32, #tpu.memory_space<vmem>>, vector<1x8x16xf32>
    %44 = vector.shape_cast %43 : vector<1x8x16xf32> to vector<8x16xf32>
    %cst_17 = arith.constant dense<0.000000e+00> : vector<8x128xf32>
    %45 = tpu.matmul %44, %0, %cst_17 {dimension_numbers = #tpu.dot_dimension_numbers<[1], [0], [0], [1], [0, 0, 1, 1], [], []>} : vector<8x16xf32>, vector<16x128xf32>, vector<8x128xf32> -> vector<8x128xf32>
    %cst_18 = arith.constant dense<0.000000e+00> : vector<8x128xf32>
    %46 = tpu.matmul %37, %1, %cst_18 {dimension_numbers = #tpu.dot_dimension_numbers<[1], [0], [0], [1], [0, 0, 1, 1], [], []>} : vector<8x32xf32>, vector<32x128xf32>, vector<8x128xf32> -> vector<8x128xf32>
    %47 = arith.addf %45, %46 : vector<8x128xf32>
    %48 = vector.broadcast %2 : vector<1x128xf32> to vector<8x128xf32>
    %49 = arith.addf %47, %48 : vector<8x128xf32>
    %50 = vector.extract_strided_slice %49 {offsets = [0, 0], sizes = [8, 32], strides = [1, 1]} : vector<8x128xf32> to vector<8x32xf32>
    %51 = arith.negf %50 : vector<8x32xf32>
    %52 = math.exp %51 : vector<8x32xf32>
    %cst_19 = arith.constant 1.000000e+00 : f32
    %53 = vector.broadcast %cst_19 : f32 to vector<8x32xf32>
    %54 = arith.addf %53, %52 : vector<8x32xf32>
    %55 = arith.divf %53, %54 : vector<8x32xf32>
    %56 = vector.extract_strided_slice %49 {offsets = [0, 32], sizes = [8, 32], strides = [1, 1]} : vector<8x128xf32> to vector<8x32xf32>
    %57 = arith.negf %56 : vector<8x32xf32>
    %58 = math.exp %57 : vector<8x32xf32>
    %cst_20 = arith.constant 1.000000e+00 : f32
    %59 = vector.broadcast %cst_20 : f32 to vector<8x32xf32>
    %60 = arith.addf %59, %58 : vector<8x32xf32>
    %61 = arith.divf %59, %60 : vector<8x32xf32>
    %62 = vector.extract_strided_slice %49 {offsets = [0, 64], sizes = [8, 32], strides = [1, 1]} : vector<8x128xf32> to vector<8x32xf32>
    %63 = math.tanh %62 : vector<8x32xf32>
    %64 = vector.extract_strided_slice %49 {offsets = [0, 96], sizes = [8, 32], strides = [1, 1]} : vector<8x128xf32> to vector<8x32xf32>
    %65 = arith.negf %64 : vector<8x32xf32>
    %66 = math.exp %65 : vector<8x32xf32>
    %cst_21 = arith.constant 1.000000e+00 : f32
    %67 = vector.broadcast %cst_21 : f32 to vector<8x32xf32>
    %68 = arith.addf %67, %66 : vector<8x32xf32>
    %69 = arith.divf %67, %68 : vector<8x32xf32>
    %70 = arith.mulf %61, %35 : vector<8x32xf32>
    %71 = arith.mulf %55, %63 : vector<8x32xf32>
    %72 = arith.addf %70, %71 : vector<8x32xf32>
    %73 = math.tanh %72 : vector<8x32xf32>
    %74 = arith.mulf %69, %73 : vector<8x32xf32>
    %75 = arith.index_cast %c1_i32 : i32 to index
    %c0_22 = arith.constant 0 : index
    %c0_23 = arith.constant 0 : index
    %76 = vector.load %arg10[%75, %c0_22, %c0_23] : memref<8x8x32xf32, #tpu.memory_space<vmem>>, vector<1x8x32xf32>
    %77 = vector.shape_cast %76 : vector<1x8x32xf32> to vector<8x32xf32>
    %78 = vector.shape_cast %74 : vector<8x32xf32> to vector<1x8x32xf32>
    tpu.vector_store %arg10[%75, %c0_22, %c0_23], %78 {strides = array<i32>} : memref<8x8x32xf32, #tpu.memory_space<vmem>>, vector<1x8x32xf32>,
    %c2_i32 = arith.constant 2 : i32
    %79 = arith.index_cast %c2_i32 : i32 to index
    %c0_24 = arith.constant 0 : index
    %c0_25 = arith.constant 0 : index
    %80 = vector.load %arg0[%79, %c0_24, %c0_25] : memref<8x8x16xf32, #tpu.memory_space<vmem>>, vector<1x8x16xf32>
    %81 = vector.shape_cast %80 : vector<1x8x16xf32> to vector<8x16xf32>
    %cst_26 = arith.constant dense<0.000000e+00> : vector<8x128xf32>
    %82 = tpu.matmul %81, %0, %cst_26 {dimension_numbers = #tpu.dot_dimension_numbers<[1], [0], [0], [1], [0, 0, 1, 1], [], []>} : vector<8x16xf32>, vector<16x128xf32>, vector<8x128xf32> -> vector<8x128xf32>
    %cst_27 = arith.constant dense<0.000000e+00> : vector<8x128xf32>
    %83 = tpu.matmul %74, %1, %cst_27 {dimension_numbers = #tpu.dot_dimension_numbers<[1], [0], [0], [1], [0, 0, 1, 1], [], []>} : vector<8x32xf32>, vector<32x128xf32>, vector<8x128xf32> -> vector<8x128xf32>
    %84 = arith.addf %82, %83 : vector<8x128xf32>
    %85 = vector.broadcast %2 : vector<1x128xf32> to vector<8x128xf32>
    %86 = arith.addf %84, %85 : vector<8x128xf32>
    %87 = vector.extract_strided_slice %86 {offsets = [0, 0], sizes = [8, 32], strides = [1, 1]} : vector<8x128xf32> to vector<8x32xf32>
    %88 = arith.negf %87 : vector<8x32xf32>
    %89 = math.exp %88 : vector<8x32xf32>
    %cst_28 = arith.constant 1.000000e+00 : f32
    %90 = vector.broadcast %cst_28 : f32 to vector<8x32xf32>
    %91 = arith.addf %90, %89 : vector<8x32xf32>
    %92 = arith.divf %90, %91 : vector<8x32xf32>
    %93 = vector.extract_strided_slice %86 {offsets = [0, 32], sizes = [8, 32], strides = [1, 1]} : vector<8x128xf32> to vector<8x32xf32>
    %94 = arith.negf %93 : vector<8x32xf32>
    %95 = math.exp %94 : vector<8x32xf32>
    %cst_29 = arith.constant 1.000000e+00 : f32
    %96 = vector.broadcast %cst_29 : f32 to vector<8x32xf32>
    %97 = arith.addf %96, %95 : vector<8x32xf32>
    %98 = arith.divf %96, %97 : vector<8x32xf32>
    %99 = vector.extract_strided_slice %86 {offsets = [0, 64], sizes = [8, 32], strides = [1, 1]} : vector<8x128xf32> to vector<8x32xf32>
    %100 = math.tanh %99 : vector<8x32xf32>
    %101 = vector.extract_strided_slice %86 {offsets = [0, 96], sizes = [8, 32], strides = [1, 1]} : vector<8x128xf32> to vector<8x32xf32>
    %102 = arith.negf %101 : vector<8x32xf32>
    %103 = math.exp %102 : vector<8x32xf32>
    %cst_30 = arith.constant 1.000000e+00 : f32
    %104 = vector.broadcast %cst_30 : f32 to vector<8x32xf32>
    %105 = arith.addf %104, %103 : vector<8x32xf32>
    %106 = arith.divf %104, %105 : vector<8x32xf32>
    %107 = arith.mulf %98, %72 : vector<8x32xf32>
    %108 = arith.mulf %92, %100 : vector<8x32xf32>
    %109 = arith.addf %107, %108 : vector<8x32xf32>
    %110 = math.tanh %109 : vector<8x32xf32>
    %111 = arith.mulf %106, %110 : vector<8x32xf32>
    %112 = arith.index_cast %c2_i32 : i32 to index
    %c0_31 = arith.constant 0 : index
    %c0_32 = arith.constant 0 : index
    %113 = vector.load %arg10[%112, %c0_31, %c0_32] : memref<8x8x32xf32, #tpu.memory_space<vmem>>, vector<1x8x32xf32>
    %114 = vector.shape_cast %113 : vector<1x8x32xf32> to vector<8x32xf32>
    %115 = vector.shape_cast %111 : vector<8x32xf32> to vector<1x8x32xf32>
    tpu.vector_store %arg10[%112, %c0_31, %c0_32], %115 {strides = array<i32>} : memref<8x8x32xf32, #tpu.memory_space<vmem>>, vector<1x8x32xf32>,
    %c3_i32 = arith.constant 3 : i32
    %116 = arith.index_cast %c3_i32 : i32 to index
    %c0_33 = arith.constant 0 : index
    %c0_34 = arith.constant 0 : index
    %117 = vector.load %arg0[%116, %c0_33, %c0_34] : memref<8x8x16xf32, #tpu.memory_space<vmem>>, vector<1x8x16xf32>
    %118 = vector.shape_cast %117 : vector<1x8x16xf32> to vector<8x16xf32>
    %cst_35 = arith.constant dense<0.000000e+00> : vector<8x128xf32>
    %119 = tpu.matmul %118, %0, %cst_35 {dimension_numbers = #tpu.dot_dimension_numbers<[1], [0], [0], [1], [0, 0, 1, 1], [], []>} : vector<8x16xf32>, vector<16x128xf32>, vector<8x128xf32> -> vector<8x128xf32>
    %cst_36 = arith.constant dense<0.000000e+00> : vector<8x128xf32>
    %120 = tpu.matmul %111, %1, %cst_36 {dimension_numbers = #tpu.dot_dimension_numbers<[1], [0], [0], [1], [0, 0, 1, 1], [], []>} : vector<8x32xf32>, vector<32x128xf32>, vector<8x128xf32> -> vector<8x128xf32>
    %121 = arith.addf %119, %120 : vector<8x128xf32>
    %122 = vector.broadcast %2 : vector<1x128xf32> to vector<8x128xf32>
    %123 = arith.addf %121, %122 : vector<8x128xf32>
    %124 = vector.extract_strided_slice %123 {offsets = [0, 0], sizes = [8, 32], strides = [1, 1]} : vector<8x128xf32> to vector<8x32xf32>
    %125 = arith.negf %124 : vector<8x32xf32>
    %126 = math.exp %125 : vector<8x32xf32>
    %cst_37 = arith.constant 1.000000e+00 : f32
    %127 = vector.broadcast %cst_37 : f32 to vector<8x32xf32>
    %128 = arith.addf %127, %126 : vector<8x32xf32>
    %129 = arith.divf %127, %128 : vector<8x32xf32>
    %130 = vector.extract_strided_slice %123 {offsets = [0, 32], sizes = [8, 32], strides = [1, 1]} : vector<8x128xf32> to vector<8x32xf32>
    %131 = arith.negf %130 : vector<8x32xf32>
    %132 = math.exp %131 : vector<8x32xf32>
    %cst_38 = arith.constant 1.000000e+00 : f32
    %133 = vector.broadcast %cst_38 : f32 to vector<8x32xf32>
    %134 = arith.addf %133, %132 : vector<8x32xf32>
    %135 = arith.divf %133, %134 : vector<8x32xf32>
    %136 = vector.extract_strided_slice %123 {offsets = [0, 64], sizes = [8, 32], strides = [1, 1]} : vector<8x128xf32> to vector<8x32xf32>
    %137 = math.tanh %136 : vector<8x32xf32>
    %138 = vector.extract_strided_slice %123 {offsets = [0, 96], sizes = [8, 32], strides = [1, 1]} : vector<8x128xf32> to vector<8x32xf32>
    %139 = arith.negf %138 : vector<8x32xf32>
    %140 = math.exp %139 : vector<8x32xf32>
    %cst_39 = arith.constant 1.000000e+00 : f32
    %141 = vector.broadcast %cst_39 : f32 to vector<8x32xf32>
    %142 = arith.addf %141, %140 : vector<8x32xf32>
    %143 = arith.divf %141, %142 : vector<8x32xf32>
    %144 = arith.mulf %135, %109 : vector<8x32xf32>
    %145 = arith.mulf %129, %137 : vector<8x32xf32>
    %146 = arith.addf %144, %145 : vector<8x32xf32>
    %147 = math.tanh %146 : vector<8x32xf32>
    %148 = arith.mulf %143, %147 : vector<8x32xf32>
    %149 = arith.index_cast %c3_i32 : i32 to index
    %c0_40 = arith.constant 0 : index
    %c0_41 = arith.constant 0 : index
    %150 = vector.load %arg10[%149, %c0_40, %c0_41] : memref<8x8x32xf32, #tpu.memory_space<vmem>>, vector<1x8x32xf32>
    %151 = vector.shape_cast %150 : vector<1x8x32xf32> to vector<8x32xf32>
    %152 = vector.shape_cast %148 : vector<8x32xf32> to vector<1x8x32xf32>
    tpu.vector_store %arg10[%149, %c0_40, %c0_41], %152 {strides = array<i32>} : memref<8x8x32xf32, #tpu.memory_space<vmem>>, vector<1x8x32xf32>,
    %c4_i32 = arith.constant 4 : i32
    %153 = arith.index_cast %c4_i32 : i32 to index
    %c0_42 = arith.constant 0 : index
    %c0_43 = arith.constant 0 : index
    %154 = vector.load %arg0[%153, %c0_42, %c0_43] : memref<8x8x16xf32, #tpu.memory_space<vmem>>, vector<1x8x16xf32>
    %155 = vector.shape_cast %154 : vector<1x8x16xf32> to vector<8x16xf32>
    %cst_44 = arith.constant dense<0.000000e+00> : vector<8x128xf32>
    %156 = tpu.matmul %155, %0, %cst_44 {dimension_numbers = #tpu.dot_dimension_numbers<[1], [0], [0], [1], [0, 0, 1, 1], [], []>} : vector<8x16xf32>, vector<16x128xf32>, vector<8x128xf32> -> vector<8x128xf32>
    %cst_45 = arith.constant dense<0.000000e+00> : vector<8x128xf32>
    %157 = tpu.matmul %148, %1, %cst_45 {dimension_numbers = #tpu.dot_dimension_numbers<[1], [0], [0], [1], [0, 0, 1, 1], [], []>} : vector<8x32xf32>, vector<32x128xf32>, vector<8x128xf32> -> vector<8x128xf32>
    %158 = arith.addf %156, %157 : vector<8x128xf32>
    %159 = vector.broadcast %2 : vector<1x128xf32> to vector<8x128xf32>
    %160 = arith.addf %158, %159 : vector<8x128xf32>
    %161 = vector.extract_strided_slice %160 {offsets = [0, 0], sizes = [8, 32], strides = [1, 1]} : vector<8x128xf32> to vector<8x32xf32>
    %162 = arith.negf %161 : vector<8x32xf32>
    %163 = math.exp %162 : vector<8x32xf32>
    %cst_46 = arith.constant 1.000000e+00 : f32
    %164 = vector.broadcast %cst_46 : f32 to vector<8x32xf32>
    %165 = arith.addf %164, %163 : vector<8x32xf32>
    %166 = arith.divf %164, %165 : vector<8x32xf32>
    %167 = vector.extract_strided_slice %160 {offsets = [0, 32], sizes = [8, 32], strides = [1, 1]} : vector<8x128xf32> to vector<8x32xf32>
    %168 = arith.negf %167 : vector<8x32xf32>
    %169 = math.exp %168 : vector<8x32xf32>
    %cst_47 = arith.constant 1.000000e+00 : f32
    %170 = vector.broadcast %cst_47 : f32 to vector<8x32xf32>
    %171 = arith.addf %170, %169 : vector<8x32xf32>
    %172 = arith.divf %170, %171 : vector<8x32xf32>
    %173 = vector.extract_strided_slice %160 {offsets = [0, 64], sizes = [8, 32], strides = [1, 1]} : vector<8x128xf32> to vector<8x32xf32>
    %174 = math.tanh %173 : vector<8x32xf32>
    %175 = vector.extract_strided_slice %160 {offsets = [0, 96], sizes = [8, 32], strides = [1, 1]} : vector<8x128xf32> to vector<8x32xf32>
    %176 = arith.negf %175 : vector<8x32xf32>
    %177 = math.exp %176 : vector<8x32xf32>
    %cst_48 = arith.constant 1.000000e+00 : f32
    %178 = vector.broadcast %cst_48 : f32 to vector<8x32xf32>
    %179 = arith.addf %178, %177 : vector<8x32xf32>
    %180 = arith.divf %178, %179 : vector<8x32xf32>
    %181 = arith.mulf %172, %146 : vector<8x32xf32>
    %182 = arith.mulf %166, %174 : vector<8x32xf32>
    %183 = arith.addf %181, %182 : vector<8x32xf32>
    %184 = math.tanh %183 : vector<8x32xf32>
    %185 = arith.mulf %180, %184 : vector<8x32xf32>
    %186 = arith.index_cast %c4_i32 : i32 to index
    %c0_49 = arith.constant 0 : index
    %c0_50 = arith.constant 0 : index
    %187 = vector.load %arg10[%186, %c0_49, %c0_50] : memref<8x8x32xf32, #tpu.memory_space<vmem>>, vector<1x8x32xf32>
    %188 = vector.shape_cast %187 : vector<1x8x32xf32> to vector<8x32xf32>
    %189 = vector.shape_cast %185 : vector<8x32xf32> to vector<1x8x32xf32>
    tpu.vector_store %arg10[%186, %c0_49, %c0_50], %189 {strides = array<i32>} : memref<8x8x32xf32, #tpu.memory_space<vmem>>, vector<1x8x32xf32>,
    %c5_i32 = arith.constant 5 : i32
    %190 = arith.index_cast %c5_i32 : i32 to index
    %c0_51 = arith.constant 0 : index
    %c0_52 = arith.constant 0 : index
    %191 = vector.load %arg0[%190, %c0_51, %c0_52] : memref<8x8x16xf32, #tpu.memory_space<vmem>>, vector<1x8x16xf32>
    %192 = vector.shape_cast %191 : vector<1x8x16xf32> to vector<8x16xf32>
    %cst_53 = arith.constant dense<0.000000e+00> : vector<8x128xf32>
    %193 = tpu.matmul %192, %0, %cst_53 {dimension_numbers = #tpu.dot_dimension_numbers<[1], [0], [0], [1], [0, 0, 1, 1], [], []>} : vector<8x16xf32>, vector<16x128xf32>, vector<8x128xf32> -> vector<8x128xf32>
    %cst_54 = arith.constant dense<0.000000e+00> : vector<8x128xf32>
    %194 = tpu.matmul %185, %1, %cst_54 {dimension_numbers = #tpu.dot_dimension_numbers<[1], [0], [0], [1], [0, 0, 1, 1], [], []>} : vector<8x32xf32>, vector<32x128xf32>, vector<8x128xf32> -> vector<8x128xf32>
    %195 = arith.addf %193, %194 : vector<8x128xf32>
    %196 = vector.broadcast %2 : vector<1x128xf32> to vector<8x128xf32>
    %197 = arith.addf %195, %196 : vector<8x128xf32>
    %198 = vector.extract_strided_slice %197 {offsets = [0, 0], sizes = [8, 32], strides = [1, 1]} : vector<8x128xf32> to vector<8x32xf32>
    %199 = arith.negf %198 : vector<8x32xf32>
    %200 = math.exp %199 : vector<8x32xf32>
    %cst_55 = arith.constant 1.000000e+00 : f32
    %201 = vector.broadcast %cst_55 : f32 to vector<8x32xf32>
    %202 = arith.addf %201, %200 : vector<8x32xf32>
    %203 = arith.divf %201, %202 : vector<8x32xf32>
    %204 = vector.extract_strided_slice %197 {offsets = [0, 32], sizes = [8, 32], strides = [1, 1]} : vector<8x128xf32> to vector<8x32xf32>
    %205 = arith.negf %204 : vector<8x32xf32>
    %206 = math.exp %205 : vector<8x32xf32>
    %cst_56 = arith.constant 1.000000e+00 : f32
    %207 = vector.broadcast %cst_56 : f32 to vector<8x32xf32>
    %208 = arith.addf %207, %206 : vector<8x32xf32>
    %209 = arith.divf %207, %208 : vector<8x32xf32>
    %210 = vector.extract_strided_slice %197 {offsets = [0, 64], sizes = [8, 32], strides = [1, 1]} : vector<8x128xf32> to vector<8x32xf32>
    %211 = math.tanh %210 : vector<8x32xf32>
    %212 = vector.extract_strided_slice %197 {offsets = [0, 96], sizes = [8, 32], strides = [1, 1]} : vector<8x128xf32> to vector<8x32xf32>
    %213 = arith.negf %212 : vector<8x32xf32>
    %214 = math.exp %213 : vector<8x32xf32>
    %cst_57 = arith.constant 1.000000e+00 : f32
    %215 = vector.broadcast %cst_57 : f32 to vector<8x32xf32>
    %216 = arith.addf %215, %214 : vector<8x32xf32>
    %217 = arith.divf %215, %216 : vector<8x32xf32>
    %218 = arith.mulf %209, %183 : vector<8x32xf32>
    %219 = arith.mulf %203, %211 : vector<8x32xf32>
    %220 = arith.addf %218, %219 : vector<8x32xf32>
    %221 = math.tanh %220 : vector<8x32xf32>
    %222 = arith.mulf %217, %221 : vector<8x32xf32>
    %223 = arith.index_cast %c5_i32 : i32 to index
    %c0_58 = arith.constant 0 : index
    %c0_59 = arith.constant 0 : index
    %224 = vector.load %arg10[%223, %c0_58, %c0_59] : memref<8x8x32xf32, #tpu.memory_space<vmem>>, vector<1x8x32xf32>
    %225 = vector.shape_cast %224 : vector<1x8x32xf32> to vector<8x32xf32>
    %226 = vector.shape_cast %222 : vector<8x32xf32> to vector<1x8x32xf32>
    tpu.vector_store %arg10[%223, %c0_58, %c0_59], %226 {strides = array<i32>} : memref<8x8x32xf32, #tpu.memory_space<vmem>>, vector<1x8x32xf32>,
    %c6_i32 = arith.constant 6 : i32
    %227 = arith.index_cast %c6_i32 : i32 to index
    %c0_60 = arith.constant 0 : index
    %c0_61 = arith.constant 0 : index
    %228 = vector.load %arg0[%227, %c0_60, %c0_61] : memref<8x8x16xf32, #tpu.memory_space<vmem>>, vector<1x8x16xf32>
    %229 = vector.shape_cast %228 : vector<1x8x16xf32> to vector<8x16xf32>
    %cst_62 = arith.constant dense<0.000000e+00> : vector<8x128xf32>
    %230 = tpu.matmul %229, %0, %cst_62 {dimension_numbers = #tpu.dot_dimension_numbers<[1], [0], [0], [1], [0, 0, 1, 1], [], []>} : vector<8x16xf32>, vector<16x128xf32>, vector<8x128xf32> -> vector<8x128xf32>
    %cst_63 = arith.constant dense<0.000000e+00> : vector<8x128xf32>
    %231 = tpu.matmul %222, %1, %cst_63 {dimension_numbers = #tpu.dot_dimension_numbers<[1], [0], [0], [1], [0, 0, 1, 1], [], []>} : vector<8x32xf32>, vector<32x128xf32>, vector<8x128xf32> -> vector<8x128xf32>
    %232 = arith.addf %230, %231 : vector<8x128xf32>
    %233 = vector.broadcast %2 : vector<1x128xf32> to vector<8x128xf32>
    %234 = arith.addf %232, %233 : vector<8x128xf32>
    %235 = vector.extract_strided_slice %234 {offsets = [0, 0], sizes = [8, 32], strides = [1, 1]} : vector<8x128xf32> to vector<8x32xf32>
    %236 = arith.negf %235 : vector<8x32xf32>
    %237 = math.exp %236 : vector<8x32xf32>
    %cst_64 = arith.constant 1.000000e+00 : f32
    %238 = vector.broadcast %cst_64 : f32 to vector<8x32xf32>
    %239 = arith.addf %238, %237 : vector<8x32xf32>
    %240 = arith.divf %238, %239 : vector<8x32xf32>
    %241 = vector.extract_strided_slice %234 {offsets = [0, 32], sizes = [8, 32], strides = [1, 1]} : vector<8x128xf32> to vector<8x32xf32>
    %242 = arith.negf %241 : vector<8x32xf32>
    %243 = math.exp %242 : vector<8x32xf32>
    %cst_65 = arith.constant 1.000000e+00 : f32
    %244 = vector.broadcast %cst_65 : f32 to vector<8x32xf32>
    %245 = arith.addf %244, %243 : vector<8x32xf32>
    %246 = arith.divf %244, %245 : vector<8x32xf32>
    %247 = vector.extract_strided_slice %234 {offsets = [0, 64], sizes = [8, 32], strides = [1, 1]} : vector<8x128xf32> to vector<8x32xf32>
    %248 = math.tanh %247 : vector<8x32xf32>
    %249 = vector.extract_strided_slice %234 {offsets = [0, 96], sizes = [8, 32], strides = [1, 1]} : vector<8x128xf32> to vector<8x32xf32>
    %250 = arith.negf %249 : vector<8x32xf32>
    %251 = math.exp %250 : vector<8x32xf32>
    %cst_66 = arith.constant 1.000000e+00 : f32
    %252 = vector.broadcast %cst_66 : f32 to vector<8x32xf32>
    %253 = arith.addf %252, %251 : vector<8x32xf32>
    %254 = arith.divf %252, %253 : vector<8x32xf32>
    %255 = arith.mulf %246, %220 : vector<8x32xf32>
    %256 = arith.mulf %240, %248 : vector<8x32xf32>
    %257 = arith.addf %255, %256 : vector<8x32xf32>
    %258 = math.tanh %257 : vector<8x32xf32>
    %259 = arith.mulf %254, %258 : vector<8x32xf32>
    %260 = arith.index_cast %c6_i32 : i32 to index
    %c0_67 = arith.constant 0 : index
    %c0_68 = arith.constant 0 : index
    %261 = vector.load %arg10[%260, %c0_67, %c0_68] : memref<8x8x32xf32, #tpu.memory_space<vmem>>, vector<1x8x32xf32>
    %262 = vector.shape_cast %261 : vector<1x8x32xf32> to vector<8x32xf32>
    %263 = vector.shape_cast %259 : vector<8x32xf32> to vector<1x8x32xf32>
    tpu.vector_store %arg10[%260, %c0_67, %c0_68], %263 {strides = array<i32>} : memref<8x8x32xf32, #tpu.memory_space<vmem>>, vector<1x8x32xf32>,
    %c7_i32 = arith.constant 7 : i32
    %264 = arith.index_cast %c7_i32 : i32 to index
    %c0_69 = arith.constant 0 : index
    %c0_70 = arith.constant 0 : index
    %265 = vector.load %arg0[%264, %c0_69, %c0_70] : memref<8x8x16xf32, #tpu.memory_space<vmem>>, vector<1x8x16xf32>
    %266 = vector.shape_cast %265 : vector<1x8x16xf32> to vector<8x16xf32>
    %cst_71 = arith.constant dense<0.000000e+00> : vector<8x128xf32>
    %267 = tpu.matmul %266, %0, %cst_71 {dimension_numbers = #tpu.dot_dimension_numbers<[1], [0], [0], [1], [0, 0, 1, 1], [], []>} : vector<8x16xf32>, vector<16x128xf32>, vector<8x128xf32> -> vector<8x128xf32>
    %cst_72 = arith.constant dense<0.000000e+00> : vector<8x128xf32>
    %268 = tpu.matmul %259, %1, %cst_72 {dimension_numbers = #tpu.dot_dimension_numbers<[1], [0], [0], [1], [0, 0, 1, 1], [], []>} : vector<8x32xf32>, vector<32x128xf32>, vector<8x128xf32> -> vector<8x128xf32>
    %269 = arith.addf %267, %268 : vector<8x128xf32>
    %270 = vector.broadcast %2 : vector<1x128xf32> to vector<8x128xf32>
    %271 = arith.addf %269, %270 : vector<8x128xf32>
    %272 = vector.extract_strided_slice %271 {offsets = [0, 0], sizes = [8, 32], strides = [1, 1]} : vector<8x128xf32> to vector<8x32xf32>
    %273 = arith.negf %272 : vector<8x32xf32>
    %274 = math.exp %273 : vector<8x32xf32>
    %cst_73 = arith.constant 1.000000e+00 : f32
    %275 = vector.broadcast %cst_73 : f32 to vector<8x32xf32>
    %276 = arith.addf %275, %274 : vector<8x32xf32>
    %277 = arith.divf %275, %276 : vector<8x32xf32>
    %278 = vector.extract_strided_slice %271 {offsets = [0, 32], sizes = [8, 32], strides = [1, 1]} : vector<8x128xf32> to vector<8x32xf32>
    %279 = arith.negf %278 : vector<8x32xf32>
    %280 = math.exp %279 : vector<8x32xf32>
    %cst_74 = arith.constant 1.000000e+00 : f32
    %281 = vector.broadcast %cst_74 : f32 to vector<8x32xf32>
    %282 = arith.addf %281, %280 : vector<8x32xf32>
    %283 = arith.divf %281, %282 : vector<8x32xf32>
    %284 = vector.extract_strided_slice %271 {offsets = [0, 64], sizes = [8, 32], strides = [1, 1]} : vector<8x128xf32> to vector<8x32xf32>
    %285 = math.tanh %284 : vector<8x32xf32>
    %286 = vector.extract_strided_slice %271 {offsets = [0, 96], sizes = [8, 32], strides = [1, 1]} : vector<8x128xf32> to vector<8x32xf32>
    %287 = arith.negf %286 : vector<8x32xf32>
    %288 = math.exp %287 : vector<8x32xf32>
    %cst_75 = arith.constant 1.000000e+00 : f32
    %289 = vector.broadcast %cst_75 : f32 to vector<8x32xf32>
    %290 = arith.addf %289, %288 : vector<8x32xf32>
    %291 = arith.divf %289, %290 : vector<8x32xf32>
    %292 = arith.mulf %283, %257 : vector<8x32xf32>
    %293 = arith.mulf %277, %285 : vector<8x32xf32>
    %294 = arith.addf %292, %293 : vector<8x32xf32>
    %295 = math.tanh %294 : vector<8x32xf32>
    %296 = arith.mulf %291, %295 : vector<8x32xf32>
    %297 = arith.index_cast %c7_i32 : i32 to index
    %c0_76 = arith.constant 0 : index
    %c0_77 = arith.constant 0 : index
    %298 = vector.load %arg10[%297, %c0_76, %c0_77] : memref<8x8x32xf32, #tpu.memory_space<vmem>>, vector<1x8x32xf32>
    %299 = vector.shape_cast %298 : vector<1x8x32xf32> to vector<8x32xf32>
    %300 = vector.shape_cast %296 : vector<8x32xf32> to vector<1x8x32xf32>
    tpu.vector_store %arg10[%297, %c0_76, %c0_77], %300 {strides = array<i32>} : memref<8x8x32xf32, #tpu.memory_space<vmem>>, vector<1x8x32xf32>,
    %c8_i32 = arith.constant 8 : i32
    %c0_78 = arith.constant 0 : index
    %c0_79 = arith.constant 0 : index
    %301 = vector.load %arg4[%c0_78, %c0_79] : memref<32x128xf32, #tpu.memory_space<vmem>>, vector<32x128xf32>
    %c0_80 = arith.constant 0 : index
    %c0_81 = arith.constant 0 : index
    %302 = vector.load %arg5[%c0_80, %c0_81] : memref<32x128xf32, #tpu.memory_space<vmem>>, vector<32x128xf32>
    %c0_82 = arith.constant 0 : index
    %c0_83 = arith.constant 0 : index
    %303 = vector.load %arg6[%c0_82, %c0_83] : memref<1x128xf32, #tpu.memory_space<vmem>>, vector<1x128xf32>
    %cst_84 = arith.constant 0.000000e+00 : f32
    %304 = vector.broadcast %cst_84 : f32 to vector<8x32xf32>
    %cst_85 = arith.constant 0.000000e+00 : f32
    %305 = vector.broadcast %cst_85 : f32 to vector<8x32xf32>
    %c0_i32_86 = arith.constant 0 : i32
    %306 = arith.index_cast %c0_i32_86 : i32 to index
    %c0_87 = arith.constant 0 : index
    %c0_88 = arith.constant 0 : index
    %307 = vector.load %arg10[%306, %c0_87, %c0_88] : memref<8x8x32xf32, #tpu.memory_space<vmem>>, vector<1x8x32xf32>
    %308 = vector.shape_cast %307 : vector<1x8x32xf32> to vector<8x32xf32>
    %cst_89 = arith.constant dense<0.000000e+00> : vector<8x128xf32>
    %309 = tpu.matmul %308, %301, %cst_89 {dimension_numbers = #tpu.dot_dimension_numbers<[1], [0], [0], [1], [0, 0, 1, 1], [], []>} : vector<8x32xf32>, vector<32x128xf32>, vector<8x128xf32> -> vector<8x128xf32>
    %cst_90 = arith.constant dense<0.000000e+00> : vector<8x128xf32>
    %310 = tpu.matmul %304, %302, %cst_90 {dimension_numbers = #tpu.dot_dimension_numbers<[1], [0], [0], [1], [0, 0, 1, 1], [], []>} : vector<8x32xf32>, vector<32x128xf32>, vector<8x128xf32> -> vector<8x128xf32>
    %311 = arith.addf %309, %310 : vector<8x128xf32>
    %312 = vector.broadcast %303 : vector<1x128xf32> to vector<8x128xf32>
    %313 = arith.addf %311, %312 : vector<8x128xf32>
    %314 = vector.extract_strided_slice %313 {offsets = [0, 0], sizes = [8, 32], strides = [1, 1]} : vector<8x128xf32> to vector<8x32xf32>
    %315 = arith.negf %314 : vector<8x32xf32>
    %316 = math.exp %315 : vector<8x32xf32>
    %cst_91 = arith.constant 1.000000e+00 : f32
    %317 = vector.broadcast %cst_91 : f32 to vector<8x32xf32>
    %318 = arith.addf %317, %316 : vector<8x32xf32>
    %319 = arith.divf %317, %318 : vector<8x32xf32>
    %320 = vector.extract_strided_slice %313 {offsets = [0, 32], sizes = [8, 32], strides = [1, 1]} : vector<8x128xf32> to vector<8x32xf32>
    %321 = arith.negf %320 : vector<8x32xf32>
    %322 = math.exp %321 : vector<8x32xf32>
    %cst_92 = arith.constant 1.000000e+00 : f32
    %323 = vector.broadcast %cst_92 : f32 to vector<8x32xf32>
    %324 = arith.addf %323, %322 : vector<8x32xf32>
    %325 = arith.divf %323, %324 : vector<8x32xf32>
    %326 = vector.extract_strided_slice %313 {offsets = [0, 64], sizes = [8, 32], strides = [1, 1]} : vector<8x128xf32> to vector<8x32xf32>
    %327 = math.tanh %326 : vector<8x32xf32>
    %328 = vector.extract_strided_slice %313 {offsets = [0, 96], sizes = [8, 32], strides = [1, 1]} : vector<8x128xf32> to vector<8x32xf32>
    %329 = arith.negf %328 : vector<8x32xf32>
    %330 = math.exp %329 : vector<8x32xf32>
    %cst_93 = arith.constant 1.000000e+00 : f32
    %331 = vector.broadcast %cst_93 : f32 to vector<8x32xf32>
    %332 = arith.addf %331, %330 : vector<8x32xf32>
    %333 = arith.divf %331, %332 : vector<8x32xf32>
    %334 = arith.mulf %325, %305 : vector<8x32xf32>
    %335 = arith.mulf %319, %327 : vector<8x32xf32>
    %336 = arith.addf %334, %335 : vector<8x32xf32>
    %337 = math.tanh %336 : vector<8x32xf32>
    %338 = arith.mulf %333, %337 : vector<8x32xf32>
    %c1_i32_94 = arith.constant 1 : i32
    %339 = arith.index_cast %c1_i32_94 : i32 to index
    %c0_95 = arith.constant 0 : index
    %c0_96 = arith.constant 0 : index
    %340 = vector.load %arg10[%339, %c0_95, %c0_96] : memref<8x8x32xf32, #tpu.memory_space<vmem>>, vector<1x8x32xf32>
    %341 = vector.shape_cast %340 : vector<1x8x32xf32> to vector<8x32xf32>
    %cst_97 = arith.constant dense<0.000000e+00> : vector<8x128xf32>
    %342 = tpu.matmul %341, %301, %cst_97 {dimension_numbers = #tpu.dot_dimension_numbers<[1], [0], [0], [1], [0, 0, 1, 1], [], []>} : vector<8x32xf32>, vector<32x128xf32>, vector<8x128xf32> -> vector<8x128xf32>
    %cst_98 = arith.constant dense<0.000000e+00> : vector<8x128xf32>
    %343 = tpu.matmul %338, %302, %cst_98 {dimension_numbers = #tpu.dot_dimension_numbers<[1], [0], [0], [1], [0, 0, 1, 1], [], []>} : vector<8x32xf32>, vector<32x128xf32>, vector<8x128xf32> -> vector<8x128xf32>
    %344 = arith.addf %342, %343 : vector<8x128xf32>
    %345 = vector.broadcast %303 : vector<1x128xf32> to vector<8x128xf32>
    %346 = arith.addf %344, %345 : vector<8x128xf32>
    %347 = vector.extract_strided_slice %346 {offsets = [0, 0], sizes = [8, 32], strides = [1, 1]} : vector<8x128xf32> to vector<8x32xf32>
    %348 = arith.negf %347 : vector<8x32xf32>
    %349 = math.exp %348 : vector<8x32xf32>
    %cst_99 = arith.constant 1.000000e+00 : f32
    %350 = vector.broadcast %cst_99 : f32 to vector<8x32xf32>
    %351 = arith.addf %350, %349 : vector<8x32xf32>
    %352 = arith.divf %350, %351 : vector<8x32xf32>
    %353 = vector.extract_strided_slice %346 {offsets = [0, 32], sizes = [8, 32], strides = [1, 1]} : vector<8x128xf32> to vector<8x32xf32>
    %354 = arith.negf %353 : vector<8x32xf32>
    %355 = math.exp %354 : vector<8x32xf32>
    %cst_100 = arith.constant 1.000000e+00 : f32
    %356 = vector.broadcast %cst_100 : f32 to vector<8x32xf32>
    %357 = arith.addf %356, %355 : vector<8x32xf32>
    %358 = arith.divf %356, %357 : vector<8x32xf32>
    %359 = vector.extract_strided_slice %346 {offsets = [0, 64], sizes = [8, 32], strides = [1, 1]} : vector<8x128xf32> to vector<8x32xf32>
    %360 = math.tanh %359 : vector<8x32xf32>
    %361 = vector.extract_strided_slice %346 {offsets = [0, 96], sizes = [8, 32], strides = [1, 1]} : vector<8x128xf32> to vector<8x32xf32>
    %362 = arith.negf %361 : vector<8x32xf32>
    %363 = math.exp %362 : vector<8x32xf32>
    %cst_101 = arith.constant 1.000000e+00 : f32
    %364 = vector.broadcast %cst_101 : f32 to vector<8x32xf32>
    %365 = arith.addf %364, %363 : vector<8x32xf32>
    %366 = arith.divf %364, %365 : vector<8x32xf32>
    %367 = arith.mulf %358, %336 : vector<8x32xf32>
    %368 = arith.mulf %352, %360 : vector<8x32xf32>
    %369 = arith.addf %367, %368 : vector<8x32xf32>
    %370 = math.tanh %369 : vector<8x32xf32>
    %371 = arith.mulf %366, %370 : vector<8x32xf32>
    %c2_i32_102 = arith.constant 2 : i32
    %372 = arith.index_cast %c2_i32_102 : i32 to index
    %c0_103 = arith.constant 0 : index
    %c0_104 = arith.constant 0 : index
    %373 = vector.load %arg10[%372, %c0_103, %c0_104] : memref<8x8x32xf32, #tpu.memory_space<vmem>>, vector<1x8x32xf32>
    %374 = vector.shape_cast %373 : vector<1x8x32xf32> to vector<8x32xf32>
    %cst_105 = arith.constant dense<0.000000e+00> : vector<8x128xf32>
    %375 = tpu.matmul %374, %301, %cst_105 {dimension_numbers = #tpu.dot_dimension_numbers<[1], [0], [0], [1], [0, 0, 1, 1], [], []>} : vector<8x32xf32>, vector<32x128xf32>, vector<8x128xf32> -> vector<8x128xf32>
    %cst_106 = arith.constant dense<0.000000e+00> : vector<8x128xf32>
    %376 = tpu.matmul %371, %302, %cst_106 {dimension_numbers = #tpu.dot_dimension_numbers<[1], [0], [0], [1], [0, 0, 1, 1], [], []>} : vector<8x32xf32>, vector<32x128xf32>, vector<8x128xf32> -> vector<8x128xf32>
    %377 = arith.addf %375, %376 : vector<8x128xf32>
    %378 = vector.broadcast %303 : vector<1x128xf32> to vector<8x128xf32>
    %379 = arith.addf %377, %378 : vector<8x128xf32>
    %380 = vector.extract_strided_slice %379 {offsets = [0, 0], sizes = [8, 32], strides = [1, 1]} : vector<8x128xf32> to vector<8x32xf32>
    %381 = arith.negf %380 : vector<8x32xf32>
    %382 = math.exp %381 : vector<8x32xf32>
    %cst_107 = arith.constant 1.000000e+00 : f32
    %383 = vector.broadcast %cst_107 : f32 to vector<8x32xf32>
    %384 = arith.addf %383, %382 : vector<8x32xf32>
    %385 = arith.divf %383, %384 : vector<8x32xf32>
    %386 = vector.extract_strided_slice %379 {offsets = [0, 32], sizes = [8, 32], strides = [1, 1]} : vector<8x128xf32> to vector<8x32xf32>
    %387 = arith.negf %386 : vector<8x32xf32>
    %388 = math.exp %387 : vector<8x32xf32>
    %cst_108 = arith.constant 1.000000e+00 : f32
    %389 = vector.broadcast %cst_108 : f32 to vector<8x32xf32>
    %390 = arith.addf %389, %388 : vector<8x32xf32>
    %391 = arith.divf %389, %390 : vector<8x32xf32>
    %392 = vector.extract_strided_slice %379 {offsets = [0, 64], sizes = [8, 32], strides = [1, 1]} : vector<8x128xf32> to vector<8x32xf32>
    %393 = math.tanh %392 : vector<8x32xf32>
    %394 = vector.extract_strided_slice %379 {offsets = [0, 96], sizes = [8, 32], strides = [1, 1]} : vector<8x128xf32> to vector<8x32xf32>
    %395 = arith.negf %394 : vector<8x32xf32>
    %396 = math.exp %395 : vector<8x32xf32>
    %cst_109 = arith.constant 1.000000e+00 : f32
    %397 = vector.broadcast %cst_109 : f32 to vector<8x32xf32>
    %398 = arith.addf %397, %396 : vector<8x32xf32>
    %399 = arith.divf %397, %398 : vector<8x32xf32>
    %400 = arith.mulf %391, %369 : vector<8x32xf32>
    %401 = arith.mulf %385, %393 : vector<8x32xf32>
    %402 = arith.addf %400, %401 : vector<8x32xf32>
    %403 = math.tanh %402 : vector<8x32xf32>
    %404 = arith.mulf %399, %403 : vector<8x32xf32>
    %c3_i32_110 = arith.constant 3 : i32
    %405 = arith.index_cast %c3_i32_110 : i32 to index
    %c0_111 = arith.constant 0 : index
    %c0_112 = arith.constant 0 : index
    %406 = vector.load %arg10[%405, %c0_111, %c0_112] : memref<8x8x32xf32, #tpu.memory_space<vmem>>, vector<1x8x32xf32>
    %407 = vector.shape_cast %406 : vector<1x8x32xf32> to vector<8x32xf32>
    %cst_113 = arith.constant dense<0.000000e+00> : vector<8x128xf32>
    %408 = tpu.matmul %407, %301, %cst_113 {dimension_numbers = #tpu.dot_dimension_numbers<[1], [0], [0], [1], [0, 0, 1, 1], [], []>} : vector<8x32xf32>, vector<32x128xf32>, vector<8x128xf32> -> vector<8x128xf32>
    %cst_114 = arith.constant dense<0.000000e+00> : vector<8x128xf32>
    %409 = tpu.matmul %404, %302, %cst_114 {dimension_numbers = #tpu.dot_dimension_numbers<[1], [0], [0], [1], [0, 0, 1, 1], [], []>} : vector<8x32xf32>, vector<32x128xf32>, vector<8x128xf32> -> vector<8x128xf32>
    %410 = arith.addf %408, %409 : vector<8x128xf32>
    %411 = vector.broadcast %303 : vector<1x128xf32> to vector<8x128xf32>
    %412 = arith.addf %410, %411 : vector<8x128xf32>
    %413 = vector.extract_strided_slice %412 {offsets = [0, 0], sizes = [8, 32], strides = [1, 1]} : vector<8x128xf32> to vector<8x32xf32>
    %414 = arith.negf %413 : vector<8x32xf32>
    %415 = math.exp %414 : vector<8x32xf32>
    %cst_115 = arith.constant 1.000000e+00 : f32
    %416 = vector.broadcast %cst_115 : f32 to vector<8x32xf32>
    %417 = arith.addf %416, %415 : vector<8x32xf32>
    %418 = arith.divf %416, %417 : vector<8x32xf32>
    %419 = vector.extract_strided_slice %412 {offsets = [0, 32], sizes = [8, 32], strides = [1, 1]} : vector<8x128xf32> to vector<8x32xf32>
    %420 = arith.negf %419 : vector<8x32xf32>
    %421 = math.exp %420 : vector<8x32xf32>
    %cst_116 = arith.constant 1.000000e+00 : f32
    %422 = vector.broadcast %cst_116 : f32 to vector<8x32xf32>
    %423 = arith.addf %422, %421 : vector<8x32xf32>
    %424 = arith.divf %422, %423 : vector<8x32xf32>
    %425 = vector.extract_strided_slice %412 {offsets = [0, 64], sizes = [8, 32], strides = [1, 1]} : vector<8x128xf32> to vector<8x32xf32>
    %426 = math.tanh %425 : vector<8x32xf32>
    %427 = vector.extract_strided_slice %412 {offsets = [0, 96], sizes = [8, 32], strides = [1, 1]} : vector<8x128xf32> to vector<8x32xf32>
    %428 = arith.negf %427 : vector<8x32xf32>
    %429 = math.exp %428 : vector<8x32xf32>
    %cst_117 = arith.constant 1.000000e+00 : f32
    %430 = vector.broadcast %cst_117 : f32 to vector<8x32xf32>
    %431 = arith.addf %430, %429 : vector<8x32xf32>
    %432 = arith.divf %430, %431 : vector<8x32xf32>
    %433 = arith.mulf %424, %402 : vector<8x32xf32>
    %434 = arith.mulf %418, %426 : vector<8x32xf32>
    %435 = arith.addf %433, %434 : vector<8x32xf32>
    %436 = math.tanh %435 : vector<8x32xf32>
    %437 = arith.mulf %432, %436 : vector<8x32xf32>
    %c4_i32_118 = arith.constant 4 : i32
    %438 = arith.index_cast %c4_i32_118 : i32 to index
    %c0_119 = arith.constant 0 : index
    %c0_120 = arith.constant 0 : index
    %439 = vector.load %arg10[%438, %c0_119, %c0_120] : memref<8x8x32xf32, #tpu.memory_space<vmem>>, vector<1x8x32xf32>
    %440 = vector.shape_cast %439 : vector<1x8x32xf32> to vector<8x32xf32>
    %cst_121 = arith.constant dense<0.000000e+00> : vector<8x128xf32>
    %441 = tpu.matmul %440, %301, %cst_121 {dimension_numbers = #tpu.dot_dimension_numbers<[1], [0], [0], [1], [0, 0, 1, 1], [], []>} : vector<8x32xf32>, vector<32x128xf32>, vector<8x128xf32> -> vector<8x128xf32>
    %cst_122 = arith.constant dense<0.000000e+00> : vector<8x128xf32>
    %442 = tpu.matmul %437, %302, %cst_122 {dimension_numbers = #tpu.dot_dimension_numbers<[1], [0], [0], [1], [0, 0, 1, 1], [], []>} : vector<8x32xf32>, vector<32x128xf32>, vector<8x128xf32> -> vector<8x128xf32>
    %443 = arith.addf %441, %442 : vector<8x128xf32>
    %444 = vector.broadcast %303 : vector<1x128xf32> to vector<8x128xf32>
    %445 = arith.addf %443, %444 : vector<8x128xf32>
    %446 = vector.extract_strided_slice %445 {offsets = [0, 0], sizes = [8, 32], strides = [1, 1]} : vector<8x128xf32> to vector<8x32xf32>
    %447 = arith.negf %446 : vector<8x32xf32>
    %448 = math.exp %447 : vector<8x32xf32>
    %cst_123 = arith.constant 1.000000e+00 : f32
    %449 = vector.broadcast %cst_123 : f32 to vector<8x32xf32>
    %450 = arith.addf %449, %448 : vector<8x32xf32>
    %451 = arith.divf %449, %450 : vector<8x32xf32>
    %452 = vector.extract_strided_slice %445 {offsets = [0, 32], sizes = [8, 32], strides = [1, 1]} : vector<8x128xf32> to vector<8x32xf32>
    %453 = arith.negf %452 : vector<8x32xf32>
    %454 = math.exp %453 : vector<8x32xf32>
    %cst_124 = arith.constant 1.000000e+00 : f32
    %455 = vector.broadcast %cst_124 : f32 to vector<8x32xf32>
    %456 = arith.addf %455, %454 : vector<8x32xf32>
    %457 = arith.divf %455, %456 : vector<8x32xf32>
    %458 = vector.extract_strided_slice %445 {offsets = [0, 64], sizes = [8, 32], strides = [1, 1]} : vector<8x128xf32> to vector<8x32xf32>
    %459 = math.tanh %458 : vector<8x32xf32>
    %460 = vector.extract_strided_slice %445 {offsets = [0, 96], sizes = [8, 32], strides = [1, 1]} : vector<8x128xf32> to vector<8x32xf32>
    %461 = arith.negf %460 : vector<8x32xf32>
    %462 = math.exp %461 : vector<8x32xf32>
    %cst_125 = arith.constant 1.000000e+00 : f32
    %463 = vector.broadcast %cst_125 : f32 to vector<8x32xf32>
    %464 = arith.addf %463, %462 : vector<8x32xf32>
    %465 = arith.divf %463, %464 : vector<8x32xf32>
    %466 = arith.mulf %457, %435 : vector<8x32xf32>
    %467 = arith.mulf %451, %459 : vector<8x32xf32>
    %468 = arith.addf %466, %467 : vector<8x32xf32>
    %469 = math.tanh %468 : vector<8x32xf32>
    %470 = arith.mulf %465, %469 : vector<8x32xf32>
    %c5_i32_126 = arith.constant 5 : i32
    %471 = arith.index_cast %c5_i32_126 : i32 to index
    %c0_127 = arith.constant 0 : index
    %c0_128 = arith.constant 0 : index
    %472 = vector.load %arg10[%471, %c0_127, %c0_128] : memref<8x8x32xf32, #tpu.memory_space<vmem>>, vector<1x8x32xf32>
    %473 = vector.shape_cast %472 : vector<1x8x32xf32> to vector<8x32xf32>
    %cst_129 = arith.constant dense<0.000000e+00> : vector<8x128xf32>
    %474 = tpu.matmul %473, %301, %cst_129 {dimension_numbers = #tpu.dot_dimension_numbers<[1], [0], [0], [1], [0, 0, 1, 1], [], []>} : vector<8x32xf32>, vector<32x128xf32>, vector<8x128xf32> -> vector<8x128xf32>
    %cst_130 = arith.constant dense<0.000000e+00> : vector<8x128xf32>
    %475 = tpu.matmul %470, %302, %cst_130 {dimension_numbers = #tpu.dot_dimension_numbers<[1], [0], [0], [1], [0, 0, 1, 1], [], []>} : vector<8x32xf32>, vector<32x128xf32>, vector<8x128xf32> -> vector<8x128xf32>
    %476 = arith.addf %474, %475 : vector<8x128xf32>
    %477 = vector.broadcast %303 : vector<1x128xf32> to vector<8x128xf32>
    %478 = arith.addf %476, %477 : vector<8x128xf32>
    %479 = vector.extract_strided_slice %478 {offsets = [0, 0], sizes = [8, 32], strides = [1, 1]} : vector<8x128xf32> to vector<8x32xf32>
    %480 = arith.negf %479 : vector<8x32xf32>
    %481 = math.exp %480 : vector<8x32xf32>
    %cst_131 = arith.constant 1.000000e+00 : f32
    %482 = vector.broadcast %cst_131 : f32 to vector<8x32xf32>
    %483 = arith.addf %482, %481 : vector<8x32xf32>
    %484 = arith.divf %482, %483 : vector<8x32xf32>
    %485 = vector.extract_strided_slice %478 {offsets = [0, 32], sizes = [8, 32], strides = [1, 1]} : vector<8x128xf32> to vector<8x32xf32>
    %486 = arith.negf %485 : vector<8x32xf32>
    %487 = math.exp %486 : vector<8x32xf32>
    %cst_132 = arith.constant 1.000000e+00 : f32
    %488 = vector.broadcast %cst_132 : f32 to vector<8x32xf32>
    %489 = arith.addf %488, %487 : vector<8x32xf32>
    %490 = arith.divf %488, %489 : vector<8x32xf32>
    %491 = vector.extract_strided_slice %478 {offsets = [0, 64], sizes = [8, 32], strides = [1, 1]} : vector<8x128xf32> to vector<8x32xf32>
    %492 = math.tanh %491 : vector<8x32xf32>
    %493 = vector.extract_strided_slice %478 {offsets = [0, 96], sizes = [8, 32], strides = [1, 1]} : vector<8x128xf32> to vector<8x32xf32>
    %494 = arith.negf %493 : vector<8x32xf32>
    %495 = math.exp %494 : vector<8x32xf32>
    %cst_133 = arith.constant 1.000000e+00 : f32
    %496 = vector.broadcast %cst_133 : f32 to vector<8x32xf32>
    %497 = arith.addf %496, %495 : vector<8x32xf32>
    %498 = arith.divf %496, %497 : vector<8x32xf32>
    %499 = arith.mulf %490, %468 : vector<8x32xf32>
    %500 = arith.mulf %484, %492 : vector<8x32xf32>
    %501 = arith.addf %499, %500 : vector<8x32xf32>
    %502 = math.tanh %501 : vector<8x32xf32>
    %503 = arith.mulf %498, %502 : vector<8x32xf32>
    %c6_i32_134 = arith.constant 6 : i32
    %504 = arith.index_cast %c6_i32_134 : i32 to index
    %c0_135 = arith.constant 0 : index
    %c0_136 = arith.constant 0 : index
    %505 = vector.load %arg10[%504, %c0_135, %c0_136] : memref<8x8x32xf32, #tpu.memory_space<vmem>>, vector<1x8x32xf32>
    %506 = vector.shape_cast %505 : vector<1x8x32xf32> to vector<8x32xf32>
    %cst_137 = arith.constant dense<0.000000e+00> : vector<8x128xf32>
    %507 = tpu.matmul %506, %301, %cst_137 {dimension_numbers = #tpu.dot_dimension_numbers<[1], [0], [0], [1], [0, 0, 1, 1], [], []>} : vector<8x32xf32>, vector<32x128xf32>, vector<8x128xf32> -> vector<8x128xf32>
    %cst_138 = arith.constant dense<0.000000e+00> : vector<8x128xf32>
    %508 = tpu.matmul %503, %302, %cst_138 {dimension_numbers = #tpu.dot_dimension_numbers<[1], [0], [0], [1], [0, 0, 1, 1], [], []>} : vector<8x32xf32>, vector<32x128xf32>, vector<8x128xf32> -> vector<8x128xf32>
    %509 = arith.addf %507, %508 : vector<8x128xf32>
    %510 = vector.broadcast %303 : vector<1x128xf32> to vector<8x128xf32>
    %511 = arith.addf %509, %510 : vector<8x128xf32>
    %512 = vector.extract_strided_slice %511 {offsets = [0, 0], sizes = [8, 32], strides = [1, 1]} : vector<8x128xf32> to vector<8x32xf32>
    %513 = arith.negf %512 : vector<8x32xf32>
    %514 = math.exp %513 : vector<8x32xf32>
    %cst_139 = arith.constant 1.000000e+00 : f32
    %515 = vector.broadcast %cst_139 : f32 to vector<8x32xf32>
    %516 = arith.addf %515, %514 : vector<8x32xf32>
    %517 = arith.divf %515, %516 : vector<8x32xf32>
    %518 = vector.extract_strided_slice %511 {offsets = [0, 32], sizes = [8, 32], strides = [1, 1]} : vector<8x128xf32> to vector<8x32xf32>
    %519 = arith.negf %518 : vector<8x32xf32>
    %520 = math.exp %519 : vector<8x32xf32>
    %cst_140 = arith.constant 1.000000e+00 : f32
    %521 = vector.broadcast %cst_140 : f32 to vector<8x32xf32>
    %522 = arith.addf %521, %520 : vector<8x32xf32>
    %523 = arith.divf %521, %522 : vector<8x32xf32>
    %524 = vector.extract_strided_slice %511 {offsets = [0, 64], sizes = [8, 32], strides = [1, 1]} : vector<8x128xf32> to vector<8x32xf32>
    %525 = math.tanh %524 : vector<8x32xf32>
    %526 = vector.extract_strided_slice %511 {offsets = [0, 96], sizes = [8, 32], strides = [1, 1]} : vector<8x128xf32> to vector<8x32xf32>
    %527 = arith.negf %526 : vector<8x32xf32>
    %528 = math.exp %527 : vector<8x32xf32>
    %cst_141 = arith.constant 1.000000e+00 : f32
    %529 = vector.broadcast %cst_141 : f32 to vector<8x32xf32>
    %530 = arith.addf %529, %528 : vector<8x32xf32>
    %531 = arith.divf %529, %530 : vector<8x32xf32>
    %532 = arith.mulf %523, %501 : vector<8x32xf32>
    %533 = arith.mulf %517, %525 : vector<8x32xf32>
    %534 = arith.addf %532, %533 : vector<8x32xf32>
    %535 = math.tanh %534 : vector<8x32xf32>
    %536 = arith.mulf %531, %535 : vector<8x32xf32>
    %c7_i32_142 = arith.constant 7 : i32
    %537 = arith.index_cast %c7_i32_142 : i32 to index
    %c0_143 = arith.constant 0 : index
    %c0_144 = arith.constant 0 : index
    %538 = vector.load %arg10[%537, %c0_143, %c0_144] : memref<8x8x32xf32, #tpu.memory_space<vmem>>, vector<1x8x32xf32>
    %539 = vector.shape_cast %538 : vector<1x8x32xf32> to vector<8x32xf32>
    %cst_145 = arith.constant dense<0.000000e+00> : vector<8x128xf32>
    %540 = tpu.matmul %539, %301, %cst_145 {dimension_numbers = #tpu.dot_dimension_numbers<[1], [0], [0], [1], [0, 0, 1, 1], [], []>} : vector<8x32xf32>, vector<32x128xf32>, vector<8x128xf32> -> vector<8x128xf32>
    %cst_146 = arith.constant dense<0.000000e+00> : vector<8x128xf32>
    %541 = tpu.matmul %536, %302, %cst_146 {dimension_numbers = #tpu.dot_dimension_numbers<[1], [0], [0], [1], [0, 0, 1, 1], [], []>} : vector<8x32xf32>, vector<32x128xf32>, vector<8x128xf32> -> vector<8x128xf32>
    %542 = arith.addf %540, %541 : vector<8x128xf32>
    %543 = vector.broadcast %303 : vector<1x128xf32> to vector<8x128xf32>
    %544 = arith.addf %542, %543 : vector<8x128xf32>
    %545 = vector.extract_strided_slice %544 {offsets = [0, 0], sizes = [8, 32], strides = [1, 1]} : vector<8x128xf32> to vector<8x32xf32>
    %546 = arith.negf %545 : vector<8x32xf32>
    %547 = math.exp %546 : vector<8x32xf32>
    %cst_147 = arith.constant 1.000000e+00 : f32
    %548 = vector.broadcast %cst_147 : f32 to vector<8x32xf32>
    %549 = arith.addf %548, %547 : vector<8x32xf32>
    %550 = arith.divf %548, %549 : vector<8x32xf32>
    %551 = vector.extract_strided_slice %544 {offsets = [0, 32], sizes = [8, 32], strides = [1, 1]} : vector<8x128xf32> to vector<8x32xf32>
    %552 = arith.negf %551 : vector<8x32xf32>
    %553 = math.exp %552 : vector<8x32xf32>
    %cst_148 = arith.constant 1.000000e+00 : f32
    %554 = vector.broadcast %cst_148 : f32 to vector<8x32xf32>
    %555 = arith.addf %554, %553 : vector<8x32xf32>
    %556 = arith.divf %554, %555 : vector<8x32xf32>
    %557 = vector.extract_strided_slice %544 {offsets = [0, 64], sizes = [8, 32], strides = [1, 1]} : vector<8x128xf32> to vector<8x32xf32>
    %558 = math.tanh %557 : vector<8x32xf32>
    %559 = vector.extract_strided_slice %544 {offsets = [0, 96], sizes = [8, 32], strides = [1, 1]} : vector<8x128xf32> to vector<8x32xf32>
    %560 = arith.negf %559 : vector<8x32xf32>
    %561 = math.exp %560 : vector<8x32xf32>
    %cst_149 = arith.constant 1.000000e+00 : f32
    %562 = vector.broadcast %cst_149 : f32 to vector<8x32xf32>
    %563 = arith.addf %562, %561 : vector<8x32xf32>
    %564 = arith.divf %562, %563 : vector<8x32xf32>
    %565 = arith.mulf %556, %534 : vector<8x32xf32>
    %566 = arith.mulf %550, %558 : vector<8x32xf32>
    %567 = arith.addf %565, %566 : vector<8x32xf32>
    %568 = math.tanh %567 : vector<8x32xf32>
    %569 = arith.mulf %564, %568 : vector<8x32xf32>
    %c8_i32_150 = arith.constant 8 : i32
    %c0_151 = arith.constant 0 : index
    %c0_152 = arith.constant 0 : index
    %570 = vector.load %arg7[%c0_151, %c0_152] : memref<32x16xf32, #tpu.memory_space<vmem>>, vector<32x16xf32>
    %cst_153 = arith.constant dense<0.000000e+00> : vector<8x16xf32>
    %571 = tpu.matmul %569, %570, %cst_153 {dimension_numbers = #tpu.dot_dimension_numbers<[1], [0], [0], [1], [0, 0, 1, 1], [], []>} : vector<8x32xf32>, vector<32x16xf32>, vector<8x16xf32> -> vector<8x16xf32>
    %c0_154 = arith.constant 0 : index
    %c0_155 = arith.constant 0 : index
    %572 = vector.load %arg8[%c0_154, %c0_155] : memref<1x16xf32, #tpu.memory_space<vmem>>, vector<1x16xf32>
    %573 = vector.broadcast %572 : vector<1x16xf32> to vector<8x16xf32>
    %574 = arith.addf %571, %573 : vector<8x16xf32>
    %c0_156 = arith.constant 0 : index
    %c0_157 = arith.constant 0 : index
    %575 = vector.load %arg9[%c0_156, %c0_157] : memref<8x16xf32, #tpu.memory_space<vmem>>, vector<8x16xf32>
    tpu.vector_store %arg9[%c0_156, %c0_157], %574 {strides = array<i32>} : memref<8x16xf32, #tpu.memory_space<vmem>>, vector<8x16xf32>,
    return
  }
}

</mosaic_0001>

<llo_original>
// kernel: _lstm_model_forward.1
$region0: #{_lstm_model_forward.1}
  #allocation0 [shape = 'u32[]', space=smem, size = 0x4, offset = 0x4, fixed_abs, tag = 'smem constant byte address 0x4 - core index']
  #allocation1 [shape = 'u32[144,128]{1,0:T(1,128)}', space=vmem, size = 0x12000, scoped, tag = 'internal scratch']
  #allocation2 [shape = 'f32[8,8,32]{2,1,0:T(8,128)}', space=vmem, size = 0x8000, scoped, tag = 'scratch operand']
  %s0 = inlined_call_operand.vmem [shape: f32[8,8,16], index: 0, kind: input, shape index: {}]
  %s1 = inlined_call_operand.vmem [shape: f32[16,128], index: 1, kind: input, shape index: {}]
  %s2 = inlined_call_operand.vmem [shape: f32[32,128], index: 2, kind: input, shape index: {}]
  %s3 = inlined_call_operand.vmem [shape: f32[1,128], index: 3, kind: input, shape index: {}]
  %s4 = inlined_call_operand.vmem [shape: f32[32,128], index: 4, kind: input, shape index: {}]
  %s5 = inlined_call_operand.vmem [shape: f32[32,128], index: 5, kind: input, shape index: {}]
  %s6 = inlined_call_operand.vmem [shape: f32[1,128], index: 6, kind: input, shape index: {}]
  %s7 = inlined_call_operand.vmem [shape: f32[32,16], index: 7, kind: input, shape index: {}]
  %s8 = inlined_call_operand.vmem [shape: f32[1,16], index: 8, kind: input, shape index: {}]
  %s9 = inlined_call_operand.vmem [shape: f32[8,16], index: 9, kind: output, shape index: {}]
  %s10 = sld [smem:[#allocation0]]
  $region46: #{_lstm_model_forward.1} parent=0
    _
  %s12 = ssub.s32 1, %s10
  %s13 = scalar_select 0, %s12, %s10
  // Predicated region
  $region2: #{_lstm_model_forward.1} parent=0 // pred_check
    _
  $region3: #{_lstm_model_forward.1} parent=0 // pred_check_branch
    %15 = sbr.rel (0) target = $region5
  $region4: #{_lstm_model_forward.1} parent=0 // pred_region
    _
  $region5: #{_lstm_model_forward.1} parent=0 // pred_fallthru
    _
  // Predicated region
  $region6: #{_lstm_model_forward.1} parent=0 // pred_check
    _
  $region7: #{_lstm_model_forward.1} parent=0 // pred_check_branch
    %17 = sbr.rel (0) target = $region9
  $region8: #{_lstm_model_forward.1} parent=0 // pred_region
    _
  $region9: #{_lstm_model_forward.1} parent=0 // pred_fallthru
    _
  // Predicated region
  $region10: #{_lstm_model_forward.1} parent=0 // pred_check
    _
  $region11: #{_lstm_model_forward.1} parent=0 // pred_check_branch
    %19 = sbr.rel (0) target = $region13
  $region12: #{_lstm_model_forward.1} parent=0 // pred_region
    _
  $region13: #{_lstm_model_forward.1} parent=0 // pred_fallthru
    _
  // Predicated region
  $region14: #{_lstm_model_forward.1} parent=0 // pred_check
    _
  $region15: #{_lstm_model_forward.1} parent=0 // pred_check_branch
    %21 = sbr.rel (0) target = $region17
  $region16: #{_lstm_model_forward.1} parent=0 // pred_region
    _
  $region17: #{_lstm_model_forward.1} parent=0 // pred_fallthru
    _
  // Predicated region
  $region18: #{_lstm_model_forward.1} parent=0 // pred_check
    _
  $region19: #{_lstm_model_forward.1} parent=0 // pred_check_branch
    %23 = sbr.rel (0) target = $region21
  $region20: #{_lstm_model_forward.1} parent=0 // pred_region
    _
  $region21: #{_lstm_model_forward.1} parent=0 // pred_fallthru
    _
  // Predicated region
  $region22: #{_lstm_model_forward.1} parent=0 // pred_check
    _
  $region23: #{_lstm_model_forward.1} parent=0 // pred_check_branch
    %25 = sbr.rel (0) target = $region25
  $region24: #{_lstm_model_forward.1} parent=0 // pred_region
    _
  $region25: #{_lstm_model_forward.1} parent=0 // pred_fallthru
    _
  // Predicated region
  $region26: #{_lstm_model_forward.1} parent=0 // pred_check
    _
  $region27: #{_lstm_model_forward.1} parent=0 // pred_check_branch
    %27 = sbr.rel (0) target = $region29
  $region28: #{_lstm_model_forward.1} parent=0 // pred_region
    _
  $region29: #{_lstm_model_forward.1} parent=0 // pred_fallthru
    _
  // Predicated region
  $region30: #{_lstm_model_forward.1} parent=0 // pred_check
    _
  $region31: #{_lstm_model_forward.1} parent=0 // pred_check_branch
    %29 = sbr.rel (0) target = $region33
  $region32: #{_lstm_model_forward.1} parent=0 // pred_region
    _
  $region33: #{_lstm_model_forward.1} parent=0 // pred_fallthru
    _
  // Predicated region
  $region34: #{_lstm_model_forward.1} parent=0 // pred_check
    _
  $region35: #{_lstm_model_forward.1} parent=0 // pred_check_branch
    %31 = sbr.rel (0) target = $region37
  $region36: #{_lstm_model_forward.1} parent=0 // pred_region
    _
  $region37: #{_lstm_model_forward.1} parent=0 // pred_fallthru
    _
  %v32 = vld [vmem:[%s1] sm:$0xff]
  %v33 = vld [vmem:[%s1 + $0x8] sm:$0xff]
  %v34 = vld [vmem:[%s2] sm:$0xff]
  %v35 = vld [vmem:[%s2 + $0x8] sm:$0xff]
  %v36 = vld [vmem:[%s2 + $0x10] sm:$0xff]
  %v37 = vld [vmem:[%s2 + $0x18] sm:$0xff]
  %v38 = vld [vmem:[%s3] sm:$0x1]
  %v39 = vld [vmem:[%s0] sm:$0xff]
  %vm40 = vcmask 261120
  %v42 = vsel %vm40, 0.0, 0
  %44 = vmatprep.subr.mxu0 0.0
  %45 = vmatpush1.msra.mxu0 0.0
  %46 = vmatprep.subr.mxu0 0.0
  %47 = vmatpush1.msra.mxu0 0.0
  %48 = vmatprep.subr.mxu0 0.0
  %49 = vmatpush1.msra.mxu0 0.0
  %50 = vmatprep.subr.mxu0 0.0
  %51 = vmatpush1.msra.mxu0 0.0
  %52 = vmatprep.subr.mxu0 0.0
  %53 = vmatpush1.msra.mxu0 0.0
  %54 = vmatprep.subr.mxu0 0.0
  %55 = vmatpush1.msra.mxu0 0.0
  %56 = vmatprep.subr.mxu0 0.0
  %57 = vmatpush1.msra.mxu0 0.0
  %58 = vmatprep.subr.mxu0 0.0
  %59 = vmatpush1.msra.mxu0 0.0
  %60 = vmatprep.subr.mxu0 0.0
  %61 = vmatpush1.msra.mxu0 0.0
  %62 = vmatprep.subr.mxu0 0.0
  %63 = vmatpush1.msra.mxu0 0.0
  %64 = vmatprep.subr.mxu0 0.0
  %65 = vmatpush1.msra.mxu0 0.0
  %66 = vmatprep.subr.mxu0 0.0
  %67 = vmatpush1.msra.mxu0 0.0
  %68 = vmatprep.subr.mxu0 0.0
  %69 = vmatpush1.msra.mxu0 %v37
  %70 = vmatprep.subr.mxu0 0.0
  %71 = vmatpush1.msra.mxu0 %v36
  %72 = vmatprep.subr.mxu0 0.0
  %73 = vmatpush1.msra.mxu0 %v35
  %74 = vmatprep.subr.mxu0 0.0
  %75 = vmatpush1.msra.mxu0 %v34
  %76 = vmatprep.subr.mxu0 0.0
  %77 = vmatpush2.msra.mxu0 0.0
  %78 = vmatprep.subr.mxu0 0.0
  %79 = vmatpush2.msra.mxu0 0.0
  %80 = vmatprep.subr.mxu0 0.0
  %81 = vmatpush2.msra.mxu0 0.0
  %82 = vmatprep.subr.mxu0 0.0
  %83 = vmatpush2.msra.mxu0 0.0
  %84 = vmatprep.subr.mxu0 0.0
  %85 = vmatpush2.msra.mxu0 0.0
  %86 = vmatprep.subr.mxu0 0.0
  %87 = vmatpush2.msra.mxu0 0.0
  %88 = vmatprep.subr.mxu0 0.0
  %89 = vmatpush2.msra.mxu0 0.0
  %90 = vmatprep.subr.mxu0 0.0
  %91 = vmatpush2.msra.mxu0 0.0
  %92 = vmatprep.subr.mxu0 0.0
  %93 = vmatpush2.msra.mxu0 0.0
  %94 = vmatprep.subr.mxu0 0.0
  %95 = vmatpush2.msra.mxu0 0.0
  %96 = vmatprep.subr.mxu0 0.0
  %97 = vmatpush2.msra.mxu0 0.0
  %98 = vmatprep.subr.mxu0 0.0
  %99 = vmatpush2.msra.mxu0 0.0
  %100 = vmatprep.subr.mxu0 0.0
  %101 = vmatpush2.msra.mxu0 0.0
  %102 = vmatprep.subr.mxu0 0.0
  %103 = vmatpush2.msra.mxu0 0.0
  %104 = vmatprep.subr.mxu0 0.0
  %105 = vmatpush2.msra.mxu0 0.0
  %106 = vmatprep.subr.mxu0 0.0
  %107 = vmatpush2.msra.mxu0 0.0
  %108 = vmatprep.mubr.f32.mxu0 0.0
  %109 = vmatmul.mubr.f32.gmra.mxu0 %v42
  %v110 = vpop.f32.mrf.mxu0
  %v111 = vadd.f32 0.0, %v110
  %v112 = vpop.f32.mrf.mxu0
  %113 = vdwg.mxu0
  %vm114 = vcmask 130048
  %v116 = vsel %vm114, %v39, 0
  %118 = vmatprep.subr.mxu0 0.0
  %119 = vmatpush1.msra.mxu0 0.0
  %120 = vmatprep.subr.mxu0 0.0
  %121 = vmatpush1.msra.mxu0 0.0
  %122 = vmatprep.subr.mxu0 0.0
  %123 = vmatpush1.msra.mxu0 0.0
  %124 = vmatprep.subr.mxu0 0.0
  %125 = vmatpush1.msra.mxu0 0.0
  %126 = vmatprep.subr.mxu0 0.0
  %127 = vmatpush1.msra.mxu0 0.0
  %128 = vmatprep.subr.mxu0 0.0
  %129 = vmatpush1.msra.mxu0 0.0
  %130 = vmatprep.subr.mxu0 0.0
  %131 = vmatpush1.msra.mxu0 0.0
  %132 = vmatprep.subr.mxu0 0.0
  %133 = vmatpush1.msra.mxu0 0.0
  %134 = vmatprep.subr.mxu0 0.0
  %135 = vmatpush1.msra.mxu0 0.0
  %136 = vmatprep.subr.mxu0 0.0
  %137 = vmatpush1.msra.mxu0 0.0
  %138 = vmatprep.subr.mxu0 0.0
  %139 = vmatpush1.msra.mxu0 0.0
  %140 = vmatprep.subr.mxu0 0.0
  %141 = vmatpush1.msra.mxu0 0.0
  %142 = vmatprep.subr.mxu0 0.0
  %143 = vmatpush1.msra.mxu0 0.0
  %144 = vmatprep.subr.mxu0 0.0
  %145 = vmatpush1.msra.mxu0 0.0
  %146 = vmatprep.subr.mxu0 0.0
  %147 = vmatpush1.msra.mxu0 %v33
  %148 = vmatprep.subr.mxu0 0.0
  %149 = vmatpush1.msra.mxu0 %v32
  %150 = vmatprep.subr.mxu0 0.0
  %151 = vmatpush2.msra.mxu0 0.0
  %152 = vmatprep.subr.mxu0 0.0
  %153 = vmatpush2.msra.mxu0 0.0
  %154 = vmatprep.subr.mxu0 0.0
  %155 = vmatpush2.msra.mxu0 0.0
  %156 = vmatprep.subr.mxu0 0.0
  %157 = vmatpush2.msra.mxu0 0.0
  %158 = vmatprep.subr.mxu0 0.0
  %159 = vmatpush2.msra.mxu0 0.0
  %160 = vmatprep.subr.mxu0 0.0
  %161 = vmatpush2.msra.mxu0 0.0
  %162 = vmatprep.subr.mxu0 0.0
  %163 = vmatpush2.msra.mxu0 0.0
  %164 = vmatprep.subr.mxu0 0.0
  %165 = vmatpush2.msra.mxu0 0.0
  %166 = vmatprep.subr.mxu0 0.0
  %167 = vmatpush2.msra.mxu0 0.0
  %168 = vmatprep.subr.mxu0 0.0
  %169 = vmatpush2.msra.mxu0 0.0
  %170 = vmatprep.subr.mxu0 0.0
  %171 = vmatpush2.msra.mxu0 0.0
  %172 = vmatprep.subr.mxu0 0.0
  %173 = vmatpush2.msra.mxu0 0.0
  %174 = vmatprep.subr.mxu0 0.0
  %175 = vmatpush2.msra.mxu0 0.0
  %176 = vmatprep.subr.mxu0 0.0
  %177 = vmatpush2.msra.mxu0 0.0
  %178 = vmatprep.subr.mxu0 0.0
  %179 = vmatpush2.msra.mxu0 0.0
  %180 = vmatprep.subr.mxu0 0.0
  %181 = vmatpush2.msra.mxu0 0.0
  %182 = vmatprep.mubr.f32.mxu0 0.0
  %183 = vmatmul.mubr.f32.gmra.mxu0 %v116
  %v184 = vpop.f32.mrf.mxu0
  %v185 = vadd.f32 %v111, %v184
  %v186 = vpop.f32.mrf.mxu0
  %187 = vdwg.mxu0
  %v189 = vlaneseq
  %v190 = vshrl.u32 %v189, 7
  %v191 = vsub.s32 0, %v190
  %v192 = vrot.slane %v38, %v191
  %v194 = vadd.f32 %v185, %v192
  %v195 = vxor.u32 %v194, 2147483648
  %v196 = vmul.f32 %v195, 1.442695
  %v197 = vpow.pop %v196
  %v198 = vadd.f32 %v197, 1.0
  %v199 = vrcp.pop %v198
  %v200 = vmul.f32 1.0, %v199
  %v201 = vtanh.pop %v194
  %v202 = vmul.f32 %v200, 0.0
  %204 = vrot.lane.b32.xlu0 %v201, 64
  %v205 = vpop.permute.xlu0 %204
  %v207 = vmul.f32 %v200, %v205
  %209 = vrot.lane.b32.xlu0 %v207, 32
  %v210 = vpop.permute.xlu0 %209
  %v212 = vadd.f32 %v202, %v210
  %v213 = vtanh.pop %v212
  %215 = vrot.lane.b32.xlu0 %v213, 64
  %v216 = vpop.permute.xlu0 %215
  %v218 = vmul.f32 %v200, %v216
  %220 = vrot.lane.b32.xlu0 %v218, 32
  %v221 = vpop.permute.xlu0 %220
  %223 = vst.msk [vmem:[#allocation2] sm:$0xff] %vm40, %v221
  %s224 = scalar_lea.vmem %s0, 8
  %v225 = vld [vmem:[%s224] sm:$0xff]
  %v226 = vsel %vm40, %v221, 0
  %228 = vmatprep.subr.mxu0 0.0
  %229 = vmatpush1.msra.mxu0 0.0
  %230 = vmatprep.subr.mxu0 0.0
  %231 = vmatpush1.msra.mxu0 0.0
  %232 = vmatprep.subr.mxu0 0.0
  %233 = vmatpush1.msra.mxu0 0.0
  %234 = vmatprep.subr.mxu0 0.0
  %235 = vmatpush1.msra.mxu0 0.0
  %236 = vmatprep.subr.mxu0 0.0
  %237 = vmatpush1.msra.mxu0 0.0
  %238 = vmatprep.subr.mxu0 0.0
  %239 = vmatpush1.msra.mxu0 0.0
  %240 = vmatprep.subr.mxu0 0.0
  %241 = vmatpush1.msra.mxu0 0.0
  %242 = vmatprep.subr.mxu0 0.0
  %243 = vmatpush1.msra.mxu0 0.0
  %244 = vmatprep.subr.mxu0 0.0
  %245 = vmatpush1.msra.mxu0 0.0
  %246 = vmatprep.subr.mxu0 0.0
  %247 = vmatpush1.msra.mxu0 0.0
  %248 = vmatprep.subr.mxu0 0.0
  %249 = vmatpush1.msra.mxu0 0.0
  %250 = vmatprep.subr.mxu0 0.0
  %251 = vmatpush1.msra.mxu0 0.0
  %252 = vmatprep.subr.mxu0 0.0
  %253 = vmatpush1.msra.mxu0 %v37
  %254 = vmatprep.subr.mxu0 0.0
  %255 = vmatpush1.msra.mxu0 %v36
  %256 = vmatprep.subr.mxu0 0.0
  %257 = vmatpush1.msra.mxu0 %v35
  %258 = vmatprep.subr.mxu0 0.0
  %259 = vmatpush1.msra.mxu0 %v34
  %260 = vmatprep.subr.mxu0 0.0
  %261 = vmatpush2.msra.mxu0 0.0
  %262 = vmatprep.subr.mxu0 0.0
  %263 = vmatpush2.msra.mxu0 0.0
  %264 = vmatprep.subr.mxu0 0.0
  %265 = vmatpush2.msra.mxu0 0.0
  %266 = vmatprep.subr.mxu0 0.0
  %267 = vmatpush2.msra.mxu0 0.0
  %268 = vmatprep.subr.mxu0 0.0
  %269 = vmatpush2.msra.mxu0 0.0
  %270 = vmatprep.subr.mxu0 0.0
  %271 = vmatpush2.msra.mxu0 0.0
  %272 = vmatprep.subr.mxu0 0.0
  %273 = vmatpush2.msra.mxu0 0.0
  %274 = vmatprep.subr.mxu0 0.0
  %275 = vmatpush2.msra.mxu0 0.0
  %276 = vmatprep.subr.mxu0 0.0
  %277 = vmatpush2.msra.mxu0 0.0
  %278 = vmatprep.subr.mxu0 0.0
  %279 = vmatpush2.msra.mxu0 0.0
  %280 = vmatprep.subr.mxu0 0.0
  %281 = vmatpush2.msra.mxu0 0.0
  %282 = vmatprep.subr.mxu0 0.0
  %283 = vmatpush2.msra.mxu0 0.0
  %284 = vmatprep.subr.mxu0 0.0
  %285 = vmatpush2.msra.mxu0 0.0
  %286 = vmatprep.subr.mxu0 0.0
  %287 = vmatpush2.msra.mxu0 0.0
  %288 = vmatprep.subr.mxu0 0.0
  %289 = vmatpush2.msra.mxu0 0.0
  %290 = vmatprep.subr.mxu0 0.0
  %291 = vmatpush2.msra.mxu0 0.0
  %292 = vmatprep.mubr.f32.mxu0 0.0
  %293 = vmatmul.mubr.f32.gmra.mxu0 %v226
  %v294 = vpop.f32.mrf.mxu0
  %v295 = vadd.f32 0.0, %v294
  %v296 = vpop.f32.mrf.mxu0
  %297 = vdwg.mxu0
  %v299 = vsel %vm114, %v225, 0
  %301 = vmatprep.subr.mxu0 0.0
  %302 = vmatpush1.msra.mxu0 0.0
  %303 = vmatprep.subr.mxu0 0.0
  %304 = vmatpush1.msra.mxu0 0.0
  %305 = vmatprep.subr.mxu0 0.0
  %306 = vmatpush1.msra.mxu0 0.0
  %307 = vmatprep.subr.mxu0 0.0
  %308 = vmatpush1.msra.mxu0 0.0
  %309 = vmatprep.subr.mxu0 0.0
  %310 = vmatpush1.msra.mxu0 0.0
  %311 = vmatprep.subr.mxu0 0.0
  %312 = vmatpush1.msra.mxu0 0.0
  %313 = vmatprep.subr.mxu0 0.0
  %314 = vmatpush1.msra.mxu0 0.0
  %315 = vmatprep.subr.mxu0 0.0
  %316 = vmatpush1.msra.mxu0 0.0
  %317 = vmatprep.subr.mxu0 0.0
  %318 = vmatpush1.msra.mxu0 0.0
  %319 = vmatprep.subr.mxu0 0.0
  %320 = vmatpush1.msra.mxu0 0.0
  %321 = vmatprep.subr.mxu0 0.0
  %322 = vmatpush1.msra.mxu0 0.0
  %323 = vmatprep.subr.mxu0 0.0
  %324 = vmatpush1.msra.mxu0 0.0
  %325 = vmatprep.subr.mxu0 0.0
  %326 = vmatpush1.msra.mxu0 0.0
  %327 = vmatprep.subr.mxu0 0.0
  %328 = vmatpush1.msra.mxu0 0.0
  %329 = vmatprep.subr.mxu0 0.0
  %330 = vmatpush1.msra.mxu0 %v33
  %331 = vmatprep.subr.mxu0 0.0
  %332 = vmatpush1.msra.mxu0 %v32
  %333 = vmatprep.subr.mxu0 0.0
  %334 = vmatpush2.msra.mxu0 0.0
  %335 = vmatprep.subr.mxu0 0.0
  %336 = vmatpush2.msra.mxu0 0.0
  %337 = vmatprep.subr.mxu0 0.0
  %338 = vmatpush2.msra.mxu0 0.0
  %339 = vmatprep.subr.mxu0 0.0
  %340 = vmatpush2.msra.mxu0 0.0
  %341 = vmatprep.subr.mxu0 0.0
  %342 = vmatpush2.msra.mxu0 0.0
  %343 = vmatprep.subr.mxu0 0.0
  %344 = vmatpush2.msra.mxu0 0.0
  %345 = vmatprep.subr.mxu0 0.0
  %346 = vmatpush2.msra.mxu0 0.0
  %347 = vmatprep.subr.mxu0 0.0
  %348 = vmatpush2.msra.mxu0 0.0
  %349 = vmatprep.subr.mxu0 0.0
  %350 = vmatpush2.msra.mxu0 0.0
  %351 = vmatprep.subr.mxu0 0.0
  %352 = vmatpush2.msra.mxu0 0.0
  %353 = vmatprep.subr.mxu0 0.0
  %354 = vmatpush2.msra.mxu0 0.0
  %355 = vmatprep.subr.mxu0 0.0
  %356 = vmatpush2.msra.mxu0 0.0
  %357 = vmatprep.subr.mxu0 0.0
  %358 = vmatpush2.msra.mxu0 0.0
  %359 = vmatprep.subr.mxu0 0.0
  %360 = vmatpush2.msra.mxu0 0.0
  %361 = vmatprep.subr.mxu0 0.0
  %362 = vmatpush2.msra.mxu0 0.0
  %363 = vmatprep.subr.mxu0 0.0
  %364 = vmatpush2.msra.mxu0 0.0
  %365 = vmatprep.mubr.f32.mxu0 0.0
  %366 = vmatmul.mubr.f32.gmra.mxu0 %v299
  %v367 = vpop.f32.mrf.mxu0
  %v368 = vadd.f32 %v295, %v367
  %v369 = vpop.f32.mrf.mxu0
  %370 = vdwg.mxu0
  %v371 = vadd.f32 %v368, %v192
  %v372 = vxor.u32 %v371, 2147483648
  %v373 = vmul.f32 %v372, 1.442695
  %v374 = vpow.pop %v373
  %v375 = vadd.f32 %v374, 1.0
  %v376 = vrcp.pop %v375
  %v377 = vmul.f32 1.0, %v376
  %v378 = vtanh.pop %v371
  %v379 = vmul.f32 %v377, %v212
  %381 = vrot.lane.b32.xlu0 %v378, 64
  %v382 = vpop.permute.xlu0 %381
  %v384 = vmul.f32 %v377, %v382
  %386 = vrot.lane.b32.xlu0 %v384, 32
  %v387 = vpop.permute.xlu0 %386
  %v389 = vadd.f32 %v379, %v387
  %v390 = vtanh.pop %v389
  %392 = vrot.lane.b32.xlu0 %v390, 64
  %v393 = vpop.permute.xlu0 %392
  %v395 = vmul.f32 %v377, %v393
  %397 = vrot.lane.b32.xlu0 %v395, 32
  %v398 = vpop.permute.xlu0 %397
  %s400 = scalar_lea.vmem [#allocation2], 8
  %401 = vst.msk [vmem:[%s400] sm:$0xff] %vm40, %v398
  %s402 = scalar_lea.vmem %s0, 16
  %v403 = vld [vmem:[%s402] sm:$0xff]
  %v404 = vsel %vm40, %v398, 0
  %406 = vmatprep.subr.mxu0 0.0
  %407 = vmatpush1.msra.mxu0 0.0
  %408 = vmatprep.subr.mxu0 0.0
  %409 = vmatpush1.msra.mxu0 0.0
  %410 = vmatprep.subr.mxu0 0.0
  %411 = vmatpush1.msra.mxu0 0.0
  %412 = vmatprep.subr.mxu0 0.0
  %413 = vmatpush1.msra.mxu0 0.0
  %414 = vmatprep.subr.mxu0 0.0
  %415 = vmatpush1.msra.mxu0 0.0
  %416 = vmatprep.subr.mxu0 0.0
  %417 = vmatpush1.msra.mxu0 0.0
  %418 = vmatprep.subr.mxu0 0.0
  %419 = vmatpush1.msra.mxu0 0.0
  %420 = vmatprep.subr.mxu0 0.0
  %421 = vmatpush1.msra.mxu0 0.0
  %422 = vmatprep.subr.mxu0 0.0
  %423 = vmatpush1.msra.mxu0 0.0
  %424 = vmatprep.subr.mxu0 0.0
  %425 = vmatpush1.msra.mxu0 0.0
  %426 = vmatprep.subr.mxu0 0.0
  %427 = vmatpush1.msra.mxu0 0.0
  %428 = vmatprep.subr.mxu0 0.0
  %429 = vmatpush1.msra.mxu0 0.0
  %430 = vmatprep.subr.mxu0 0.0
  %431 = vmatpush1.msra.mxu0 %v37
  %432 = vmatprep.subr.mxu0 0.0
  %433 = vmatpush1.msra.mxu0 %v36
  %434 = vmatprep.subr.mxu0 0.0
  %435 = vmatpush1.msra.mxu0 %v35
  %436 = vmatprep.subr.mxu0 0.0
  %437 = vmatpush1.msra.mxu0 %v34
  %438 = vmatprep.subr.mxu0 0.0
  %439 = vmatpush2.msra.mxu0 0.0
  %440 = vmatprep.subr.mxu0 0.0
  %441 = vmatpush2.msra.mxu0 0.0
  %442 = vmatprep.subr.mxu0 0.0
  %443 = vmatpush2.msra.mxu0 0.0
  %444 = vmatprep.subr.mxu0 0.0
  %445 = vmatpush2.msra.mxu0 0.0
  %446 = vmatprep.subr.mxu0 0.0
  %447 = vmatpush2.msra.mxu0 0.0
  %448 = vmatprep.subr.mxu0 0.0
  %449 = vmatpush2.msra.mxu0 0.0
  %450 = vmatprep.subr.mxu0 0.0
  %451 = vmatpush2.msra.mxu0 0.0
  %452 = vmatprep.subr.mxu0 0.0
  %453 = vmatpush2.msra.mxu0 0.0
  %454 = vmatprep.subr.mxu0 0.0
  %455 = vmatpush2.msra.mxu0 0.0
  %456 = vmatprep.subr.mxu0 0.0
  %457 = vmatpush2.msra.mxu0 0.0
  %458 = vmatprep.subr.mxu0 0.0
  %459 = vmatpush2.msra.mxu0 0.0
  %460 = vmatprep.subr.mxu0 0.0
  %461 = vmatpush2.msra.mxu0 0.0
  %462 = vmatprep.subr.mxu0 0.0
  %463 = vmatpush2.msra.mxu0 0.0
  %464 = vmatprep.subr.mxu0 0.0
  %465 = vmatpush2.msra.mxu0 0.0
  %466 = vmatprep.subr.mxu0 0.0
  %467 = vmatpush2.msra.mxu0 0.0
  %468 = vmatprep.subr.mxu0 0.0
  %469 = vmatpush2.msra.mxu0 0.0
  %470 = vmatprep.mubr.f32.mxu0 0.0
  %471 = vmatmul.mubr.f32.gmra.mxu0 %v404
  %v472 = vpop.f32.mrf.mxu0
  %v473 = vadd.f32 0.0, %v472
  %v474 = vpop.f32.mrf.mxu0
  %475 = vdwg.mxu0
  %v477 = vsel %vm114, %v403, 0
  %479 = vmatprep.subr.mxu0 0.0
  %480 = vmatpush1.msra.mxu0 0.0
  %481 = vmatprep.subr.mxu0 0.0
  %482 = vmatpush1.msra.mxu0 0.0
  %483 = vmatprep.subr.mxu0 0.0
  %484 = vmatpush1.msra.mxu0 0.0
  %485 = vmatprep.subr.mxu0 0.0
  %486 = vmatpush1.msra.mxu0 0.0
  %487 = vmatprep.subr.mxu0 0.0
  %488 = vmatpush1.msra.mxu0 0.0
  %489 = vmatprep.subr.mxu0 0.0
  %490 = vmatpush1.msra.mxu0 0.0
  %491 = vmatprep.subr.mxu0 0.0
  %492 = vmatpush1.msra.mxu0 0.0
  %493 = vmatprep.subr.mxu0 0.0
  %494 = vmatpush1.msra.mxu0 0.0
  %495 = vmatprep.subr.mxu0 0.0
  %496 = vmatpush1.msra.mxu0 0.0
  %497 = vmatprep.subr.mxu0 0.0
  %498 = vmatpush1.msra.mxu0 0.0
  %499 = vmatprep.subr.mxu0 0.0
  %500 = vmatpush1.msra.mxu0 0.0
  %501 = vmatprep.subr.mxu0 0.0
  %502 = vmatpush1.msra.mxu0 0.0
  %503 = vmatprep.subr.mxu0 0.0
  %504 = vmatpush1.msra.mxu0 0.0
  %505 = vmatprep.subr.mxu0 0.0
  %506 = vmatpush1.msra.mxu0 0.0
  %507 = vmatprep.subr.mxu0 0.0
  %508 = vmatpush1.msra.mxu0 %v33
  %509 = vmatprep.subr.mxu0 0.0
  %510 = vmatpush1.msra.mxu0 %v32
  %511 = vmatprep.subr.mxu0 0.0
  %512 = vmatpush2.msra.mxu0 0.0
  %513 = vmatprep.subr.mxu0 0.0
  %514 = vmatpush2.msra.mxu0 0.0
  %515 = vmatprep.subr.mxu0 0.0
  %516 = vmatpush2.msra.mxu0 0.0
  %517 = vmatprep.subr.mxu0 0.0
  %518 = vmatpush2.msra.mxu0 0.0
  %519 = vmatprep.subr.mxu0 0.0
  %520 = vmatpush2.msra.mxu0 0.0
  %521 = vmatprep.subr.mxu0 0.0
  %522 = vmatpush2.msra.mxu0 0.0
  %523 = vmatprep.subr.mxu0 0.0
  %524 = vmatpush2.msra.mxu0 0.0
  %525 = vmatprep.subr.mxu0 0.0
  %526 = vmatpush2.msra.mxu0 0.0
  %527 = vmatprep.subr.mxu0 0.0
  %528 = vmatpush2.msra.mxu0 0.0
  %529 = vmatprep.subr.mxu0 0.0
  %530 = vmatpush2.msra.mxu0 0.0
  %531 = vmatprep.subr.mxu0 0.0
  %532 = vmatpush2.msra.mxu0 0.0
  %533 = vmatprep.subr.mxu0 0.0
  %534 = vmatpush2.msra.mxu0 0.0
  %535 = vmatprep.subr.mxu0 0.0
  %536 = vmatpush2.msra.mxu0 0.0
  %537 = vmatprep.subr.mxu0 0.0
  %538 = vmatpush2.msra.mxu0 0.0
  %539 = vmatprep.subr.mxu0 0.0
  %540 = vmatpush2.msra.mxu0 0.0
  %541 = vmatprep.subr.mxu0 0.0
  %542 = vmatpush2.msra.mxu0 0.0
  %543 = vmatprep.mubr.f32.mxu0 0.0
  %544 = vmatmul.mubr.f32.gmra.mxu0 %v477
  %v545 = vpop.f32.mrf.mxu0
  %v546 = vadd.f32 %v473, %v545
  %v547 = vpop.f32.mrf.mxu0
  %548 = vdwg.mxu0
  %v549 = vadd.f32 %v546, %v192
  %v550 = vxor.u32 %v549, 2147483648
  %v551 = vmul.f32 %v550, 1.442695
  %v552 = vpow.pop %v551
  %v553 = vadd.f32 %v552, 1.0
  %v554 = vrcp.pop %v553
  %v555 = vmul.f32 1.0, %v554
  %v556 = vtanh.pop %v549
  %v557 = vmul.f32 %v555, %v389
  %559 = vrot.lane.b32.xlu0 %v556, 64
  %v560 = vpop.permute.xlu0 %559
  %v562 = vmul.f32 %v555, %v560
  %564 = vrot.lane.b32.xlu0 %v562, 32
  %v565 = vpop.permute.xlu0 %564
  %v567 = vadd.f32 %v557, %v565
  %v568 = vtanh.pop %v567
  %570 = vrot.lane.b32.xlu0 %v568, 64
  %v571 = vpop.permute.xlu0 %570
  %v573 = vmul.f32 %v555, %v571
  %575 = vrot.lane.b32.xlu0 %v573, 32
  %v576 = vpop.permute.xlu0 %575
  %s578 = scalar_lea.vmem [#allocation2], 16
  %579 = vst.msk [vmem:[%s578] sm:$0xff] %vm40, %v576
  %s580 = scalar_lea.vmem %s0, 24
  %v581 = vld [vmem:[%s580] sm:$0xff]
  %v582 = vsel %vm40, %v576, 0
  %584 = vmatprep.subr.mxu0 0.0
  %585 = vmatpush1.msra.mxu0 0.0
  %586 = vmatprep.subr.mxu0 0.0
  %587 = vmatpush1.msra.mxu0 0.0
  %588 = vmatprep.subr.mxu0 0.0
  %589 = vmatpush1.msra.mxu0 0.0
  %590 = vmatprep.subr.mxu0 0.0
  %591 = vmatpush1.msra.mxu0 0.0
  %592 = vmatprep.subr.mxu0 0.0
  %593 = vmatpush1.msra.mxu0 0.0
  %594 = vmatprep.subr.mxu0 0.0
  %595 = vmatpush1.msra.mxu0 0.0
  %596 = vmatprep.subr.mxu0 0.0
  %597 = vmatpush1.msra.mxu0 0.0
  %598 = vmatprep.subr.mxu0 0.0
  %599 = vmatpush1.msra.mxu0 0.0
  %600 = vmatprep.subr.mxu0 0.0
  %601 = vmatpush1.msra.mxu0 0.0
  %602 = vmatprep.subr.mxu0 0.0
  %603 = vmatpush1.msra.mxu0 0.0
  %604 = vmatprep.subr.mxu0 0.0
  %605 = vmatpush1.msra.mxu0 0.0
  %606 = vmatprep.subr.mxu0 0.0
  %607 = vmatpush1.msra.mxu0 0.0
  %608 = vmatprep.subr.mxu0 0.0
  %609 = vmatpush1.msra.mxu0 %v37
  %610 = vmatprep.subr.mxu0 0.0
  %611 = vmatpush1.msra.mxu0 %v36
  %612 = vmatprep.subr.mxu0 0.0
  %613 = vmatpush1.msra.mxu0 %v35
  %614 = vmatprep.subr.mxu0 0.0
  %615 = vmatpush1.msra.mxu0 %v34
  %616 = vmatprep.subr.mxu0 0.0
  %617 = vmatpush2.msra.mxu0 0.0
  %618 = vmatprep.subr.mxu0 0.0
  %619 = vmatpush2.msra.mxu0 0.0
  %620 = vmatprep.subr.mxu0 0.0
  %621 = vmatpush2.msra.mxu0 0.0
  %622 = vmatprep.subr.mxu0 0.0
  %623 = vmatpush2.msra.mxu0 0.0
  %624 = vmatprep.subr.mxu0 0.0
  %625 = vmatpush2.msra.mxu0 0.0
  %626 = vmatprep.subr.mxu0 0.0
  %627 = vmatpush2.msra.mxu0 0.0
  %628 = vmatprep.subr.mxu0 0.0
  %629 = vmatpush2.msra.mxu0 0.0
  %630 = vmatprep.subr.mxu0 0.0
  %631 = vmatpush2.msra.mxu0 0.0
  %632 = vmatprep.subr.mxu0 0.0
  %633 = vmatpush2.msra.mxu0 0.0
  %634 = vmatprep.subr.mxu0 0.0
  %635 = vmatpush2.msra.mxu0 0.0
  %636 = vmatprep.subr.mxu0 0.0
  %637 = vmatpush2.msra.mxu0 0.0
  %638 = vmatprep.subr.mxu0 0.0
  %639 = vmatpush2.msra.mxu0 0.0
  %640 = vmatprep.subr.mxu0 0.0
  %641 = vmatpush2.msra.mxu0 0.0
  %642 = vmatprep.subr.mxu0 0.0
  %643 = vmatpush2.msra.mxu0 0.0
  %644 = vmatprep.subr.mxu0 0.0
  %645 = vmatpush2.msra.mxu0 0.0
  %646 = vmatprep.subr.mxu0 0.0
  %647 = vmatpush2.msra.mxu0 0.0
  %648 = vmatprep.mubr.f32.mxu0 0.0
  %649 = vmatmul.mubr.f32.gmra.mxu0 %v582
  %v650 = vpop.f32.mrf.mxu0
  %v651 = vadd.f32 0.0, %v650
  %v652 = vpop.f32.mrf.mxu0
  %653 = vdwg.mxu0
  %v655 = vsel %vm114, %v581, 0
  %657 = vmatprep.subr.mxu0 0.0
  %658 = vmatpush1.msra.mxu0 0.0
  %659 = vmatprep.subr.mxu0 0.0
  %660 = vmatpush1.msra.mxu0 0.0
  %661 = vmatprep.subr.mxu0 0.0
  %662 = vmatpush1.msra.mxu0 0.0
  %663 = vmatprep.subr.mxu0 0.0
  %664 = vmatpush1.msra.mxu0 0.0
  %665 = vmatprep.subr.mxu0 0.0
  %666 = vmatpush1.msra.mxu0 0.0
  %667 = vmatprep.subr.mxu0 0.0
  %668 = vmatpush1.msra.mxu0 0.0
  %669 = vmatprep.subr.mxu0 0.0
  %670 = vmatpush1.msra.mxu0 0.0
  %671 = vmatprep.subr.mxu0 0.0
  %672 = vmatpush1.msra.mxu0 0.0
  %673 = vmatprep.subr.mxu0 0.0
  %674 = vmatpush1.msra.mxu0 0.0
  %675 = vmatprep.subr.mxu0 0.0
  %676 = vmatpush1.msra.mxu0 0.0
  %677 = vmatprep.subr.mxu0 0.0
  %678 = vmatpush1.msra.mxu0 0.0
  %679 = vmatprep.subr.mxu0 0.0
  %680 = vmatpush1.msra.mxu0 0.0
  %681 = vmatprep.subr.mxu0 0.0
  %682 = vmatpush1.msra.mxu0 0.0
  %683 = vmatprep.subr.mxu0 0.0
  %684 = vmatpush1.msra.mxu0 0.0
  %685 = vmatprep.subr.mxu0 0.0
  %686 = vmatpush1.msra.mxu0 %v33
  %687 = vmatprep.subr.mxu0 0.0
  %688 = vmatpush1.msra.mxu0 %v32
  %689 = vmatprep.subr.mxu0 0.0
  %690 = vmatpush2.msra.mxu0 0.0
  %691 = vmatprep.subr.mxu0 0.0
  %692 = vmatpush2.msra.mxu0 0.0
  %693 = vmatprep.subr.mxu0 0.0
  %694 = vmatpush2.msra.mxu0 0.0
  %695 = vmatprep.subr.mxu0 0.0
  %696 = vmatpush2.msra.mxu0 0.0
  %697 = vmatprep.subr.mxu0 0.0
  %698 = vmatpush2.msra.mxu0 0.0
  %699 = vmatprep.subr.mxu0 0.0
  %700 = vmatpush2.msra.mxu0 0.0
  %701 = vmatprep.subr.mxu0 0.0
  %702 = vmatpush2.msra.mxu0 0.0
  %703 = vmatprep.subr.mxu0 0.0
  %704 = vmatpush2.msra.mxu0 0.0
  %705 = vmatprep.subr.mxu0 0.0
  %706 = vmatpush2.msra.mxu0 0.0
  %707 = vmatprep.subr.mxu0 0.0
  %708 = vmatpush2.msra.mxu0 0.0
  %709 = vmatprep.subr.mxu0 0.0
  %710 = vmatpush2.msra.mxu0 0.0
  %711 = vmatprep.subr.mxu0 0.0
  %712 = vmatpush2.msra.mxu0 0.0
  %713 = vmatprep.subr.mxu0 0.0
  %714 = vmatpush2.msra.mxu0 0.0
  %715 = vmatprep.subr.mxu0 0.0
  %716 = vmatpush2.msra.mxu0 0.0
  %717 = vmatprep.subr.mxu0 0.0
  %718 = vmatpush2.msra.mxu0 0.0
  %719 = vmatprep.subr.mxu0 0.0
  %720 = vmatpush2.msra.mxu0 0.0
  %721 = vmatprep.mubr.f32.mxu0 0.0
  %722 = vmatmul.mubr.f32.gmra.mxu0 %v655
  %v723 = vpop.f32.mrf.mxu0
  %v724 = vadd.f32 %v651, %v723
  %v725 = vpop.f32.mrf.mxu0
  %726 = vdwg.mxu0
  %v727 = vadd.f32 %v724, %v192
  %v728 = vxor.u32 %v727, 2147483648
  %v729 = vmul.f32 %v728, 1.442695
  %v730 = vpow.pop %v729
  %v731 = vadd.f32 %v730, 1.0
  %v732 = vrcp.pop %v731
  %v733 = vmul.f32 1.0, %v732
  %v734 = vtanh.pop %v727
  %v735 = vmul.f32 %v733, %v567
  %737 = vrot.lane.b32.xlu0 %v734, 64
  %v738 = vpop.permute.xlu0 %737
  %v740 = vmul.f32 %v733, %v738
  %742 = vrot.lane.b32.xlu0 %v740, 32
  %v743 = vpop.permute.xlu0 %742
  %v745 = vadd.f32 %v735, %v743
  %v746 = vtanh.pop %v745
  %748 = vrot.lane.b32.xlu0 %v746, 64
  %v749 = vpop.permute.xlu0 %748
  %v751 = vmul.f32 %v733, %v749
  %753 = vrot.lane.b32.xlu0 %v751, 32
  %v754 = vpop.permute.xlu0 %753
  %s756 = scalar_lea.vmem [#allocation2], 24
  %757 = vst.msk [vmem:[%s756] sm:$0xff] %vm40, %v754
  %s758 = scalar_lea.vmem %s0, 32
  %v759 = vld [vmem:[%s758] sm:$0xff]
  %v760 = vsel %vm40, %v754, 0
  %762 = vmatprep.subr.mxu0 0.0
  %763 = vmatpush1.msra.mxu0 0.0
  %764 = vmatprep.subr.mxu0 0.0
  %765 = vmatpush1.msra.mxu0 0.0
  %766 = vmatprep.subr.mxu0 0.0
  %767 = vmatpush1.msra.mxu0 0.0
  %768 = vmatprep.subr.mxu0 0.0
  %769 = vmatpush1.msra.mxu0 0.0
  %770 = vmatprep.subr.mxu0 0.0
  %771 = vmatpush1.msra.mxu0 0.0
  %772 = vmatprep.subr.mxu0 0.0
  %773 = vmatpush1.msra.mxu0 0.0
  %774 = vmatprep.subr.mxu0 0.0
  %775 = vmatpush1.msra.mxu0 0.0
  %776 = vmatprep.subr.mxu0 0.0
  %777 = vmatpush1.msra.mxu0 0.0
  %778 = vmatprep.subr.mxu0 0.0
  %779 = vmatpush1.msra.mxu0 0.0
  %780 = vmatprep.subr.mxu0 0.0
  %781 = vmatpush1.msra.mxu0 0.0
  %782 = vmatprep.subr.mxu0 0.0
  %783 = vmatpush1.msra.mxu0 0.0
  %784 = vmatprep.subr.mxu0 0.0
  %785 = vmatpush1.msra.mxu0 0.0
  %786 = vmatprep.subr.mxu0 0.0
  %787 = vmatpush1.msra.mxu0 %v37
  %788 = vmatprep.subr.mxu0 0.0
  %789 = vmatpush1.msra.mxu0 %v36
  %790 = vmatprep.subr.mxu0 0.0
  %791 = vmatpush1.msra.mxu0 %v35
  %792 = vmatprep.subr.mxu0 0.0
  %793 = vmatpush1.msra.mxu0 %v34
  %794 = vmatprep.subr.mxu0 0.0
  %795 = vmatpush2.msra.mxu0 0.0
  %796 = vmatprep.subr.mxu0 0.0
  %797 = vmatpush2.msra.mxu0 0.0
  %798 = vmatprep.subr.mxu0 0.0
  %799 = vmatpush2.msra.mxu0 0.0
  %800 = vmatprep.subr.mxu0 0.0
  %801 = vmatpush2.msra.mxu0 0.0
  %802 = vmatprep.subr.mxu0 0.0
  %803 = vmatpush2.msra.mxu0 0.0
  %804 = vmatprep.subr.mxu0 0.0
  %805 = vmatpush2.msra.mxu0 0.0
  %806 = vmatprep.subr.mxu0 0.0
  %807 = vmatpush2.msra.mxu0 0.0
  %808 = vmatprep.subr.mxu0 0.0
  %809 = vmatpush2.msra.mxu0 0.0
  %810 = vmatprep.subr.mxu0 0.0
  %811 = vmatpush2.msra.mxu0 0.0
  %812 = vmatprep.subr.mxu0 0.0
  %813 = vmatpush2.msra.mxu0 0.0
  %814 = vmatprep.subr.mxu0 0.0
  %815 = vmatpush2.msra.mxu0 0.0
  %816 = vmatprep.subr.mxu0 0.0
  %817 = vmatpush2.msra.mxu0 0.0
  %818 = vmatprep.subr.mxu0 0.0
  %819 = vmatpush2.msra.mxu0 0.0
  %820 = vmatprep.subr.mxu0 0.0
  %821 = vmatpush2.msra.mxu0 0.0
  %822 = vmatprep.subr.mxu0 0.0
  %823 = vmatpush2.msra.mxu0 0.0
  %824 = vmatprep.subr.mxu0 0.0
  %825 = vmatpush2.msra.mxu0 0.0
  %826 = vmatprep.mubr.f32.mxu0 0.0
  %827 = vmatmul.mubr.f32.gmra.mxu0 %v760
  %v828 = vpop.f32.mrf.mxu0
  %v829 = vadd.f32 0.0, %v828
  %v830 = vpop.f32.mrf.mxu0
  %831 = vdwg.mxu0
  %v833 = vsel %vm114, %v759, 0
  %835 = vmatprep.subr.mxu0 0.0
  %836 = vmatpush1.msra.mxu0 0.0
  %837 = vmatprep.subr.mxu0 0.0
  %838 = vmatpush1.msra.mxu0 0.0
  %839 = vmatprep.subr.mxu0 0.0
  %840 = vmatpush1.msra.mxu0 0.0
  %841 = vmatprep.subr.mxu0 0.0
  %842 = vmatpush1.msra.mxu0 0.0
  %843 = vmatprep.subr.mxu0 0.0
  %844 = vmatpush1.msra.mxu0 0.0
  %845 = vmatprep.subr.mxu0 0.0
  %846 = vmatpush1.msra.mxu0 0.0
  %847 = vmatprep.subr.mxu0 0.0
  %848 = vmatpush1.msra.mxu0 0.0
  %849 = vmatprep.subr.mxu0 0.0
  %850 = vmatpush1.msra.mxu0 0.0
  %851 = vmatprep.subr.mxu0 0.0
  %852 = vmatpush1.msra.mxu0 0.0
  %853 = vmatprep.subr.mxu0 0.0
  %854 = vmatpush1.msra.mxu0 0.0
  %855 = vmatprep.subr.mxu0 0.0
  %856 = vmatpush1.msra.mxu0 0.0
  %857 = vmatprep.subr.mxu0 0.0
  %858 = vmatpush1.msra.mxu0 0.0
  %859 = vmatprep.subr.mxu0 0.0
  %860 = vmatpush1.msra.mxu0 0.0
  %861 = vmatprep.subr.mxu0 0.0
  %862 = vmatpush1.msra.mxu0 0.0
  %863 = vmatprep.subr.mxu0 0.0
  %864 = vmatpush1.msra.mxu0 %v33
  %865 = vmatprep.subr.mxu0 0.0
  %866 = vmatpush1.msra.mxu0 %v32
  %867 = vmatprep.subr.mxu0 0.0
  %868 = vmatpush2.msra.mxu0 0.0
  %869 = vmatprep.subr.mxu0 0.0
  %870 = vmatpush2.msra.mxu0 0.0
  %871 = vmatprep.subr.mxu0 0.0
  %872 = vmatpush2.msra.mxu0 0.0
  %873 = vmatprep.subr.mxu0 0.0
  %874 = vmatpush2.msra.mxu0 0.0
  %875 = vmatprep.subr.mxu0 0.0
  %876 = vmatpush2.msra.mxu0 0.0
  %877 = vmatprep.subr.mxu0 0.0
  %878 = vmatpush2.msra.mxu0 0.0
  %879 = vmatprep.subr.mxu0 0.0
  %880 = vmatpush2.msra.mxu0 0.0
  %881 = vmatprep.subr.mxu0 0.0
  %882 = vmatpush2.msra.mxu0 0.0
  %883 = vmatprep.subr.mxu0 0.0
  %884 = vmatpush2.msra.mxu0 0.0
  %885 = vmatprep.subr.mxu0 0.0
  %886 = vmatpush2.msra.mxu0 0.0
  %887 = vmatprep.subr.mxu0 0.0
  %888 = vmatpush2.msra.mxu0 0.0
  %889 = vmatprep.subr.mxu0 0.0
  %890 = vmatpush2.msra.mxu0 0.0
  %891 = vmatprep.subr.mxu0 0.0
  %892 = vmatpush2.msra.mxu0 0.0
  %893 = vmatprep.subr.mxu0 0.0
  %894 = vmatpush2.msra.mxu0 0.0
  %895 = vmatprep.subr.mxu0 0.0
  %896 = vmatpush2.msra.mxu0 0.0
  %897 = vmatprep.subr.mxu0 0.0
  %898 = vmatpush2.msra.mxu0 0.0
  %899 = vmatprep.mubr.f32.mxu0 0.0
  %900 = vmatmul.mubr.f32.gmra.mxu0 %v833
  %v901 = vpop.f32.mrf.mxu0
  %v902 = vadd.f32 %v829, %v901
  %v903 = vpop.f32.mrf.mxu0
  %904 = vdwg.mxu0
  %v905 = vadd.f32 %v902, %v192
  %v906 = vxor.u32 %v905, 2147483648
  %v907 = vmul.f32 %v906, 1.442695
  %v908 = vpow.pop %v907
  %v909 = vadd.f32 %v908, 1.0
  %v910 = vrcp.pop %v909
  %v911 = vmul.f32 1.0, %v910
  %v912 = vtanh.pop %v905
  %v913 = vmul.f32 %v911, %v745
  %915 = vrot.lane.b32.xlu0 %v912, 64
  %v916 = vpop.permute.xlu0 %915
  %v918 = vmul.f32 %v911, %v916
  %920 = vrot.lane.b32.xlu0 %v918, 32
  %v921 = vpop.permute.xlu0 %920
  %v923 = vadd.f32 %v913, %v921
  %v924 = vtanh.pop %v923
  %926 = vrot.lane.b32.xlu0 %v924, 64
  %v927 = vpop.permute.xlu0 %926
  %v929 = vmul.f32 %v911, %v927
  %931 = vrot.lane.b32.xlu0 %v929, 32
  %v932 = vpop.permute.xlu0 %931
  %s934 = scalar_lea.vmem [#allocation2], 32
  %935 = vst.msk [vmem:[%s934] sm:$0xff] %vm40, %v932
  %s936 = scalar_lea.vmem %s0, 40
  %v937 = vld [vmem:[%s936] sm:$0xff]
  %v938 = vsel %vm40, %v932, 0
  %940 = vmatprep.subr.mxu0 0.0
  %941 = vmatpush1.msra.mxu0 0.0
  %942 = vmatprep.subr.mxu0 0.0
  %943 = vmatpush1.msra.mxu0 0.0
  %944 = vmatprep.subr.mxu0 0.0
  %945 = vmatpush1.msra.mxu0 0.0
  %946 = vmatprep.subr.mxu0 0.0
  %947 = vmatpush1.msra.mxu0 0.0
  %948 = vmatprep.subr.mxu0 0.0
  %949 = vmatpush1.msra.mxu0 0.0
  %950 = vmatprep.subr.mxu0 0.0
  %951 = vmatpush1.msra.mxu0 0.0
  %952 = vmatprep.subr.mxu0 0.0
  %953 = vmatpush1.msra.mxu0 0.0
  %954 = vmatprep.subr.mxu0 0.0
  %955 = vmatpush1.msra.mxu0 0.0
  %956 = vmatprep.subr.mxu0 0.0
  %957 = vmatpush1.msra.mxu0 0.0
  %958 = vmatprep.subr.mxu0 0.0
  %959 = vmatpush1.msra.mxu0 0.0
  %960 = vmatprep.subr.mxu0 0.0
  %961 = vmatpush1.msra.mxu0 0.0
  %962 = vmatprep.subr.mxu0 0.0
  %963 = vmatpush1.msra.mxu0 0.0
  %964 = vmatprep.subr.mxu0 0.0
  %965 = vmatpush1.msra.mxu0 %v37
  %966 = vmatprep.subr.mxu0 0.0
  %967 = vmatpush1.msra.mxu0 %v36
  %968 = vmatprep.subr.mxu0 0.0
  %969 = vmatpush1.msra.mxu0 %v35
  %970 = vmatprep.subr.mxu0 0.0
  %971 = vmatpush1.msra.mxu0 %v34
  %972 = vmatprep.subr.mxu0 0.0
  %973 = vmatpush2.msra.mxu0 0.0
  %974 = vmatprep.subr.mxu0 0.0
  %975 = vmatpush2.msra.mxu0 0.0
  %976 = vmatprep.subr.mxu0 0.0
  %977 = vmatpush2.msra.mxu0 0.0
  %978 = vmatprep.subr.mxu0 0.0
  %979 = vmatpush2.msra.mxu0 0.0
  %980 = vmatprep.subr.mxu0 0.0
  %981 = vmatpush2.msra.mxu0 0.0
  %982 = vmatprep.subr.mxu0 0.0
  %983 = vmatpush2.msra.mxu0 0.0
  %984 = vmatprep.subr.mxu0 0.0
  %985 = vmatpush2.msra.mxu0 0.0
  %986 = vmatprep.subr.mxu0 0.0
  %987 = vmatpush2.msra.mxu0 0.0
  %988 = vmatprep.subr.mxu0 0.0
  %989 = vmatpush2.msra.mxu0 0.0
  %990 = vmatprep.subr.mxu0 0.0
  %991 = vmatpush2.msra.mxu0 0.0
  %992 = vmatprep.subr.mxu0 0.0
  %993 = vmatpush2.msra.mxu0 0.0
  %994 = vmatprep.subr.mxu0 0.0
  %995 = vmatpush2.msra.mxu0 0.0
  %996 = vmatprep.subr.mxu0 0.0
  %997 = vmatpush2.msra.mxu0 0.0
  %998 = vmatprep.subr.mxu0 0.0
  %999 = vmatpush2.msra.mxu0 0.0
  %1000 = vmatprep.subr.mxu0 0.0
  %1001 = vmatpush2.msra.mxu0 0.0
  %1002 = vmatprep.subr.mxu0 0.0
  %1003 = vmatpush2.msra.mxu0 0.0
  %1004 = vmatprep.mubr.f32.mxu0 0.0
  %1005 = vmatmul.mubr.f32.gmra.mxu0 %v938
  %v1006 = vpop.f32.mrf.mxu0
  %v1007 = vadd.f32 0.0, %v1006
  %v1008 = vpop.f32.mrf.mxu0
  %1009 = vdwg.mxu0
  %v1011 = vsel %vm114, %v937, 0
  %1013 = vmatprep.subr.mxu0 0.0
  %1014 = vmatpush1.msra.mxu0 0.0
  %1015 = vmatprep.subr.mxu0 0.0
  %1016 = vmatpush1.msra.mxu0 0.0
  %1017 = vmatprep.subr.mxu0 0.0
  %1018 = vmatpush1.msra.mxu0 0.0
  %1019 = vmatprep.subr.mxu0 0.0
  %1020 = vmatpush1.msra.mxu0 0.0
  %1021 = vmatprep.subr.mxu0 0.0
  %1022 = vmatpush1.msra.mxu0 0.0
  %1023 = vmatprep.subr.mxu0 0.0
  %1024 = vmatpush1.msra.mxu0 0.0
  %1025 = vmatprep.subr.mxu0 0.0
  %1026 = vmatpush1.msra.mxu0 0.0
  %1027 = vmatprep.subr.mxu0 0.0
  %1028 = vmatpush1.msra.mxu0 0.0
  %1029 = vmatprep.subr.mxu0 0.0
  %1030 = vmatpush1.msra.mxu0 0.0
  %1031 = vmatprep.subr.mxu0 0.0
  %1032 = vmatpush1.msra.mxu0 0.0
  %1033 = vmatprep.subr.mxu0 0.0
  %1034 = vmatpush1.msra.mxu0 0.0
  %1035 = vmatprep.subr.mxu0 0.0
  %1036 = vmatpush1.msra.mxu0 0.0
  %1037 = vmatprep.subr.mxu0 0.0
  %1038 = vmatpush1.msra.mxu0 0.0
  %1039 = vmatprep.subr.mxu0 0.0
  %1040 = vmatpush1.msra.mxu0 0.0
  %1041 = vmatprep.subr.mxu0 0.0
  %1042 = vmatpush1.msra.mxu0 %v33
  %1043 = vmatprep.subr.mxu0 0.0
  %1044 = vmatpush1.msra.mxu0 %v32
  %1045 = vmatprep.subr.mxu0 0.0
  %1046 = vmatpush2.msra.mxu0 0.0
  %1047 = vmatprep.subr.mxu0 0.0
  %1048 = vmatpush2.msra.mxu0 0.0
  %1049 = vmatprep.subr.mxu0 0.0
  %1050 = vmatpush2.msra.mxu0 0.0
  %1051 = vmatprep.subr.mxu0 0.0
  %1052 = vmatpush2.msra.mxu0 0.0
  %1053 = vmatprep.subr.mxu0 0.0
  %1054 = vmatpush2.msra.mxu0 0.0
  %1055 = vmatprep.subr.mxu0 0.0
  %1056 = vmatpush2.msra.mxu0 0.0
  %1057 = vmatprep.subr.mxu0 0.0
  %1058 = vmatpush2.msra.mxu0 0.0
  %1059 = vmatprep.subr.mxu0 0.0
  %1060 = vmatpush2.msra.mxu0 0.0
  %1061 = vmatprep.subr.mxu0 0.0
  %1062 = vmatpush2.msra.mxu0 0.0
  %1063 = vmatprep.subr.mxu0 0.0
  %1064 = vmatpush2.msra.mxu0 0.0
  %1065 = vmatprep.subr.mxu0 0.0
  %1066 = vmatpush2.msra.mxu0 0.0
  %1067 = vmatprep.subr.mxu0 0.0
  %1068 = vmatpush2.msra.mxu0 0.0
  %1069 = vmatprep.subr.mxu0 0.0
  %1070 = vmatpush2.msra.mxu0 0.0
  %1071 = vmatprep.subr.mxu0 0.0
  %1072 = vmatpush2.msra.mxu0 0.0
  %1073 = vmatprep.subr.mxu0 0.0
  %1074 = vmatpush2.msra.mxu0 0.0
  %1075 = vmatprep.subr.mxu0 0.0
  %1076 = vmatpush2.msra.mxu0 0.0
  %1077 = vmatprep.mubr.f32.mxu0 0.0
  %1078 = vmatmul.mubr.f32.gmra.mxu0 %v1011
  %v1079 = vpop.f32.mrf.mxu0
  %v1080 = vadd.f32 %v1007, %v1079
  %v1081 = vpop.f32.mrf.mxu0
  %1082 = vdwg.mxu0
  %v1083 = vadd.f32 %v1080, %v192
  %v1084 = vxor.u32 %v1083, 2147483648
  %v1085 = vmul.f32 %v1084, 1.442695
  %v1086 = vpow.pop %v1085
  %v1087 = vadd.f32 %v1086, 1.0
  %v1088 = vrcp.pop %v1087
  %v1089 = vmul.f32 1.0, %v1088
  %v1090 = vtanh.pop %v1083
  %v1091 = vmul.f32 %v1089, %v923
  %1093 = vrot.lane.b32.xlu0 %v1090, 64
  %v1094 = vpop.permute.xlu0 %1093
  %v1096 = vmul.f32 %v1089, %v1094
  %1098 = vrot.lane.b32.xlu0 %v1096, 32
  %v1099 = vpop.permute.xlu0 %1098
  %v1101 = vadd.f32 %v1091, %v1099
  %v1102 = vtanh.pop %v1101
  %1104 = vrot.lane.b32.xlu0 %v1102, 64
  %v1105 = vpop.permute.xlu0 %1104
  %v1107 = vmul.f32 %v1089, %v1105
  %1109 = vrot.lane.b32.xlu0 %v1107, 32
  %v1110 = vpop.permute.xlu0 %1109
  %s1112 = scalar_lea.vmem [#allocation2], 40
  %1113 = vst.msk [vmem:[%s1112] sm:$0xff] %vm40, %v1110
  %s1114 = scalar_lea.vmem %s0, 48
  %v1115 = vld [vmem:[%s1114] sm:$0xff]
  %v1116 = vsel %vm40, %v1110, 0
  %1118 = vmatprep.subr.mxu0 0.0
  %1119 = vmatpush1.msra.mxu0 0.0
  %1120 = vmatprep.subr.mxu0 0.0
  %1121 = vmatpush1.msra.mxu0 0.0
  %1122 = vmatprep.subr.mxu0 0.0
  %1123 = vmatpush1.msra.mxu0 0.0
  %1124 = vmatprep.subr.mxu0 0.0
  %1125 = vmatpush1.msra.mxu0 0.0
  %1126 = vmatprep.subr.mxu0 0.0
  %1127 = vmatpush1.msra.mxu0 0.0
  %1128 = vmatprep.subr.mxu0 0.0
  %1129 = vmatpush1.msra.mxu0 0.0
  %1130 = vmatprep.subr.mxu0 0.0
  %1131 = vmatpush1.msra.mxu0 0.0
  %1132 = vmatprep.subr.mxu0 0.0
  %1133 = vmatpush1.msra.mxu0 0.0
  %1134 = vmatprep.subr.mxu0 0.0
  %1135 = vmatpush1.msra.mxu0 0.0
  %1136 = vmatprep.subr.mxu0 0.0
  %1137 = vmatpush1.msra.mxu0 0.0
  %1138 = vmatprep.subr.mxu0 0.0
  %1139 = vmatpush1.msra.mxu0 0.0
  %1140 = vmatprep.subr.mxu0 0.0
  %1141 = vmatpush1.msra.mxu0 0.0
  %1142 = vmatprep.subr.mxu0 0.0
  %1143 = vmatpush1.msra.mxu0 %v37
  %1144 = vmatprep.subr.mxu0 0.0
  %1145 = vmatpush1.msra.mxu0 %v36
  %1146 = vmatprep.subr.mxu0 0.0
  %1147 = vmatpush1.msra.mxu0 %v35
  %1148 = vmatprep.subr.mxu0 0.0
  %1149 = vmatpush1.msra.mxu0 %v34
  %1150 = vmatprep.subr.mxu0 0.0
  %1151 = vmatpush2.msra.mxu0 0.0
  %1152 = vmatprep.subr.mxu0 0.0
  %1153 = vmatpush2.msra.mxu0 0.0
  %1154 = vmatprep.subr.mxu0 0.0
  %1155 = vmatpush2.msra.mxu0 0.0
  %1156 = vmatprep.subr.mxu0 0.0
  %1157 = vmatpush2.msra.mxu0 0.0
  %1158 = vmatprep.subr.mxu0 0.0
  %1159 = vmatpush2.msra.mxu0 0.0
  %1160 = vmatprep.subr.mxu0 0.0
  %1161 = vmatpush2.msra.mxu0 0.0
  %1162 = vmatprep.subr.mxu0 0.0
  %1163 = vmatpush2.msra.mxu0 0.0
  %1164 = vmatprep.subr.mxu0 0.0
  %1165 = vmatpush2.msra.mxu0 0.0
  %1166 = vmatprep.subr.mxu0 0.0
  %1167 = vmatpush2.msra.mxu0 0.0
  %1168 = vmatprep.subr.mxu0 0.0
  %1169 = vmatpush2.msra.mxu0 0.0
  %1170 = vmatprep.subr.mxu0 0.0
  %1171 = vmatpush2.msra.mxu0 0.0
  %1172 = vmatprep.subr.mxu0 0.0
  %1173 = vmatpush2.msra.mxu0 0.0
  %1174 = vmatprep.subr.mxu0 0.0
  %1175 = vmatpush2.msra.mxu0 0.0
  %1176 = vmatprep.subr.mxu0 0.0
  %1177 = vmatpush2.msra.mxu0 0.0
  %1178 = vmatprep.subr.mxu0 0.0
  %1179 = vmatpush2.msra.mxu0 0.0
  %1180 = vmatprep.subr.mxu0 0.0
  %1181 = vmatpush2.msra.mxu0 0.0
  %1182 = vmatprep.mubr.f32.mxu0 0.0
  %1183 = vmatmul.mubr.f32.gmra.mxu0 %v1116
  %v1184 = vpop.f32.mrf.mxu0
  %v1185 = vadd.f32 0.0, %v1184
  %v1186 = vpop.f32.mrf.mxu0
  %1187 = vdwg.mxu0
  %v1189 = vsel %vm114, %v1115, 0
  %1191 = vmatprep.subr.mxu0 0.0
  %1192 = vmatpush1.msra.mxu0 0.0
  %1193 = vmatprep.subr.mxu0 0.0
  %1194 = vmatpush1.msra.mxu0 0.0
  %1195 = vmatprep.subr.mxu0 0.0
  %1196 = vmatpush1.msra.mxu0 0.0
  %1197 = vmatprep.subr.mxu0 0.0
  %1198 = vmatpush1.msra.mxu0 0.0
  %1199 = vmatprep.subr.mxu0 0.0
  %1200 = vmatpush1.msra.mxu0 0.0
  %1201 = vmatprep.subr.mxu0 0.0
  %1202 = vmatpush1.msra.mxu0 0.0
  %1203 = vmatprep.subr.mxu0 0.0
  %1204 = vmatpush1.msra.mxu0 0.0
  %1205 = vmatprep.subr.mxu0 0.0
  %1206 = vmatpush1.msra.mxu0 0.0
  %1207 = vmatprep.subr.mxu0 0.0
  %1208 = vmatpush1.msra.mxu0 0.0
  %1209 = vmatprep.subr.mxu0 0.0
  %1210 = vmatpush1.msra.mxu0 0.0
  %1211 = vmatprep.subr.mxu0 0.0
  %1212 = vmatpush1.msra.mxu0 0.0
  %1213 = vmatprep.subr.mxu0 0.0
  %1214 = vmatpush1.msra.mxu0 0.0
  %1215 = vmatprep.subr.mxu0 0.0
  %1216 = vmatpush1.msra.mxu0 0.0
  %1217 = vmatprep.subr.mxu0 0.0
  %1218 = vmatpush1.msra.mxu0 0.0
  %1219 = vmatprep.subr.mxu0 0.0
  %1220 = vmatpush1.msra.mxu0 %v33
  %1221 = vmatprep.subr.mxu0 0.0
  %1222 = vmatpush1.msra.mxu0 %v32
  %1223 = vmatprep.subr.mxu0 0.0
  %1224 = vmatpush2.msra.mxu0 0.0
  %1225 = vmatprep.subr.mxu0 0.0
  %1226 = vmatpush2.msra.mxu0 0.0
  %1227 = vmatprep.subr.mxu0 0.0
  %1228 = vmatpush2.msra.mxu0 0.0
  %1229 = vmatprep.subr.mxu0 0.0
  %1230 = vmatpush2.msra.mxu0 0.0
  %1231 = vmatprep.subr.mxu0 0.0
  %1232 = vmatpush2.msra.mxu0 0.0
  %1233 = vmatprep.subr.mxu0 0.0
  %1234 = vmatpush2.msra.mxu0 0.0
  %1235 = vmatprep.subr.mxu0 0.0
  %1236 = vmatpush2.msra.mxu0 0.0
  %1237 = vmatprep.subr.mxu0 0.0
  %1238 = vmatpush2.msra.mxu0 0.0
  %1239 = vmatprep.subr.mxu0 0.0
  %1240 = vmatpush2.msra.mxu0 0.0
  %1241 = vmatprep.subr.mxu0 0.0
  %1242 = vmatpush2.msra.mxu0 0.0
  %1243 = vmatprep.subr.mxu0 0.0
  %1244 = vmatpush2.msra.mxu0 0.0
  %1245 = vmatprep.subr.mxu0 0.0
  %1246 = vmatpush2.msra.mxu0 0.0
  %1247 = vmatprep.subr.mxu0 0.0
  %1248 = vmatpush2.msra.mxu0 0.0
  %1249 = vmatprep.subr.mxu0 0.0
  %1250 = vmatpush2.msra.mxu0 0.0
  %1251 = vmatprep.subr.mxu0 0.0
  %1252 = vmatpush2.msra.mxu0 0.0
  %1253 = vmatprep.subr.mxu0 0.0
  %1254 = vmatpush2.msra.mxu0 0.0
  %1255 = vmatprep.mubr.f32.mxu0 0.0
  %1256 = vmatmul.mubr.f32.gmra.mxu0 %v1189
  %v1257 = vpop.f32.mrf.mxu0
  %v1258 = vadd.f32 %v1185, %v1257
  %v1259 = vpop.f32.mrf.mxu0
  %1260 = vdwg.mxu0
  %v1261 = vadd.f32 %v1258, %v192
  %v1262 = vxor.u32 %v1261, 2147483648
  %v1263 = vmul.f32 %v1262, 1.442695
  %v1264 = vpow.pop %v1263
  %v1265 = vadd.f32 %v1264, 1.0
  %v1266 = vrcp.pop %v1265
  %v1267 = vmul.f32 1.0, %v1266
  %v1268 = vtanh.pop %v1261
  %v1269 = vmul.f32 %v1267, %v1101
  %1271 = vrot.lane.b32.xlu0 %v1268, 64
  %v1272 = vpop.permute.xlu0 %1271
  %v1274 = vmul.f32 %v1267, %v1272
  %1276 = vrot.lane.b32.xlu0 %v1274, 32
  %v1277 = vpop.permute.xlu0 %1276
  %v1279 = vadd.f32 %v1269, %v1277
  %v1280 = vtanh.pop %v1279
  %1282 = vrot.lane.b32.xlu0 %v1280, 64
  %v1283 = vpop.permute.xlu0 %1282
  %v1285 = vmul.f32 %v1267, %v1283
  %1287 = vrot.lane.b32.xlu0 %v1285, 32
  %v1288 = vpop.permute.xlu0 %1287
  %s1290 = scalar_lea.vmem [#allocation2], 48
  %1291 = vst.msk [vmem:[%s1290] sm:$0xff] %vm40, %v1288
  %s1292 = scalar_lea.vmem %s0, 56
  %v1293 = vld [vmem:[%s1292] sm:$0xff]
  %v1294 = vsel %vm40, %v1288, 0
  %1296 = vmatprep.subr.mxu0 0.0
  %1297 = vmatpush1.msra.mxu0 0.0
  %1298 = vmatprep.subr.mxu0 0.0
  %1299 = vmatpush1.msra.mxu0 0.0
  %1300 = vmatprep.subr.mxu0 0.0
  %1301 = vmatpush1.msra.mxu0 0.0
  %1302 = vmatprep.subr.mxu0 0.0
  %1303 = vmatpush1.msra.mxu0 0.0
  %1304 = vmatprep.subr.mxu0 0.0
  %1305 = vmatpush1.msra.mxu0 0.0
  %1306 = vmatprep.subr.mxu0 0.0
  %1307 = vmatpush1.msra.mxu0 0.0
  %1308 = vmatprep.subr.mxu0 0.0
  %1309 = vmatpush1.msra.mxu0 0.0
  %1310 = vmatprep.subr.mxu0 0.0
  %1311 = vmatpush1.msra.mxu0 0.0
  %1312 = vmatprep.subr.mxu0 0.0
  %1313 = vmatpush1.msra.mxu0 0.0
  %1314 = vmatprep.subr.mxu0 0.0
  %1315 = vmatpush1.msra.mxu0 0.0
  %1316 = vmatprep.subr.mxu0 0.0
  %1317 = vmatpush1.msra.mxu0 0.0
  %1318 = vmatprep.subr.mxu0 0.0
  %1319 = vmatpush1.msra.mxu0 0.0
  %1320 = vmatprep.subr.mxu0 0.0
  %1321 = vmatpush1.msra.mxu0 %v37
  %1322 = vmatprep.subr.mxu0 0.0
  %1323 = vmatpush1.msra.mxu0 %v36
  %1324 = vmatprep.subr.mxu0 0.0
  %1325 = vmatpush1.msra.mxu0 %v35
  %1326 = vmatprep.subr.mxu0 0.0
  %1327 = vmatpush1.msra.mxu0 %v34
  %1328 = vmatprep.subr.mxu0 0.0
  %1329 = vmatpush2.msra.mxu0 0.0
  %1330 = vmatprep.subr.mxu0 0.0
  %1331 = vmatpush2.msra.mxu0 0.0
  %1332 = vmatprep.subr.mxu0 0.0
  %1333 = vmatpush2.msra.mxu0 0.0
  %1334 = vmatprep.subr.mxu0 0.0
  %1335 = vmatpush2.msra.mxu0 0.0
  %1336 = vmatprep.subr.mxu0 0.0
  %1337 = vmatpush2.msra.mxu0 0.0
  %1338 = vmatprep.subr.mxu0 0.0
  %1339 = vmatpush2.msra.mxu0 0.0
  %1340 = vmatprep.subr.mxu0 0.0
  %1341 = vmatpush2.msra.mxu0 0.0
  %1342 = vmatprep.subr.mxu0 0.0
  %1343 = vmatpush2.msra.mxu0 0.0
  %1344 = vmatprep.subr.mxu0 0.0
  %1345 = vmatpush2.msra.mxu0 0.0
  %1346 = vmatprep.subr.mxu0 0.0
  %1347 = vmatpush2.msra.mxu0 0.0
  %1348 = vmatprep.subr.mxu0 0.0
  %1349 = vmatpush2.msra.mxu0 0.0
  %1350 = vmatprep.subr.mxu0 0.0
  %1351 = vmatpush2.msra.mxu0 0.0
  %1352 = vmatprep.subr.mxu0 0.0
  %1353 = vmatpush2.msra.mxu0 0.0
  %1354 = vmatprep.subr.mxu0 0.0
  %1355 = vmatpush2.msra.mxu0 0.0
  %1356 = vmatprep.subr.mxu0 0.0
  %1357 = vmatpush2.msra.mxu0 0.0
  %1358 = vmatprep.subr.mxu0 0.0
  %1359 = vmatpush2.msra.mxu0 0.0
  %1360 = vmatprep.mubr.f32.mxu0 0.0
  %1361 = vmatmul.mubr.f32.gmra.mxu0 %v1294
  %v1362 = vpop.f32.mrf.mxu0
  %v1363 = vadd.f32 0.0, %v1362
  %v1364 = vpop.f32.mrf.mxu0
  %1365 = vdwg.mxu0
  %v1367 = vsel %vm114, %v1293, 0
  %1369 = vmatprep.subr.mxu0 0.0
  %1370 = vmatpush1.msra.mxu0 0.0
  %1371 = vmatprep.subr.mxu0 0.0
  %1372 = vmatpush1.msra.mxu0 0.0
  %1373 = vmatprep.subr.mxu0 0.0
  %1374 = vmatpush1.msra.mxu0 0.0
  %1375 = vmatprep.subr.mxu0 0.0
  %1376 = vmatpush1.msra.mxu0 0.0
  %1377 = vmatprep.subr.mxu0 0.0
  %1378 = vmatpush1.msra.mxu0 0.0
  %1379 = vmatprep.subr.mxu0 0.0
  %1380 = vmatpush1.msra.mxu0 0.0
  %1381 = vmatprep.subr.mxu0 0.0
  %1382 = vmatpush1.msra.mxu0 0.0
  %1383 = vmatprep.subr.mxu0 0.0
  %1384 = vmatpush1.msra.mxu0 0.0
  %1385 = vmatprep.subr.mxu0 0.0
  %1386 = vmatpush1.msra.mxu0 0.0
  %1387 = vmatprep.subr.mxu0 0.0
  %1388 = vmatpush1.msra.mxu0 0.0
  %1389 = vmatprep.subr.mxu0 0.0
  %1390 = vmatpush1.msra.mxu0 0.0
  %1391 = vmatprep.subr.mxu0 0.0
  %1392 = vmatpush1.msra.mxu0 0.0
  %1393 = vmatprep.subr.mxu0 0.0
  %1394 = vmatpush1.msra.mxu0 0.0
  %1395 = vmatprep.subr.mxu0 0.0
  %1396 = vmatpush1.msra.mxu0 0.0
  %1397 = vmatprep.subr.mxu0 0.0
  %1398 = vmatpush1.msra.mxu0 %v33
  %1399 = vmatprep.subr.mxu0 0.0
  %1400 = vmatpush1.msra.mxu0 %v32
  %1401 = vmatprep.subr.mxu0 0.0
  %1402 = vmatpush2.msra.mxu0 0.0
  %1403 = vmatprep.subr.mxu0 0.0
  %1404 = vmatpush2.msra.mxu0 0.0
  %1405 = vmatprep.subr.mxu0 0.0
  %1406 = vmatpush2.msra.mxu0 0.0
  %1407 = vmatprep.subr.mxu0 0.0
  %1408 = vmatpush2.msra.mxu0 0.0
  %1409 = vmatprep.subr.mxu0 0.0
  %1410 = vmatpush2.msra.mxu0 0.0
  %1411 = vmatprep.subr.mxu0 0.0
  %1412 = vmatpush2.msra.mxu0 0.0
  %1413 = vmatprep.subr.mxu0 0.0
  %1414 = vmatpush2.msra.mxu0 0.0
  %1415 = vmatprep.subr.mxu0 0.0
  %1416 = vmatpush2.msra.mxu0 0.0
  %1417 = vmatprep.subr.mxu0 0.0
  %1418 = vmatpush2.msra.mxu0 0.0
  %1419 = vmatprep.subr.mxu0 0.0
  %1420 = vmatpush2.msra.mxu0 0.0
  %1421 = vmatprep.subr.mxu0 0.0
  %1422 = vmatpush2.msra.mxu0 0.0
  %1423 = vmatprep.subr.mxu0 0.0
  %1424 = vmatpush2.msra.mxu0 0.0
  %1425 = vmatprep.subr.mxu0 0.0
  %1426 = vmatpush2.msra.mxu0 0.0
  %1427 = vmatprep.subr.mxu0 0.0
  %1428 = vmatpush2.msra.mxu0 0.0
  %1429 = vmatprep.subr.mxu0 0.0
  %1430 = vmatpush2.msra.mxu0 0.0
  %1431 = vmatprep.subr.mxu0 0.0
  %1432 = vmatpush2.msra.mxu0 0.0
  %1433 = vmatprep.mubr.f32.mxu0 0.0
  %1434 = vmatmul.mubr.f32.gmra.mxu0 %v1367
  %v1435 = vpop.f32.mrf.mxu0
  %v1436 = vadd.f32 %v1363, %v1435
  %v1437 = vpop.f32.mrf.mxu0
  %1438 = vdwg.mxu0
  %v1439 = vadd.f32 %v1436, %v192
  %v1440 = vxor.u32 %v1439, 2147483648
  %v1441 = vmul.f32 %v1440, 1.442695
  %v1442 = vpow.pop %v1441
  %v1443 = vadd.f32 %v1442, 1.0
  %v1444 = vrcp.pop %v1443
  %v1445 = vmul.f32 1.0, %v1444
  %v1446 = vtanh.pop %v1439
  %v1447 = vmul.f32 %v1445, %v1279
  %1449 = vrot.lane.b32.xlu0 %v1446, 64
  %v1450 = vpop.permute.xlu0 %1449
  %v1452 = vmul.f32 %v1445, %v1450
  %1454 = vrot.lane.b32.xlu0 %v1452, 32
  %v1455 = vpop.permute.xlu0 %1454
  %v1457 = vadd.f32 %v1447, %v1455
  %v1458 = vtanh.pop %v1457
  %1460 = vrot.lane.b32.xlu0 %v1458, 64
  %v1461 = vpop.permute.xlu0 %1460
  %v1463 = vmul.f32 %v1445, %v1461
  %1465 = vrot.lane.b32.xlu0 %v1463, 32
  %v1466 = vpop.permute.xlu0 %1465
  %s1468 = scalar_lea.vmem [#allocation2], 56
  %1469 = vst.msk [vmem:[%s1468] sm:$0xff] %vm40, %v1466
  %v1470 = vld [vmem:[%s4] sm:$0xff]
  %v1471 = vld [vmem:[%s4 + $0x8] sm:$0xff]
  %v1472 = vld [vmem:[%s4 + $0x10] sm:$0xff]
  %v1473 = vld [vmem:[%s4 + $0x18] sm:$0xff]
  %v1474 = vld [vmem:[%s5] sm:$0xff]
  %v1475 = vld [vmem:[%s5 + $0x8] sm:$0xff]
  %v1476 = vld [vmem:[%s5 + $0x10] sm:$0xff]
  %v1477 = vld [vmem:[%s5 + $0x18] sm:$0xff]
  %v1478 = vld [vmem:[%s6] sm:$0x1]
  %v1479 = vld [vmem:[#allocation2] sm:$0xff]
  %1480 = vmatprep.subr.mxu0 0.0
  %1481 = vmatpush1.msra.mxu0 0.0
  %1482 = vmatprep.subr.mxu0 0.0
  %1483 = vmatpush1.msra.mxu0 0.0
  %1484 = vmatprep.subr.mxu0 0.0
  %1485 = vmatpush1.msra.mxu0 0.0
  %1486 = vmatprep.subr.mxu0 0.0
  %1487 = vmatpush1.msra.mxu0 0.0
  %1488 = vmatprep.subr.mxu0 0.0
  %1489 = vmatpush1.msra.mxu0 0.0
  %1490 = vmatprep.subr.mxu0 0.0
  %1491 = vmatpush1.msra.mxu0 0.0
  %1492 = vmatprep.subr.mxu0 0.0
  %1493 = vmatpush1.msra.mxu0 0.0
  %1494 = vmatprep.subr.mxu0 0.0
  %1495 = vmatpush1.msra.mxu0 0.0
  %1496 = vmatprep.subr.mxu0 0.0
  %1497 = vmatpush1.msra.mxu0 0.0
  %1498 = vmatprep.subr.mxu0 0.0
  %1499 = vmatpush1.msra.mxu0 0.0
  %1500 = vmatprep.subr.mxu0 0.0
  %1501 = vmatpush1.msra.mxu0 0.0
  %1502 = vmatprep.subr.mxu0 0.0
  %1503 = vmatpush1.msra.mxu0 0.0
  %1504 = vmatprep.subr.mxu0 0.0
  %1505 = vmatpush1.msra.mxu0 %v1477
  %1506 = vmatprep.subr.mxu0 0.0
  %1507 = vmatpush1.msra.mxu0 %v1476
  %1508 = vmatprep.subr.mxu0 0.0
  %1509 = vmatpush1.msra.mxu0 %v1475
  %1510 = vmatprep.subr.mxu0 0.0
  %1511 = vmatpush1.msra.mxu0 %v1474
  %1512 = vmatprep.subr.mxu0 0.0
  %1513 = vmatpush2.msra.mxu0 0.0
  %1514 = vmatprep.subr.mxu0 0.0
  %1515 = vmatpush2.msra.mxu0 0.0
  %1516 = vmatprep.subr.mxu0 0.0
  %1517 = vmatpush2.msra.mxu0 0.0
  %1518 = vmatprep.subr.mxu0 0.0
  %1519 = vmatpush2.msra.mxu0 0.0
  %1520 = vmatprep.subr.mxu0 0.0
  %1521 = vmatpush2.msra.mxu0 0.0
  %1522 = vmatprep.subr.mxu0 0.0
  %1523 = vmatpush2.msra.mxu0 0.0
  %1524 = vmatprep.subr.mxu0 0.0
  %1525 = vmatpush2.msra.mxu0 0.0
  %1526 = vmatprep.subr.mxu0 0.0
  %1527 = vmatpush2.msra.mxu0 0.0
  %1528 = vmatprep.subr.mxu0 0.0
  %1529 = vmatpush2.msra.mxu0 0.0
  %1530 = vmatprep.subr.mxu0 0.0
  %1531 = vmatpush2.msra.mxu0 0.0
  %1532 = vmatprep.subr.mxu0 0.0
  %1533 = vmatpush2.msra.mxu0 0.0
  %1534 = vmatprep.subr.mxu0 0.0
  %1535 = vmatpush2.msra.mxu0 0.0
  %1536 = vmatprep.subr.mxu0 0.0
  %1537 = vmatpush2.msra.mxu0 0.0
  %1538 = vmatprep.subr.mxu0 0.0
  %1539 = vmatpush2.msra.mxu0 0.0
  %1540 = vmatprep.subr.mxu0 0.0
  %1541 = vmatpush2.msra.mxu0 0.0
  %1542 = vmatprep.subr.mxu0 0.0
  %1543 = vmatpush2.msra.mxu0 0.0
  %1544 = vmatprep.mubr.f32.mxu0 0.0
  %1545 = vmatmul.mubr.f32.gmra.mxu0 %v42
  %v1546 = vpop.f32.mrf.mxu0
  %v1547 = vadd.f32 0.0, %v1546
  %v1548 = vpop.f32.mrf.mxu0
  %1549 = vdwg.mxu0
  %v1551 = vsel %vm40, %v1479, 0
  %1553 = vmatprep.subr.mxu0 0.0
  %1554 = vmatpush1.msra.mxu0 0.0
  %1555 = vmatprep.subr.mxu0 0.0
  %1556 = vmatpush1.msra.mxu0 0.0
  %1557 = vmatprep.subr.mxu0 0.0
  %1558 = vmatpush1.msra.mxu0 0.0
  %1559 = vmatprep.subr.mxu0 0.0
  %1560 = vmatpush1.msra.mxu0 0.0
  %1561 = vmatprep.subr.mxu0 0.0
  %1562 = vmatpush1.msra.mxu0 0.0
  %1563 = vmatprep.subr.mxu0 0.0
  %1564 = vmatpush1.msra.mxu0 0.0
  %1565 = vmatprep.subr.mxu0 0.0
  %1566 = vmatpush1.msra.mxu0 0.0
  %1567 = vmatprep.subr.mxu0 0.0
  %1568 = vmatpush1.msra.mxu0 0.0
  %1569 = vmatprep.subr.mxu0 0.0
  %1570 = vmatpush1.msra.mxu0 0.0
  %1571 = vmatprep.subr.mxu0 0.0
  %1572 = vmatpush1.msra.mxu0 0.0
  %1573 = vmatprep.subr.mxu0 0.0
  %1574 = vmatpush1.msra.mxu0 0.0
  %1575 = vmatprep.subr.mxu0 0.0
  %1576 = vmatpush1.msra.mxu0 0.0
  %1577 = vmatprep.subr.mxu0 0.0
  %1578 = vmatpush1.msra.mxu0 %v1473
  %1579 = vmatprep.subr.mxu0 0.0
  %1580 = vmatpush1.msra.mxu0 %v1472
  %1581 = vmatprep.subr.mxu0 0.0
  %1582 = vmatpush1.msra.mxu0 %v1471
  %1583 = vmatprep.subr.mxu0 0.0
  %1584 = vmatpush1.msra.mxu0 %v1470
  %1585 = vmatprep.subr.mxu0 0.0
  %1586 = vmatpush2.msra.mxu0 0.0
  %1587 = vmatprep.subr.mxu0 0.0
  %1588 = vmatpush2.msra.mxu0 0.0
  %1589 = vmatprep.subr.mxu0 0.0
  %1590 = vmatpush2.msra.mxu0 0.0
  %1591 = vmatprep.subr.mxu0 0.0
  %1592 = vmatpush2.msra.mxu0 0.0
  %1593 = vmatprep.subr.mxu0 0.0
  %1594 = vmatpush2.msra.mxu0 0.0
  %1595 = vmatprep.subr.mxu0 0.0
  %1596 = vmatpush2.msra.mxu0 0.0
  %1597 = vmatprep.subr.mxu0 0.0
  %1598 = vmatpush2.msra.mxu0 0.0
  %1599 = vmatprep.subr.mxu0 0.0
  %1600 = vmatpush2.msra.mxu0 0.0
  %1601 = vmatprep.subr.mxu0 0.0
  %1602 = vmatpush2.msra.mxu0 0.0
  %1603 = vmatprep.subr.mxu0 0.0
  %1604 = vmatpush2.msra.mxu0 0.0
  %1605 = vmatprep.subr.mxu0 0.0
  %1606 = vmatpush2.msra.mxu0 0.0
  %1607 = vmatprep.subr.mxu0 0.0
  %1608 = vmatpush2.msra.mxu0 0.0
  %1609 = vmatprep.subr.mxu0 0.0
  %1610 = vmatpush2.msra.mxu0 0.0
  %1611 = vmatprep.subr.mxu0 0.0
  %1612 = vmatpush2.msra.mxu0 0.0
  %1613 = vmatprep.subr.mxu0 0.0
  %1614 = vmatpush2.msra.mxu0 0.0
  %1615 = vmatprep.subr.mxu0 0.0
  %1616 = vmatpush2.msra.mxu0 0.0
  %1617 = vmatprep.mubr.f32.mxu0 0.0
  %1618 = vmatmul.mubr.f32.gmra.mxu0 %v1551
  %v1619 = vpop.f32.mrf.mxu0
  %v1620 = vadd.f32 %v1547, %v1619
  %v1621 = vpop.f32.mrf.mxu0
  %1622 = vdwg.mxu0
  %v1624 = vlaneseq
  %v1625 = vshrl.u32 %v1624, 7
  %v1626 = vsub.s32 0, %v1625
  %v1627 = vrot.slane %v1478, %v1626
  %v1629 = vadd.f32 %v1620, %v1627
  %v1630 = vxor.u32 %v1629, 2147483648
  %v1631 = vmul.f32 %v1630, 1.442695
  %v1632 = vpow.pop %v1631
  %v1633 = vadd.f32 %v1632, 1.0
  %v1634 = vrcp.pop %v1633
  %v1635 = vmul.f32 1.0, %v1634
  %v1636 = vtanh.pop %v1629
  %v1637 = vmul.f32 %v1635, 0.0
  %1639 = vrot.lane.b32.xlu0 %v1636, 64
  %v1640 = vpop.permute.xlu0 %1639
  %v1642 = vmul.f32 %v1635, %v1640
  %1644 = vrot.lane.b32.xlu0 %v1642, 32
  %v1645 = vpop.permute.xlu0 %1644
  %v1647 = vadd.f32 %v1637, %v1645
  %v1648 = vtanh.pop %v1647
  %1650 = vrot.lane.b32.xlu0 %v1648, 64
  %v1651 = vpop.permute.xlu0 %1650
  %v1653 = vmul.f32 %v1635, %v1651
  %v1654 = vld [vmem:[%s400] sm:$0xff]
  %1656 = vrot.lane.b32.xlu0 %v1653, 32
  %v1657 = vpop.permute.xlu0 %1656
  %v1658 = vsel %vm40, %v1657, 0
  %1660 = vmatprep.subr.mxu0 0.0
  %1661 = vmatpush1.msra.mxu0 0.0
  %1662 = vmatprep.subr.mxu0 0.0
  %1663 = vmatpush1.msra.mxu0 0.0
  %1664 = vmatprep.subr.mxu0 0.0
  %1665 = vmatpush1.msra.mxu0 0.0
  %1666 = vmatprep.subr.mxu0 0.0
  %1667 = vmatpush1.msra.mxu0 0.0
  %1668 = vmatprep.subr.mxu0 0.0
  %1669 = vmatpush1.msra.mxu0 0.0
  %1670 = vmatprep.subr.mxu0 0.0
  %1671 = vmatpush1.msra.mxu0 0.0
  %1672 = vmatprep.subr.mxu0 0.0
  %1673 = vmatpush1.msra.mxu0 0.0
  %1674 = vmatprep.subr.mxu0 0.0
  %1675 = vmatpush1.msra.mxu0 0.0
  %1676 = vmatprep.subr.mxu0 0.0
  %1677 = vmatpush1.msra.mxu0 0.0
  %1678 = vmatprep.subr.mxu0 0.0
  %1679 = vmatpush1.msra.mxu0 0.0
  %1680 = vmatprep.subr.mxu0 0.0
  %1681 = vmatpush1.msra.mxu0 0.0
  %1682 = vmatprep.subr.mxu0 0.0
  %1683 = vmatpush1.msra.mxu0 0.0
  %1684 = vmatprep.subr.mxu0 0.0
  %1685 = vmatpush1.msra.mxu0 %v1477
  %1686 = vmatprep.subr.mxu0 0.0
  %1687 = vmatpush1.msra.mxu0 %v1476
  %1688 = vmatprep.subr.mxu0 0.0
  %1689 = vmatpush1.msra.mxu0 %v1475
  %1690 = vmatprep.subr.mxu0 0.0
  %1691 = vmatpush1.msra.mxu0 %v1474
  %1692 = vmatprep.subr.mxu0 0.0
  %1693 = vmatpush2.msra.mxu0 0.0
  %1694 = vmatprep.subr.mxu0 0.0
  %1695 = vmatpush2.msra.mxu0 0.0
  %1696 = vmatprep.subr.mxu0 0.0
  %1697 = vmatpush2.msra.mxu0 0.0
  %1698 = vmatprep.subr.mxu0 0.0
  %1699 = vmatpush2.msra.mxu0 0.0
  %1700 = vmatprep.subr.mxu0 0.0
  %1701 = vmatpush2.msra.mxu0 0.0
  %1702 = vmatprep.subr.mxu0 0.0
  %1703 = vmatpush2.msra.mxu0 0.0
  %1704 = vmatprep.subr.mxu0 0.0
  %1705 = vmatpush2.msra.mxu0 0.0
  %1706 = vmatprep.subr.mxu0 0.0
  %1707 = vmatpush2.msra.mxu0 0.0
  %1708 = vmatprep.subr.mxu0 0.0
  %1709 = vmatpush2.msra.mxu0 0.0
  %1710 = vmatprep.subr.mxu0 0.0
  %1711 = vmatpush2.msra.mxu0 0.0
  %1712 = vmatprep.subr.mxu0 0.0
  %1713 = vmatpush2.msra.mxu0 0.0
  %1714 = vmatprep.subr.mxu0 0.0
  %1715 = vmatpush2.msra.mxu0 0.0
  %1716 = vmatprep.subr.mxu0 0.0
  %1717 = vmatpush2.msra.mxu0 0.0
  %1718 = vmatprep.subr.mxu0 0.0
  %1719 = vmatpush2.msra.mxu0 0.0
  %1720 = vmatprep.subr.mxu0 0.0
  %1721 = vmatpush2.msra.mxu0 0.0
  %1722 = vmatprep.subr.mxu0 0.0
  %1723 = vmatpush2.msra.mxu0 0.0
  %1724 = vmatprep.mubr.f32.mxu0 0.0
  %1725 = vmatmul.mubr.f32.gmra.mxu0 %v1658
  %v1726 = vpop.f32.mrf.mxu0
  %v1727 = vadd.f32 0.0, %v1726
  %v1728 = vpop.f32.mrf.mxu0
  %1729 = vdwg.mxu0
  %v1731 = vsel %vm40, %v1654, 0
  %1733 = vmatprep.subr.mxu0 0.0
  %1734 = vmatpush1.msra.mxu0 0.0
  %1735 = vmatprep.subr.mxu0 0.0
  %1736 = vmatpush1.msra.mxu0 0.0
  %1737 = vmatprep.subr.mxu0 0.0
  %1738 = vmatpush1.msra.mxu0 0.0
  %1739 = vmatprep.subr.mxu0 0.0
  %1740 = vmatpush1.msra.mxu0 0.0
  %1741 = vmatprep.subr.mxu0 0.0
  %1742 = vmatpush1.msra.mxu0 0.0
  %1743 = vmatprep.subr.mxu0 0.0
  %1744 = vmatpush1.msra.mxu0 0.0
  %1745 = vmatprep.subr.mxu0 0.0
  %1746 = vmatpush1.msra.mxu0 0.0
  %1747 = vmatprep.subr.mxu0 0.0
  %1748 = vmatpush1.msra.mxu0 0.0
  %1749 = vmatprep.subr.mxu0 0.0
  %1750 = vmatpush1.msra.mxu0 0.0
  %1751 = vmatprep.subr.mxu0 0.0
  %1752 = vmatpush1.msra.mxu0 0.0
  %1753 = vmatprep.subr.mxu0 0.0
  %1754 = vmatpush1.msra.mxu0 0.0
  %1755 = vmatprep.subr.mxu0 0.0
  %1756 = vmatpush1.msra.mxu0 0.0
  %1757 = vmatprep.subr.mxu0 0.0
  %1758 = vmatpush1.msra.mxu0 %v1473
  %1759 = vmatprep.subr.mxu0 0.0
  %1760 = vmatpush1.msra.mxu0 %v1472
  %1761 = vmatprep.subr.mxu0 0.0
  %1762 = vmatpush1.msra.mxu0 %v1471
  %1763 = vmatprep.subr.mxu0 0.0
  %1764 = vmatpush1.msra.mxu0 %v1470
  %1765 = vmatprep.subr.mxu0 0.0
  %1766 = vmatpush2.msra.mxu0 0.0
  %1767 = vmatprep.subr.mxu0 0.0
  %1768 = vmatpush2.msra.mxu0 0.0
  %1769 = vmatprep.subr.mxu0 0.0
  %1770 = vmatpush2.msra.mxu0 0.0
  %1771 = vmatprep.subr.mxu0 0.0
  %1772 = vmatpush2.msra.mxu0 0.0
  %1773 = vmatprep.subr.mxu0 0.0
  %1774 = vmatpush2.msra.mxu0 0.0
  %1775 = vmatprep.subr.mxu0 0.0
  %1776 = vmatpush2.msra.mxu0 0.0
  %1777 = vmatprep.subr.mxu0 0.0
  %1778 = vmatpush2.msra.mxu0 0.0
  %1779 = vmatprep.subr.mxu0 0.0
  %1780 = vmatpush2.msra.mxu0 0.0
  %1781 = vmatprep.subr.mxu0 0.0
  %1782 = vmatpush2.msra.mxu0 0.0
  %1783 = vmatprep.subr.mxu0 0.0
  %1784 = vmatpush2.msra.mxu0 0.0
  %1785 = vmatprep.subr.mxu0 0.0
  %1786 = vmatpush2.msra.mxu0 0.0
  %1787 = vmatprep.subr.mxu0 0.0
  %1788 = vmatpush2.msra.mxu0 0.0
  %1789 = vmatprep.subr.mxu0 0.0
  %1790 = vmatpush2.msra.mxu0 0.0
  %1791 = vmatprep.subr.mxu0 0.0
  %1792 = vmatpush2.msra.mxu0 0.0
  %1793 = vmatprep.subr.mxu0 0.0
  %1794 = vmatpush2.msra.mxu0 0.0
  %1795 = vmatprep.subr.mxu0 0.0
  %1796 = vmatpush2.msra.mxu0 0.0
  %1797 = vmatprep.mubr.f32.mxu0 0.0
  %1798 = vmatmul.mubr.f32.gmra.mxu0 %v1731
  %v1799 = vpop.f32.mrf.mxu0
  %v1800 = vadd.f32 %v1727, %v1799
  %v1801 = vpop.f32.mrf.mxu0
  %1802 = vdwg.mxu0
  %v1803 = vadd.f32 %v1800, %v1627
  %v1804 = vxor.u32 %v1803, 2147483648
  %v1805 = vmul.f32 %v1804, 1.442695
  %v1806 = vpow.pop %v1805
  %v1807 = vadd.f32 %v1806, 1.0
  %v1808 = vrcp.pop %v1807
  %v1809 = vmul.f32 1.0, %v1808
  %v1810 = vtanh.pop %v1803
  %v1811 = vmul.f32 %v1809, %v1647
  %1813 = vrot.lane.b32.xlu0 %v1810, 64
  %v1814 = vpop.permute.xlu0 %1813
  %v1816 = vmul.f32 %v1809, %v1814
  %1818 = vrot.lane.b32.xlu0 %v1816, 32
  %v1819 = vpop.permute.xlu0 %1818
  %v1821 = vadd.f32 %v1811, %v1819
  %v1822 = vtanh.pop %v1821
  %1824 = vrot.lane.b32.xlu0 %v1822, 64
  %v1825 = vpop.permute.xlu0 %1824
  %v1827 = vmul.f32 %v1809, %v1825
  %v1828 = vld [vmem:[%s578] sm:$0xff]
  %1830 = vrot.lane.b32.xlu0 %v1827, 32
  %v1831 = vpop.permute.xlu0 %1830
  %v1832 = vsel %vm40, %v1831, 0
  %1834 = vmatprep.subr.mxu0 0.0
  %1835 = vmatpush1.msra.mxu0 0.0
  %1836 = vmatprep.subr.mxu0 0.0
  %1837 = vmatpush1.msra.mxu0 0.0
  %1838 = vmatprep.subr.mxu0 0.0
  %1839 = vmatpush1.msra.mxu0 0.0
  %1840 = vmatprep.subr.mxu0 0.0
  %1841 = vmatpush1.msra.mxu0 0.0
  %1842 = vmatprep.subr.mxu0 0.0
  %1843 = vmatpush1.msra.mxu0 0.0
  %1844 = vmatprep.subr.mxu0 0.0
  %1845 = vmatpush1.msra.mxu0 0.0
  %1846 = vmatprep.subr.mxu0 0.0
  %1847 = vmatpush1.msra.mxu0 0.0
  %1848 = vmatprep.subr.mxu0 0.0
  %1849 = vmatpush1.msra.mxu0 0.0
  %1850 = vmatprep.subr.mxu0 0.0
  %1851 = vmatpush1.msra.mxu0 0.0
  %1852 = vmatprep.subr.mxu0 0.0
  %1853 = vmatpush1.msra.mxu0 0.0
  %1854 = vmatprep.subr.mxu0 0.0
  %1855 = vmatpush1.msra.mxu0 0.0
  %1856 = vmatprep.subr.mxu0 0.0
  %1857 = vmatpush1.msra.mxu0 0.0
  %1858 = vmatprep.subr.mxu0 0.0
  %1859 = vmatpush1.msra.mxu0 %v1477
  %1860 = vmatprep.subr.mxu0 0.0
  %1861 = vmatpush1.msra.mxu0 %v1476
  %1862 = vmatprep.subr.mxu0 0.0
  %1863 = vmatpush1.msra.mxu0 %v1475
  %1864 = vmatprep.subr.mxu0 0.0
  %1865 = vmatpush1.msra.mxu0 %v1474
  %1866 = vmatprep.subr.mxu0 0.0
  %1867 = vmatpush2.msra.mxu0 0.0
  %1868 = vmatprep.subr.mxu0 0.0
  %1869 = vmatpush2.msra.mxu0 0.0
  %1870 = vmatprep.subr.mxu0 0.0
  %1871 = vmatpush2.msra.mxu0 0.0
  %1872 = vmatprep.subr.mxu0 0.0
  %1873 = vmatpush2.msra.mxu0 0.0
  %1874 = vmatprep.subr.mxu0 0.0
  %1875 = vmatpush2.msra.mxu0 0.0
  %1876 = vmatprep.subr.mxu0 0.0
  %1877 = vmatpush2.msra.mxu0 0.0
  %1878 = vmatprep.subr.mxu0 0.0
  %1879 = vmatpush2.msra.mxu0 0.0
  %1880 = vmatprep.subr.mxu0 0.0
  %1881 = vmatpush2.msra.mxu0 0.0
  %1882 = vmatprep.subr.mxu0 0.0
  %1883 = vmatpush2.msra.mxu0 0.0
  %1884 = vmatprep.subr.mxu0 0.0
  %1885 = vmatpush2.msra.mxu0 0.0
  %1886 = vmatprep.subr.mxu0 0.0
  %1887 = vmatpush2.msra.mxu0 0.0
  %1888 = vmatprep.subr.mxu0 0.0
  %1889 = vmatpush2.msra.mxu0 0.0
  %1890 = vmatprep.subr.mxu0 0.0
  %1891 = vmatpush2.msra.mxu0 0.0
  %1892 = vmatprep.subr.mxu0 0.0
  %1893 = vmatpush2.msra.mxu0 0.0
  %1894 = vmatprep.subr.mxu0 0.0
  %1895 = vmatpush2.msra.mxu0 0.0
  %1896 = vmatprep.subr.mxu0 0.0
  %1897 = vmatpush2.msra.mxu0 0.0
  %1898 = vmatprep.mubr.f32.mxu0 0.0
  %1899 = vmatmul.mubr.f32.gmra.mxu0 %v1832
  %v1900 = vpop.f32.mrf.mxu0
  %v1901 = vadd.f32 0.0, %v1900
  %v1902 = vpop.f32.mrf.mxu0
  %1903 = vdwg.mxu0
  %v1905 = vsel %vm40, %v1828, 0
  %1907 = vmatprep.subr.mxu0 0.0
  %1908 = vmatpush1.msra.mxu0 0.0
  %1909 = vmatprep.subr.mxu0 0.0
  %1910 = vmatpush1.msra.mxu0 0.0
  %1911 = vmatprep.subr.mxu0 0.0
  %1912 = vmatpush1.msra.mxu0 0.0
  %1913 = vmatprep.subr.mxu0 0.0
  %1914 = vmatpush1.msra.mxu0 0.0
  %1915 = vmatprep.subr.mxu0 0.0
  %1916 = vmatpush1.msra.mxu0 0.0
  %1917 = vmatprep.subr.mxu0 0.0
  %1918 = vmatpush1.msra.mxu0 0.0
  %1919 = vmatprep.subr.mxu0 0.0
  %1920 = vmatpush1.msra.mxu0 0.0
  %1921 = vmatprep.subr.mxu0 0.0
  %1922 = vmatpush1.msra.mxu0 0.0
  %1923 = vmatprep.subr.mxu0 0.0
  %1924 = vmatpush1.msra.mxu0 0.0
  %1925 = vmatprep.subr.mxu0 0.0
  %1926 = vmatpush1.msra.mxu0 0.0
  %1927 = vmatprep.subr.mxu0 0.0
  %1928 = vmatpush1.msra.mxu0 0.0
  %1929 = vmatprep.subr.mxu0 0.0
  %1930 = vmatpush1.msra.mxu0 0.0
  %1931 = vmatprep.subr.mxu0 0.0
  %1932 = vmatpush1.msra.mxu0 %v1473
  %1933 = vmatprep.subr.mxu0 0.0
  %1934 = vmatpush1.msra.mxu0 %v1472
  %1935 = vmatprep.subr.mxu0 0.0
  %1936 = vmatpush1.msra.mxu0 %v1471
  %1937 = vmatprep.subr.mxu0 0.0
  %1938 = vmatpush1.msra.mxu0 %v1470
  %1939 = vmatprep.subr.mxu0 0.0
  %1940 = vmatpush2.msra.mxu0 0.0
  %1941 = vmatprep.subr.mxu0 0.0
  %1942 = vmatpush2.msra.mxu0 0.0
  %1943 = vmatprep.subr.mxu0 0.0
  %1944 = vmatpush2.msra.mxu0 0.0
  %1945 = vmatprep.subr.mxu0 0.0
  %1946 = vmatpush2.msra.mxu0 0.0
  %1947 = vmatprep.subr.mxu0 0.0
  %1948 = vmatpush2.msra.mxu0 0.0
  %1949 = vmatprep.subr.mxu0 0.0
  %1950 = vmatpush2.msra.mxu0 0.0
  %1951 = vmatprep.subr.mxu0 0.0
  %1952 = vmatpush2.msra.mxu0 0.0
  %1953 = vmatprep.subr.mxu0 0.0
  %1954 = vmatpush2.msra.mxu0 0.0
  %1955 = vmatprep.subr.mxu0 0.0
  %1956 = vmatpush2.msra.mxu0 0.0
  %1957 = vmatprep.subr.mxu0 0.0
  %1958 = vmatpush2.msra.mxu0 0.0
  %1959 = vmatprep.subr.mxu0 0.0
  %1960 = vmatpush2.msra.mxu0 0.0
  %1961 = vmatprep.subr.mxu0 0.0
  %1962 = vmatpush2.msra.mxu0 0.0
  %1963 = vmatprep.subr.mxu0 0.0
  %1964 = vmatpush2.msra.mxu0 0.0
  %1965 = vmatprep.subr.mxu0 0.0
  %1966 = vmatpush2.msra.mxu0 0.0
  %1967 = vmatprep.subr.mxu0 0.0
  %1968 = vmatpush2.msra.mxu0 0.0
  %1969 = vmatprep.subr.mxu0 0.0
  %1970 = vmatpush2.msra.mxu0 0.0
  %1971 = vmatprep.mubr.f32.mxu0 0.0
  %1972 = vmatmul.mubr.f32.gmra.mxu0 %v1905
  %v1973 = vpop.f32.mrf.mxu0
  %v1974 = vadd.f32 %v1901, %v1973
  %v1975 = vpop.f32.mrf.mxu0
  %1976 = vdwg.mxu0
  %v1977 = vadd.f32 %v1974, %v1627
  %v1978 = vxor.u32 %v1977, 2147483648
  %v1979 = vmul.f32 %v1978, 1.442695
  %v1980 = vpow.pop %v1979
  %v1981 = vadd.f32 %v1980, 1.0
  %v1982 = vrcp.pop %v1981
  %v1983 = vmul.f32 1.0, %v1982
  %v1984 = vtanh.pop %v1977
  %v1985 = vmul.f32 %v1983, %v1821
  %1987 = vrot.lane.b32.xlu0 %v1984, 64
  %v1988 = vpop.permute.xlu0 %1987
  %v1990 = vmul.f32 %v1983, %v1988
  %1992 = vrot.lane.b32.xlu0 %v1990, 32
  %v1993 = vpop.permute.xlu0 %1992
  %v1995 = vadd.f32 %v1985, %v1993
  %v1996 = vtanh.pop %v1995
  %1998 = vrot.lane.b32.xlu0 %v1996, 64
  %v1999 = vpop.permute.xlu0 %1998
  %v2001 = vmul.f32 %v1983, %v1999
  %v2002 = vld [vmem:[%s756] sm:$0xff]
  %2004 = vrot.lane.b32.xlu0 %v2001, 32
  %v2005 = vpop.permute.xlu0 %2004
  %v2006 = vsel %vm40, %v2005, 0
  %2008 = vmatprep.subr.mxu0 0.0
  %2009 = vmatpush1.msra.mxu0 0.0
  %2010 = vmatprep.subr.mxu0 0.0
  %2011 = vmatpush1.msra.mxu0 0.0
  %2012 = vmatprep.subr.mxu0 0.0
  %2013 = vmatpush1.msra.mxu0 0.0
  %2014 = vmatprep.subr.mxu0 0.0
  %2015 = vmatpush1.msra.mxu0 0.0
  %2016 = vmatprep.subr.mxu0 0.0
  %2017 = vmatpush1.msra.mxu0 0.0
  %2018 = vmatprep.subr.mxu0 0.0
  %2019 = vmatpush1.msra.mxu0 0.0
  %2020 = vmatprep.subr.mxu0 0.0
  %2021 = vmatpush1.msra.mxu0 0.0
  %2022 = vmatprep.subr.mxu0 0.0
  %2023 = vmatpush1.msra.mxu0 0.0
  %2024 = vmatprep.subr.mxu0 0.0
  %2025 = vmatpush1.msra.mxu0 0.0
  %2026 = vmatprep.subr.mxu0 0.0
  %2027 = vmatpush1.msra.mxu0 0.0
  %2028 = vmatprep.subr.mxu0 0.0
  %2029 = vmatpush1.msra.mxu0 0.0
  %2030 = vmatprep.subr.mxu0 0.0
  %2031 = vmatpush1.msra.mxu0 0.0
  %2032 = vmatprep.subr.mxu0 0.0
  %2033 = vmatpush1.msra.mxu0 %v1477
  %2034 = vmatprep.subr.mxu0 0.0
  %2035 = vmatpush1.msra.mxu0 %v1476
  %2036 = vmatprep.subr.mxu0 0.0
  %2037 = vmatpush1.msra.mxu0 %v1475
  %2038 = vmatprep.subr.mxu0 0.0
  %2039 = vmatpush1.msra.mxu0 %v1474
  %2040 = vmatprep.subr.mxu0 0.0
  %2041 = vmatpush2.msra.mxu0 0.0
  %2042 = vmatprep.subr.mxu0 0.0
  %2043 = vmatpush2.msra.mxu0 0.0
  %2044 = vmatprep.subr.mxu0 0.0
  %2045 = vmatpush2.msra.mxu0 0.0
  %2046 = vmatprep.subr.mxu0 0.0
  %2047 = vmatpush2.msra.mxu0 0.0
  %2048 = vmatprep.subr.mxu0 0.0
  %2049 = vmatpush2.msra.mxu0 0.0
  %2050 = vmatprep.subr.mxu0 0.0
  %2051 = vmatpush2.msra.mxu0 0.0
  %2052 = vmatprep.subr.mxu0 0.0
  %2053 = vmatpush2.msra.mxu0 0.0
  %2054 = vmatprep.subr.mxu0 0.0
  %2055 = vmatpush2.msra.mxu0 0.0
  %2056 = vmatprep.subr.mxu0 0.0
  %2057 = vmatpush2.msra.mxu0 0.0
  %2058 = vmatprep.subr.mxu0 0.0
  %2059 = vmatpush2.msra.mxu0 0.0
  %2060 = vmatprep.subr.mxu0 0.0
  %2061 = vmatpush2.msra.mxu0 0.0
  %2062 = vmatprep.subr.mxu0 0.0
  %2063 = vmatpush2.msra.mxu0 0.0
  %2064 = vmatprep.subr.mxu0 0.0
  %2065 = vmatpush2.msra.mxu0 0.0
  %2066 = vmatprep.subr.mxu0 0.0
  %2067 = vmatpush2.msra.mxu0 0.0
  %2068 = vmatprep.subr.mxu0 0.0
  %2069 = vmatpush2.msra.mxu0 0.0
  %2070 = vmatprep.subr.mxu0 0.0
  %2071 = vmatpush2.msra.mxu0 0.0
  %2072 = vmatprep.mubr.f32.mxu0 0.0
  %2073 = vmatmul.mubr.f32.gmra.mxu0 %v2006
  %v2074 = vpop.f32.mrf.mxu0
  %v2075 = vadd.f32 0.0, %v2074
  %v2076 = vpop.f32.mrf.mxu0
  %2077 = vdwg.mxu0
  %v2079 = vsel %vm40, %v2002, 0
  %2081 = vmatprep.subr.mxu0 0.0
  %2082 = vmatpush1.msra.mxu0 0.0
  %2083 = vmatprep.subr.mxu0 0.0
  %2084 = vmatpush1.msra.mxu0 0.0
  %2085 = vmatprep.subr.mxu0 0.0
  %2086 = vmatpush1.msra.mxu0 0.0
  %2087 = vmatprep.subr.mxu0 0.0
  %2088 = vmatpush1.msra.mxu0 0.0
  %2089 = vmatprep.subr.mxu0 0.0
  %2090 = vmatpush1.msra.mxu0 0.0
  %2091 = vmatprep.subr.mxu0 0.0
  %2092 = vmatpush1.msra.mxu0 0.0
  %2093 = vmatprep.subr.mxu0 0.0
  %2094 = vmatpush1.msra.mxu0 0.0
  %2095 = vmatprep.subr.mxu0 0.0
  %2096 = vmatpush1.msra.mxu0 0.0
  %2097 = vmatprep.subr.mxu0 0.0
  %2098 = vmatpush1.msra.mxu0 0.0
  %2099 = vmatprep.subr.mxu0 0.0
  %2100 = vmatpush1.msra.mxu0 0.0
  %2101 = vmatprep.subr.mxu0 0.0
  %2102 = vmatpush1.msra.mxu0 0.0
  %2103 = vmatprep.subr.mxu0 0.0
  %2104 = vmatpush1.msra.mxu0 0.0
  %2105 = vmatprep.subr.mxu0 0.0
  %2106 = vmatpush1.msra.mxu0 %v1473
  %2107 = vmatprep.subr.mxu0 0.0
  %2108 = vmatpush1.msra.mxu0 %v1472
  %2109 = vmatprep.subr.mxu0 0.0
  %2110 = vmatpush1.msra.mxu0 %v1471
  %2111 = vmatprep.subr.mxu0 0.0
  %2112 = vmatpush1.msra.mxu0 %v1470
  %2113 = vmatprep.subr.mxu0 0.0
  %2114 = vmatpush2.msra.mxu0 0.0
  %2115 = vmatprep.subr.mxu0 0.0
  %2116 = vmatpush2.msra.mxu0 0.0
  %2117 = vmatprep.subr.mxu0 0.0
  %2118 = vmatpush2.msra.mxu0 0.0
  %2119 = vmatprep.subr.mxu0 0.0
  %2120 = vmatpush2.msra.mxu0 0.0
  %2121 = vmatprep.subr.mxu0 0.0
  %2122 = vmatpush2.msra.mxu0 0.0
  %2123 = vmatprep.subr.mxu0 0.0
  %2124 = vmatpush2.msra.mxu0 0.0
  %2125 = vmatprep.subr.mxu0 0.0
  %2126 = vmatpush2.msra.mxu0 0.0
  %2127 = vmatprep.subr.mxu0 0.0
  %2128 = vmatpush2.msra.mxu0 0.0
  %2129 = vmatprep.subr.mxu0 0.0
  %2130 = vmatpush2.msra.mxu0 0.0
  %2131 = vmatprep.subr.mxu0 0.0
  %2132 = vmatpush2.msra.mxu0 0.0
  %2133 = vmatprep.subr.mxu0 0.0
  %2134 = vmatpush2.msra.mxu0 0.0
  %2135 = vmatprep.subr.mxu0 0.0
  %2136 = vmatpush2.msra.mxu0 0.0
  %2137 = vmatprep.subr.mxu0 0.0
  %2138 = vmatpush2.msra.mxu0 0.0
  %2139 = vmatprep.subr.mxu0 0.0
  %2140 = vmatpush2.msra.mxu0 0.0
  %2141 = vmatprep.subr.mxu0 0.0
  %2142 = vmatpush2.msra.mxu0 0.0
  %2143 = vmatprep.subr.mxu0 0.0
  %2144 = vmatpush2.msra.mxu0 0.0
  %2145 = vmatprep.mubr.f32.mxu0 0.0
  %2146 = vmatmul.mubr.f32.gmra.mxu0 %v2079
  %v2147 = vpop.f32.mrf.mxu0
  %v2148 = vadd.f32 %v2075, %v2147
  %v2149 = vpop.f32.mrf.mxu0
  %2150 = vdwg.mxu0
  %v2151 = vadd.f32 %v2148, %v1627
  %v2152 = vxor.u32 %v2151, 2147483648
  %v2153 = vmul.f32 %v2152, 1.442695
  %v2154 = vpow.pop %v2153
  %v2155 = vadd.f32 %v2154, 1.0
  %v2156 = vrcp.pop %v2155
  %v2157 = vmul.f32 1.0, %v2156
  %v2158 = vtanh.pop %v2151
  %v2159 = vmul.f32 %v2157, %v1995
  %2161 = vrot.lane.b32.xlu0 %v2158, 64
  %v2162 = vpop.permute.xlu0 %2161
  %v2164 = vmul.f32 %v2157, %v2162
  %2166 = vrot.lane.b32.xlu0 %v2164, 32
  %v2167 = vpop.permute.xlu0 %2166
  %v2169 = vadd.f32 %v2159, %v2167
  %v2170 = vtanh.pop %v2169
  %2172 = vrot.lane.b32.xlu0 %v2170, 64
  %v2173 = vpop.permute.xlu0 %2172
  %v2175 = vmul.f32 %v2157, %v2173
  %v2176 = vld [vmem:[%s934] sm:$0xff]
  %2178 = vrot.lane.b32.xlu0 %v2175, 32
  %v2179 = vpop.permute.xlu0 %2178
  %v2180 = vsel %vm40, %v2179, 0
  %2182 = vmatprep.subr.mxu0 0.0
  %2183 = vmatpush1.msra.mxu0 0.0
  %2184 = vmatprep.subr.mxu0 0.0
  %2185 = vmatpush1.msra.mxu0 0.0
  %2186 = vmatprep.subr.mxu0 0.0
  %2187 = vmatpush1.msra.mxu0 0.0
  %2188 = vmatprep.subr.mxu0 0.0
  %2189 = vmatpush1.msra.mxu0 0.0
  %2190 = vmatprep.subr.mxu0 0.0
  %2191 = vmatpush1.msra.mxu0 0.0
  %2192 = vmatprep.subr.mxu0 0.0
  %2193 = vmatpush1.msra.mxu0 0.0
  %2194 = vmatprep.subr.mxu0 0.0
  %2195 = vmatpush1.msra.mxu0 0.0
  %2196 = vmatprep.subr.mxu0 0.0
  %2197 = vmatpush1.msra.mxu0 0.0
  %2198 = vmatprep.subr.mxu0 0.0
  %2199 = vmatpush1.msra.mxu0 0.0
  %2200 = vmatprep.subr.mxu0 0.0
  %2201 = vmatpush1.msra.mxu0 0.0
  %2202 = vmatprep.subr.mxu0 0.0
  %2203 = vmatpush1.msra.mxu0 0.0
  %2204 = vmatprep.subr.mxu0 0.0
  %2205 = vmatpush1.msra.mxu0 0.0
  %2206 = vmatprep.subr.mxu0 0.0
  %2207 = vmatpush1.msra.mxu0 %v1477
  %2208 = vmatprep.subr.mxu0 0.0
  %2209 = vmatpush1.msra.mxu0 %v1476
  %2210 = vmatprep.subr.mxu0 0.0
  %2211 = vmatpush1.msra.mxu0 %v1475
  %2212 = vmatprep.subr.mxu0 0.0
  %2213 = vmatpush1.msra.mxu0 %v1474
  %2214 = vmatprep.subr.mxu0 0.0
  %2215 = vmatpush2.msra.mxu0 0.0
  %2216 = vmatprep.subr.mxu0 0.0
  %2217 = vmatpush2.msra.mxu0 0.0
  %2218 = vmatprep.subr.mxu0 0.0
  %2219 = vmatpush2.msra.mxu0 0.0
  %2220 = vmatprep.subr.mxu0 0.0
  %2221 = vmatpush2.msra.mxu0 0.0
  %2222 = vmatprep.subr.mxu0 0.0
  %2223 = vmatpush2.msra.mxu0 0.0
  %2224 = vmatprep.subr.mxu0 0.0
  %2225 = vmatpush2.msra.mxu0 0.0
  %2226 = vmatprep.subr.mxu0 0.0
  %2227 = vmatpush2.msra.mxu0 0.0
  %2228 = vmatprep.subr.mxu0 0.0
  %2229 = vmatpush2.msra.mxu0 0.0
  %2230 = vmatprep.subr.mxu0 0.0
  %2231 = vmatpush2.msra.mxu0 0.0
  %2232 = vmatprep.subr.mxu0 0.0
  %2233 = vmatpush2.msra.mxu0 0.0
  %2234 = vmatprep.subr.mxu0 0.0
  %2235 = vmatpush2.msra.mxu0 0.0
  %2236 = vmatprep.subr.mxu0 0.0
  %2237 = vmatpush2.msra.mxu0 0.0
  %2238 = vmatprep.subr.mxu0 0.0
  %2239 = vmatpush2.msra.mxu0 0.0
  %2240 = vmatprep.subr.mxu0 0.0
  %2241 = vmatpush2.msra.mxu0 0.0
  %2242 = vmatprep.subr.mxu0 0.0
  %2243 = vmatpush2.msra.mxu0 0.0
  %2244 = vmatprep.subr.mxu0 0.0
  %2245 = vmatpush2.msra.mxu0 0.0
  %2246 = vmatprep.mubr.f32.mxu0 0.0
  %2247 = vmatmul.mubr.f32.gmra.mxu0 %v2180
  %v2248 = vpop.f32.mrf.mxu0
  %v2249 = vadd.f32 0.0, %v2248
  %v2250 = vpop.f32.mrf.mxu0
  %2251 = vdwg.mxu0
  %v2253 = vsel %vm40, %v2176, 0
  %2255 = vmatprep.subr.mxu0 0.0
  %2256 = vmatpush1.msra.mxu0 0.0
  %2257 = vmatprep.subr.mxu0 0.0
  %2258 = vmatpush1.msra.mxu0 0.0
  %2259 = vmatprep.subr.mxu0 0.0
  %2260 = vmatpush1.msra.mxu0 0.0
  %2261 = vmatprep.subr.mxu0 0.0
  %2262 = vmatpush1.msra.mxu0 0.0
  %2263 = vmatprep.subr.mxu0 0.0
  %2264 = vmatpush1.msra.mxu0 0.0
  %2265 = vmatprep.subr.mxu0 0.0
  %2266 = vmatpush1.msra.mxu0 0.0
  %2267 = vmatprep.subr.mxu0 0.0
  %2268 = vmatpush1.msra.mxu0 0.0
  %2269 = vmatprep.subr.mxu0 0.0
  %2270 = vmatpush1.msra.mxu0 0.0
  %2271 = vmatprep.subr.mxu0 0.0
  %2272 = vmatpush1.msra.mxu0 0.0
  %2273 = vmatprep.subr.mxu0 0.0
  %2274 = vmatpush1.msra.mxu0 0.0
  %2275 = vmatprep.subr.mxu0 0.0
  %2276 = vmatpush1.msra.mxu0 0.0
  %2277 = vmatprep.subr.mxu0 0.0
  %2278 = vmatpush1.msra.mxu0 0.0
  %2279 = vmatprep.subr.mxu0 0.0
  %2280 = vmatpush1.msra.mxu0 %v1473
  %2281 = vmatprep.subr.mxu0 0.0
  %2282 = vmatpush1.msra.mxu0 %v1472
  %2283 = vmatprep.subr.mxu0 0.0
  %2284 = vmatpush1.msra.mxu0 %v1471
  %2285 = vmatprep.subr.mxu0 0.0
  %2286 = vmatpush1.msra.mxu0 %v1470
  %2287 = vmatprep.subr.mxu0 0.0
  %2288 = vmatpush2.msra.mxu0 0.0
  %2289 = vmatprep.subr.mxu0 0.0
  %2290 = vmatpush2.msra.mxu0 0.0
  %2291 = vmatprep.subr.mxu0 0.0
  %2292 = vmatpush2.msra.mxu0 0.0
  %2293 = vmatprep.subr.mxu0 0.0
  %2294 = vmatpush2.msra.mxu0 0.0
  %2295 = vmatprep.subr.mxu0 0.0
  %2296 = vmatpush2.msra.mxu0 0.0
  %2297 = vmatprep.subr.mxu0 0.0
  %2298 = vmatpush2.msra.mxu0 0.0
  %2299 = vmatprep.subr.mxu0 0.0
  %2300 = vmatpush2.msra.mxu0 0.0
  %2301 = vmatprep.subr.mxu0 0.0
  %2302 = vmatpush2.msra.mxu0 0.0
  %2303 = vmatprep.subr.mxu0 0.0
  %2304 = vmatpush2.msra.mxu0 0.0
  %2305 = vmatprep.subr.mxu0 0.0
  %2306 = vmatpush2.msra.mxu0 0.0
  %2307 = vmatprep.subr.mxu0 0.0
  %2308 = vmatpush2.msra.mxu0 0.0
  %2309 = vmatprep.subr.mxu0 0.0
  %2310 = vmatpush2.msra.mxu0 0.0
  %2311 = vmatprep.subr.mxu0 0.0
  %2312 = vmatpush2.msra.mxu0 0.0
  %2313 = vmatprep.subr.mxu0 0.0
  %2314 = vmatpush2.msra.mxu0 0.0
  %2315 = vmatprep.subr.mxu0 0.0
  %2316 = vmatpush2.msra.mxu0 0.0
  %2317 = vmatprep.subr.mxu0 0.0
  %2318 = vmatpush2.msra.mxu0 0.0
  %2319 = vmatprep.mubr.f32.mxu0 0.0
  %2320 = vmatmul.mubr.f32.gmra.mxu0 %v2253
  %v2321 = vpop.f32.mrf.mxu0
  %v2322 = vadd.f32 %v2249, %v2321
  %v2323 = vpop.f32.mrf.mxu0
  %2324 = vdwg.mxu0
  %v2325 = vadd.f32 %v2322, %v1627
  %v2326 = vxor.u32 %v2325, 2147483648
  %v2327 = vmul.f32 %v2326, 1.442695
  %v2328 = vpow.pop %v2327
  %v2329 = vadd.f32 %v2328, 1.0
  %v2330 = vrcp.pop %v2329
  %v2331 = vmul.f32 1.0, %v2330
  %v2332 = vtanh.pop %v2325
  %v2333 = vmul.f32 %v2331, %v2169
  %2335 = vrot.lane.b32.xlu0 %v2332, 64
  %v2336 = vpop.permute.xlu0 %2335
  %v2338 = vmul.f32 %v2331, %v2336
  %2340 = vrot.lane.b32.xlu0 %v2338, 32
  %v2341 = vpop.permute.xlu0 %2340
  %v2343 = vadd.f32 %v2333, %v2341
  %v2344 = vtanh.pop %v2343
  %2346 = vrot.lane.b32.xlu0 %v2344, 64
  %v2347 = vpop.permute.xlu0 %2346
  %v2349 = vmul.f32 %v2331, %v2347
  %v2350 = vld [vmem:[%s1112] sm:$0xff]
  %2352 = vrot.lane.b32.xlu0 %v2349, 32
  %v2353 = vpop.permute.xlu0 %2352
  %v2354 = vsel %vm40, %v2353, 0
  %2356 = vmatprep.subr.mxu0 0.0
  %2357 = vmatpush1.msra.mxu0 0.0
  %2358 = vmatprep.subr.mxu0 0.0
  %2359 = vmatpush1.msra.mxu0 0.0
  %2360 = vmatprep.subr.mxu0 0.0
  %2361 = vmatpush1.msra.mxu0 0.0
  %2362 = vmatprep.subr.mxu0 0.0
  %2363 = vmatpush1.msra.mxu0 0.0
  %2364 = vmatprep.subr.mxu0 0.0
  %2365 = vmatpush1.msra.mxu0 0.0
  %2366 = vmatprep.subr.mxu0 0.0
  %2367 = vmatpush1.msra.mxu0 0.0
  %2368 = vmatprep.subr.mxu0 0.0
  %2369 = vmatpush1.msra.mxu0 0.0
  %2370 = vmatprep.subr.mxu0 0.0
  %2371 = vmatpush1.msra.mxu0 0.0
  %2372 = vmatprep.subr.mxu0 0.0
  %2373 = vmatpush1.msra.mxu0 0.0
  %2374 = vmatprep.subr.mxu0 0.0
  %2375 = vmatpush1.msra.mxu0 0.0
  %2376 = vmatprep.subr.mxu0 0.0
  %2377 = vmatpush1.msra.mxu0 0.0
  %2378 = vmatprep.subr.mxu0 0.0
  %2379 = vmatpush1.msra.mxu0 0.0
  %2380 = vmatprep.subr.mxu0 0.0
  %2381 = vmatpush1.msra.mxu0 %v1477
  %2382 = vmatprep.subr.mxu0 0.0
  %2383 = vmatpush1.msra.mxu0 %v1476
  %2384 = vmatprep.subr.mxu0 0.0
  %2385 = vmatpush1.msra.mxu0 %v1475
  %2386 = vmatprep.subr.mxu0 0.0
  %2387 = vmatpush1.msra.mxu0 %v1474
  %2388 = vmatprep.subr.mxu0 0.0
  %2389 = vmatpush2.msra.mxu0 0.0
  %2390 = vmatprep.subr.mxu0 0.0
  %2391 = vmatpush2.msra.mxu0 0.0
  %2392 = vmatprep.subr.mxu0 0.0
  %2393 = vmatpush2.msra.mxu0 0.0
  %2394 = vmatprep.subr.mxu0 0.0
  %2395 = vmatpush2.msra.mxu0 0.0
  %2396 = vmatprep.subr.mxu0 0.0
  %2397 = vmatpush2.msra.mxu0 0.0
  %2398 = vmatprep.subr.mxu0 0.0
  %2399 = vmatpush2.msra.mxu0 0.0
  %2400 = vmatprep.subr.mxu0 0.0
  %2401 = vmatpush2.msra.mxu0 0.0
  %2402 = vmatprep.subr.mxu0 0.0
  %2403 = vmatpush2.msra.mxu0 0.0
  %2404 = vmatprep.subr.mxu0 0.0
  %2405 = vmatpush2.msra.mxu0 0.0
  %2406 = vmatprep.subr.mxu0 0.0
  %2407 = vmatpush2.msra.mxu0 0.0
  %2408 = vmatprep.subr.mxu0 0.0
  %2409 = vmatpush2.msra.mxu0 0.0
  %2410 = vmatprep.subr.mxu0 0.0
  %2411 = vmatpush2.msra.mxu0 0.0
  %2412 = vmatprep.subr.mxu0 0.0
  %2413 = vmatpush2.msra.mxu0 0.0
  %2414 = vmatprep.subr.mxu0 0.0
  %2415 = vmatpush2.msra.mxu0 0.0
  %2416 = vmatprep.subr.mxu0 0.0
  %2417 = vmatpush2.msra.mxu0 0.0
  %2418 = vmatprep.subr.mxu0 0.0
  %2419 = vmatpush2.msra.mxu0 0.0
  %2420 = vmatprep.mubr.f32.mxu0 0.0
  %2421 = vmatmul.mubr.f32.gmra.mxu0 %v2354
  %v2422 = vpop.f32.mrf.mxu0
  %v2423 = vadd.f32 0.0, %v2422
  %v2424 = vpop.f32.mrf.mxu0
  %2425 = vdwg.mxu0
  %v2427 = vsel %vm40, %v2350, 0
  %2429 = vmatprep.subr.mxu0 0.0
  %2430 = vmatpush1.msra.mxu0 0.0
  %2431 = vmatprep.subr.mxu0 0.0
  %2432 = vmatpush1.msra.mxu0 0.0
  %2433 = vmatprep.subr.mxu0 0.0
  %2434 = vmatpush1.msra.mxu0 0.0
  %2435 = vmatprep.subr.mxu0 0.0
  %2436 = vmatpush1.msra.mxu0 0.0
  %2437 = vmatprep.subr.mxu0 0.0
  %2438 = vmatpush1.msra.mxu0 0.0
  %2439 = vmatprep.subr.mxu0 0.0
  %2440 = vmatpush1.msra.mxu0 0.0
  %2441 = vmatprep.subr.mxu0 0.0
  %2442 = vmatpush1.msra.mxu0 0.0
  %2443 = vmatprep.subr.mxu0 0.0
  %2444 = vmatpush1.msra.mxu0 0.0
  %2445 = vmatprep.subr.mxu0 0.0
  %2446 = vmatpush1.msra.mxu0 0.0
  %2447 = vmatprep.subr.mxu0 0.0
  %2448 = vmatpush1.msra.mxu0 0.0
  %2449 = vmatprep.subr.mxu0 0.0
  %2450 = vmatpush1.msra.mxu0 0.0
  %2451 = vmatprep.subr.mxu0 0.0
  %2452 = vmatpush1.msra.mxu0 0.0
  %2453 = vmatprep.subr.mxu0 0.0
  %2454 = vmatpush1.msra.mxu0 %v1473
  %2455 = vmatprep.subr.mxu0 0.0
  %2456 = vmatpush1.msra.mxu0 %v1472
  %2457 = vmatprep.subr.mxu0 0.0
  %2458 = vmatpush1.msra.mxu0 %v1471
  %2459 = vmatprep.subr.mxu0 0.0
  %2460 = vmatpush1.msra.mxu0 %v1470
  %2461 = vmatprep.subr.mxu0 0.0
  %2462 = vmatpush2.msra.mxu0 0.0
  %2463 = vmatprep.subr.mxu0 0.0
  %2464 = vmatpush2.msra.mxu0 0.0
  %2465 = vmatprep.subr.mxu0 0.0
  %2466 = vmatpush2.msra.mxu0 0.0
  %2467 = vmatprep.subr.mxu0 0.0
  %2468 = vmatpush2.msra.mxu0 0.0
  %2469 = vmatprep.subr.mxu0 0.0
  %2470 = vmatpush2.msra.mxu0 0.0
  %2471 = vmatprep.subr.mxu0 0.0
  %2472 = vmatpush2.msra.mxu0 0.0
  %2473 = vmatprep.subr.mxu0 0.0
  %2474 = vmatpush2.msra.mxu0 0.0
  %2475 = vmatprep.subr.mxu0 0.0
  %2476 = vmatpush2.msra.mxu0 0.0
  %2477 = vmatprep.subr.mxu0 0.0
  %2478 = vmatpush2.msra.mxu0 0.0
  %2479 = vmatprep.subr.mxu0 0.0
  %2480 = vmatpush2.msra.mxu0 0.0
  %2481 = vmatprep.subr.mxu0 0.0
  %2482 = vmatpush2.msra.mxu0 0.0
  %2483 = vmatprep.subr.mxu0 0.0
  %2484 = vmatpush2.msra.mxu0 0.0
  %2485 = vmatprep.subr.mxu0 0.0
  %2486 = vmatpush2.msra.mxu0 0.0
  %2487 = vmatprep.subr.mxu0 0.0
  %2488 = vmatpush2.msra.mxu0 0.0
  %2489 = vmatprep.subr.mxu0 0.0
  %2490 = vmatpush2.msra.mxu0 0.0
  %2491 = vmatprep.subr.mxu0 0.0
  %2492 = vmatpush2.msra.mxu0 0.0
  %2493 = vmatprep.mubr.f32.mxu0 0.0
  %2494 = vmatmul.mubr.f32.gmra.mxu0 %v2427
  %v2495 = vpop.f32.mrf.mxu0
  %v2496 = vadd.f32 %v2423, %v2495
  %v2497 = vpop.f32.mrf.mxu0
  %2498 = vdwg.mxu0
  %v2499 = vadd.f32 %v2496, %v1627
  %v2500 = vxor.u32 %v2499, 2147483648
  %v2501 = vmul.f32 %v2500, 1.442695
  %v2502 = vpow.pop %v2501
  %v2503 = vadd.f32 %v2502, 1.0
  %v2504 = vrcp.pop %v2503
  %v2505 = vmul.f32 1.0, %v2504
  %v2506 = vtanh.pop %v2499
  %v2507 = vmul.f32 %v2505, %v2343
  %2509 = vrot.lane.b32.xlu0 %v2506, 64
  %v2510 = vpop.permute.xlu0 %2509
  %v2512 = vmul.f32 %v2505, %v2510
  %2514 = vrot.lane.b32.xlu0 %v2512, 32
  %v2515 = vpop.permute.xlu0 %2514
  %v2517 = vadd.f32 %v2507, %v2515
  %v2518 = vtanh.pop %v2517
  %2520 = vrot.lane.b32.xlu0 %v2518, 64
  %v2521 = vpop.permute.xlu0 %2520
  %v2523 = vmul.f32 %v2505, %v2521
  %v2524 = vld [vmem:[%s1290] sm:$0xff]
  %2526 = vrot.lane.b32.xlu0 %v2523, 32
  %v2527 = vpop.permute.xlu0 %2526
  %v2528 = vsel %vm40, %v2527, 0
  %2530 = vmatprep.subr.mxu0 0.0
  %2531 = vmatpush1.msra.mxu0 0.0
  %2532 = vmatprep.subr.mxu0 0.0
  %2533 = vmatpush1.msra.mxu0 0.0
  %2534 = vmatprep.subr.mxu0 0.0
  %2535 = vmatpush1.msra.mxu0 0.0
  %2536 = vmatprep.subr.mxu0 0.0
  %2537 = vmatpush1.msra.mxu0 0.0
  %2538 = vmatprep.subr.mxu0 0.0
  %2539 = vmatpush1.msra.mxu0 0.0
  %2540 = vmatprep.subr.mxu0 0.0
  %2541 = vmatpush1.msra.mxu0 0.0
  %2542 = vmatprep.subr.mxu0 0.0
  %2543 = vmatpush1.msra.mxu0 0.0
  %2544 = vmatprep.subr.mxu0 0.0
  %2545 = vmatpush1.msra.mxu0 0.0
  %2546 = vmatprep.subr.mxu0 0.0
  %2547 = vmatpush1.msra.mxu0 0.0
  %2548 = vmatprep.subr.mxu0 0.0
  %2549 = vmatpush1.msra.mxu0 0.0
  %2550 = vmatprep.subr.mxu0 0.0
  %2551 = vmatpush1.msra.mxu0 0.0
  %2552 = vmatprep.subr.mxu0 0.0
  %2553 = vmatpush1.msra.mxu0 0.0
  %2554 = vmatprep.subr.mxu0 0.0
  %2555 = vmatpush1.msra.mxu0 %v1477
  %2556 = vmatprep.subr.mxu0 0.0
  %2557 = vmatpush1.msra.mxu0 %v1476
  %2558 = vmatprep.subr.mxu0 0.0
  %2559 = vmatpush1.msra.mxu0 %v1475
  %2560 = vmatprep.subr.mxu0 0.0
  %2561 = vmatpush1.msra.mxu0 %v1474
  %2562 = vmatprep.subr.mxu0 0.0
  %2563 = vmatpush2.msra.mxu0 0.0
  %2564 = vmatprep.subr.mxu0 0.0
  %2565 = vmatpush2.msra.mxu0 0.0
  %2566 = vmatprep.subr.mxu0 0.0
  %2567 = vmatpush2.msra.mxu0 0.0
  %2568 = vmatprep.subr.mxu0 0.0
  %2569 = vmatpush2.msra.mxu0 0.0
  %2570 = vmatprep.subr.mxu0 0.0
  %2571 = vmatpush2.msra.mxu0 0.0
  %2572 = vmatprep.subr.mxu0 0.0
  %2573 = vmatpush2.msra.mxu0 0.0
  %2574 = vmatprep.subr.mxu0 0.0
  %2575 = vmatpush2.msra.mxu0 0.0
  %2576 = vmatprep.subr.mxu0 0.0
  %2577 = vmatpush2.msra.mxu0 0.0
  %2578 = vmatprep.subr.mxu0 0.0
  %2579 = vmatpush2.msra.mxu0 0.0
  %2580 = vmatprep.subr.mxu0 0.0
  %2581 = vmatpush2.msra.mxu0 0.0
  %2582 = vmatprep.subr.mxu0 0.0
  %2583 = vmatpush2.msra.mxu0 0.0
  %2584 = vmatprep.subr.mxu0 0.0
  %2585 = vmatpush2.msra.mxu0 0.0
  %2586 = vmatprep.subr.mxu0 0.0
  %2587 = vmatpush2.msra.mxu0 0.0
  %2588 = vmatprep.subr.mxu0 0.0
  %2589 = vmatpush2.msra.mxu0 0.0
  %2590 = vmatprep.subr.mxu0 0.0
  %2591 = vmatpush2.msra.mxu0 0.0
  %2592 = vmatprep.subr.mxu0 0.0
  %2593 = vmatpush2.msra.mxu0 0.0
  %2594 = vmatprep.mubr.f32.mxu0 0.0
  %2595 = vmatmul.mubr.f32.gmra.mxu0 %v2528
  %v2596 = vpop.f32.mrf.mxu0
  %v2597 = vadd.f32 0.0, %v2596
  %v2598 = vpop.f32.mrf.mxu0
  %2599 = vdwg.mxu0
  %v2601 = vsel %vm40, %v2524, 0
  %2603 = vmatprep.subr.mxu0 0.0
  %2604 = vmatpush1.msra.mxu0 0.0
  %2605 = vmatprep.subr.mxu0 0.0
  %2606 = vmatpush1.msra.mxu0 0.0
  %2607 = vmatprep.subr.mxu0 0.0
  %2608 = vmatpush1.msra.mxu0 0.0
  %2609 = vmatprep.subr.mxu0 0.0
  %2610 = vmatpush1.msra.mxu0 0.0
  %2611 = vmatprep.subr.mxu0 0.0
  %2612 = vmatpush1.msra.mxu0 0.0
  %2613 = vmatprep.subr.mxu0 0.0
  %2614 = vmatpush1.msra.mxu0 0.0
  %2615 = vmatprep.subr.mxu0 0.0
  %2616 = vmatpush1.msra.mxu0 0.0
  %2617 = vmatprep.subr.mxu0 0.0
  %2618 = vmatpush1.msra.mxu0 0.0
  %2619 = vmatprep.subr.mxu0 0.0
  %2620 = vmatpush1.msra.mxu0 0.0
  %2621 = vmatprep.subr.mxu0 0.0
  %2622 = vmatpush1.msra.mxu0 0.0
  %2623 = vmatprep.subr.mxu0 0.0
  %2624 = vmatpush1.msra.mxu0 0.0
  %2625 = vmatprep.subr.mxu0 0.0
  %2626 = vmatpush1.msra.mxu0 0.0
  %2627 = vmatprep.subr.mxu0 0.0
  %2628 = vmatpush1.msra.mxu0 %v1473
  %2629 = vmatprep.subr.mxu0 0.0
  %2630 = vmatpush1.msra.mxu0 %v1472
  %2631 = vmatprep.subr.mxu0 0.0
  %2632 = vmatpush1.msra.mxu0 %v1471
  %2633 = vmatprep.subr.mxu0 0.0
  %2634 = vmatpush1.msra.mxu0 %v1470
  %2635 = vmatprep.subr.mxu0 0.0
  %2636 = vmatpush2.msra.mxu0 0.0
  %2637 = vmatprep.subr.mxu0 0.0
  %2638 = vmatpush2.msra.mxu0 0.0
  %2639 = vmatprep.subr.mxu0 0.0
  %2640 = vmatpush2.msra.mxu0 0.0
  %2641 = vmatprep.subr.mxu0 0.0
  %2642 = vmatpush2.msra.mxu0 0.0
  %2643 = vmatprep.subr.mxu0 0.0
  %2644 = vmatpush2.msra.mxu0 0.0
  %2645 = vmatprep.subr.mxu0 0.0
  %2646 = vmatpush2.msra.mxu0 0.0
  %2647 = vmatprep.subr.mxu0 0.0
  %2648 = vmatpush2.msra.mxu0 0.0
  %2649 = vmatprep.subr.mxu0 0.0
  %2650 = vmatpush2.msra.mxu0 0.0
  %2651 = vmatprep.subr.mxu0 0.0
  %2652 = vmatpush2.msra.mxu0 0.0
  %2653 = vmatprep.subr.mxu0 0.0
  %2654 = vmatpush2.msra.mxu0 0.0
  %2655 = vmatprep.subr.mxu0 0.0
  %2656 = vmatpush2.msra.mxu0 0.0
  %2657 = vmatprep.subr.mxu0 0.0
  %2658 = vmatpush2.msra.mxu0 0.0
  %2659 = vmatprep.subr.mxu0 0.0
  %2660 = vmatpush2.msra.mxu0 0.0
  %2661 = vmatprep.subr.mxu0 0.0
  %2662 = vmatpush2.msra.mxu0 0.0
  %2663 = vmatprep.subr.mxu0 0.0
  %2664 = vmatpush2.msra.mxu0 0.0
  %2665 = vmatprep.subr.mxu0 0.0
  %2666 = vmatpush2.msra.mxu0 0.0
  %2667 = vmatprep.mubr.f32.mxu0 0.0
  %2668 = vmatmul.mubr.f32.gmra.mxu0 %v2601
  %v2669 = vpop.f32.mrf.mxu0
  %v2670 = vadd.f32 %v2597, %v2669
  %v2671 = vpop.f32.mrf.mxu0
  %2672 = vdwg.mxu0
  %v2673 = vadd.f32 %v2670, %v1627
  %v2674 = vxor.u32 %v2673, 2147483648
  %v2675 = vmul.f32 %v2674, 1.442695
  %v2676 = vpow.pop %v2675
  %v2677 = vadd.f32 %v2676, 1.0
  %v2678 = vrcp.pop %v2677
  %v2679 = vmul.f32 1.0, %v2678
  %v2680 = vtanh.pop %v2673
  %v2681 = vmul.f32 %v2679, %v2517
  %2683 = vrot.lane.b32.xlu0 %v2680, 64
  %v2684 = vpop.permute.xlu0 %2683
  %v2686 = vmul.f32 %v2679, %v2684
  %2688 = vrot.lane.b32.xlu0 %v2686, 32
  %v2689 = vpop.permute.xlu0 %2688
  %v2691 = vadd.f32 %v2681, %v2689
  %v2692 = vtanh.pop %v2691
  %2694 = vrot.lane.b32.xlu0 %v2692, 64
  %v2695 = vpop.permute.xlu0 %2694
  %v2697 = vmul.f32 %v2679, %v2695
  %v2698 = vld [vmem:[%s1468] sm:$0xff]
  %2700 = vrot.lane.b32.xlu0 %v2697, 32
  %v2701 = vpop.permute.xlu0 %2700
  %v2702 = vsel %vm40, %v2701, 0
  %2704 = vmatprep.subr.mxu0 0.0
  %2705 = vmatpush1.msra.mxu0 0.0
  %2706 = vmatprep.subr.mxu0 0.0
  %2707 = vmatpush1.msra.mxu0 0.0
  %2708 = vmatprep.subr.mxu0 0.0
  %2709 = vmatpush1.msra.mxu0 0.0
  %2710 = vmatprep.subr.mxu0 0.0
  %2711 = vmatpush1.msra.mxu0 0.0
  %2712 = vmatprep.subr.mxu0 0.0
  %2713 = vmatpush1.msra.mxu0 0.0
  %2714 = vmatprep.subr.mxu0 0.0
  %2715 = vmatpush1.msra.mxu0 0.0
  %2716 = vmatprep.subr.mxu0 0.0
  %2717 = vmatpush1.msra.mxu0 0.0
  %2718 = vmatprep.subr.mxu0 0.0
  %2719 = vmatpush1.msra.mxu0 0.0
  %2720 = vmatprep.subr.mxu0 0.0
  %2721 = vmatpush1.msra.mxu0 0.0
  %2722 = vmatprep.subr.mxu0 0.0
  %2723 = vmatpush1.msra.mxu0 0.0
  %2724 = vmatprep.subr.mxu0 0.0
  %2725 = vmatpush1.msra.mxu0 0.0
  %2726 = vmatprep.subr.mxu0 0.0
  %2727 = vmatpush1.msra.mxu0 0.0
  %2728 = vmatprep.subr.mxu0 0.0
  %2729 = vmatpush1.msra.mxu0 %v1477
  %2730 = vmatprep.subr.mxu0 0.0
  %2731 = vmatpush1.msra.mxu0 %v1476
  %2732 = vmatprep.subr.mxu0 0.0
  %2733 = vmatpush1.msra.mxu0 %v1475
  %2734 = vmatprep.subr.mxu0 0.0
  %2735 = vmatpush1.msra.mxu0 %v1474
  %2736 = vmatprep.subr.mxu0 0.0
  %2737 = vmatpush2.msra.mxu0 0.0
  %2738 = vmatprep.subr.mxu0 0.0
  %2739 = vmatpush2.msra.mxu0 0.0
  %2740 = vmatprep.subr.mxu0 0.0
  %2741 = vmatpush2.msra.mxu0 0.0
  %2742 = vmatprep.subr.mxu0 0.0
  %2743 = vmatpush2.msra.mxu0 0.0
  %2744 = vmatprep.subr.mxu0 0.0
  %2745 = vmatpush2.msra.mxu0 0.0
  %2746 = vmatprep.subr.mxu0 0.0
  %2747 = vmatpush2.msra.mxu0 0.0
  %2748 = vmatprep.subr.mxu0 0.0
  %2749 = vmatpush2.msra.mxu0 0.0
  %2750 = vmatprep.subr.mxu0 0.0
  %2751 = vmatpush2.msra.mxu0 0.0
  %2752 = vmatprep.subr.mxu0 0.0
  %2753 = vmatpush2.msra.mxu0 0.0
  %2754 = vmatprep.subr.mxu0 0.0
  %2755 = vmatpush2.msra.mxu0 0.0
  %2756 = vmatprep.subr.mxu0 0.0
  %2757 = vmatpush2.msra.mxu0 0.0
  %2758 = vmatprep.subr.mxu0 0.0
  %2759 = vmatpush2.msra.mxu0 0.0
  %2760 = vmatprep.subr.mxu0 0.0
  %2761 = vmatpush2.msra.mxu0 0.0
  %2762 = vmatprep.subr.mxu0 0.0
  %2763 = vmatpush2.msra.mxu0 0.0
  %2764 = vmatprep.subr.mxu0 0.0
  %2765 = vmatpush2.msra.mxu0 0.0
  %2766 = vmatprep.subr.mxu0 0.0
  %2767 = vmatpush2.msra.mxu0 0.0
  %2768 = vmatprep.mubr.f32.mxu0 0.0
  %2769 = vmatmul.mubr.f32.gmra.mxu0 %v2702
  %v2770 = vpop.f32.mrf.mxu0
  %v2771 = vadd.f32 0.0, %v2770
  %v2772 = vpop.f32.mrf.mxu0
  %2773 = vdwg.mxu0
  %v2775 = vsel %vm40, %v2698, 0
  %2777 = vmatprep.subr.mxu0 0.0
  %2778 = vmatpush1.msra.mxu0 0.0
  %2779 = vmatprep.subr.mxu0 0.0
  %2780 = vmatpush1.msra.mxu0 0.0
  %2781 = vmatprep.subr.mxu0 0.0
  %2782 = vmatpush1.msra.mxu0 0.0
  %2783 = vmatprep.subr.mxu0 0.0
  %2784 = vmatpush1.msra.mxu0 0.0
  %2785 = vmatprep.subr.mxu0 0.0
  %2786 = vmatpush1.msra.mxu0 0.0
  %2787 = vmatprep.subr.mxu0 0.0
  %2788 = vmatpush1.msra.mxu0 0.0
  %2789 = vmatprep.subr.mxu0 0.0
  %2790 = vmatpush1.msra.mxu0 0.0
  %2791 = vmatprep.subr.mxu0 0.0
  %2792 = vmatpush1.msra.mxu0 0.0
  %2793 = vmatprep.subr.mxu0 0.0
  %2794 = vmatpush1.msra.mxu0 0.0
  %2795 = vmatprep.subr.mxu0 0.0
  %2796 = vmatpush1.msra.mxu0 0.0
  %2797 = vmatprep.subr.mxu0 0.0
  %2798 = vmatpush1.msra.mxu0 0.0
  %2799 = vmatprep.subr.mxu0 0.0
  %2800 = vmatpush1.msra.mxu0 0.0
  %2801 = vmatprep.subr.mxu0 0.0
  %2802 = vmatpush1.msra.mxu0 %v1473
  %2803 = vmatprep.subr.mxu0 0.0
  %2804 = vmatpush1.msra.mxu0 %v1472
  %2805 = vmatprep.subr.mxu0 0.0
  %2806 = vmatpush1.msra.mxu0 %v1471
  %2807 = vmatprep.subr.mxu0 0.0
  %2808 = vmatpush1.msra.mxu0 %v1470
  %2809 = vmatprep.subr.mxu0 0.0
  %2810 = vmatpush2.msra.mxu0 0.0
  %2811 = vmatprep.subr.mxu0 0.0
  %2812 = vmatpush2.msra.mxu0 0.0
  %2813 = vmatprep.subr.mxu0 0.0
  %2814 = vmatpush2.msra.mxu0 0.0
  %2815 = vmatprep.subr.mxu0 0.0
  %2816 = vmatpush2.msra.mxu0 0.0
  %2817 = vmatprep.subr.mxu0 0.0
  %2818 = vmatpush2.msra.mxu0 0.0
  %2819 = vmatprep.subr.mxu0 0.0
  %2820 = vmatpush2.msra.mxu0 0.0
  %2821 = vmatprep.subr.mxu0 0.0
  %2822 = vmatpush2.msra.mxu0 0.0
  %2823 = vmatprep.subr.mxu0 0.0
  %2824 = vmatpush2.msra.mxu0 0.0
  %2825 = vmatprep.subr.mxu0 0.0
  %2826 = vmatpush2.msra.mxu0 0.0
  %2827 = vmatprep.subr.mxu0 0.0
  %2828 = vmatpush2.msra.mxu0 0.0
  %2829 = vmatprep.subr.mxu0 0.0
  %2830 = vmatpush2.msra.mxu0 0.0
  %2831 = vmatprep.subr.mxu0 0.0
  %2832 = vmatpush2.msra.mxu0 0.0
  %2833 = vmatprep.subr.mxu0 0.0
  %2834 = vmatpush2.msra.mxu0 0.0
  %2835 = vmatprep.subr.mxu0 0.0
  %2836 = vmatpush2.msra.mxu0 0.0
  %2837 = vmatprep.subr.mxu0 0.0
  %2838 = vmatpush2.msra.mxu0 0.0
  %2839 = vmatprep.subr.mxu0 0.0
  %2840 = vmatpush2.msra.mxu0 0.0
  %2841 = vmatprep.mubr.f32.mxu0 0.0
  %2842 = vmatmul.mubr.f32.gmra.mxu0 %v2775
  %v2843 = vpop.f32.mrf.mxu0
  %v2844 = vadd.f32 %v2771, %v2843
  %v2845 = vpop.f32.mrf.mxu0
  %2846 = vdwg.mxu0
  %v2847 = vadd.f32 %v2844, %v1627
  %v2848 = vxor.u32 %v2847, 2147483648
  %v2849 = vmul.f32 %v2848, 1.442695
  %v2850 = vpow.pop %v2849
  %v2851 = vadd.f32 %v2850, 1.0
  %v2852 = vrcp.pop %v2851
  %v2853 = vmul.f32 1.0, %v2852
  %v2854 = vtanh.pop %v2847
  %v2855 = vmul.f32 %v2853, %v2691
  %2857 = vrot.lane.b32.xlu0 %v2854, 64
  %v2858 = vpop.permute.xlu0 %2857
  %v2860 = vmul.f32 %v2853, %v2858
  %2862 = vrot.lane.b32.xlu0 %v2860, 32
  %v2863 = vpop.permute.xlu0 %2862
  %v2865 = vadd.f32 %v2855, %v2863
  %v2866 = vtanh.pop %v2865
  %2868 = vrot.lane.b32.xlu0 %v2866, 64
  %v2869 = vpop.permute.xlu0 %2868
  %v2871 = vmul.f32 %v2853, %v2869
  %v2872 = vld [vmem:[%s7] sm:$0xff]
  %v2873 = vld [vmem:[%s7 + $0x8] sm:$0xff]
  %v2874 = vld [vmem:[%s7 + $0x10] sm:$0xff]
  %v2875 = vld [vmem:[%s7 + $0x18] sm:$0xff]
  %v2876 = vld [vmem:[%s8] sm:$0x1]
  %v2878 = vlaneseq
  %v2879 = vshrl.u32 %v2878, 7
  %v2880 = vsub.s32 0, %v2879
  %v2881 = vrot.slane %v2876, %v2880
  %2884 = vrot.lane.b32.xlu0 %v2871, 32
  %v2885 = vpop.permute.xlu0 %2884
  %v2886 = vsel %vm40, %v2885, 0
  %2888 = vmatprep.subr.mxu0 0.0
  %2889 = vmatpush1.msra.mxu0 0.0
  %2890 = vmatprep.subr.mxu0 0.0
  %2891 = vmatpush1.msra.mxu0 0.0
  %2892 = vmatprep.subr.mxu0 0.0
  %2893 = vmatpush1.msra.mxu0 0.0
  %2894 = vmatprep.subr.mxu0 0.0
  %2895 = vmatpush1.msra.mxu0 0.0
  %2896 = vmatprep.subr.mxu0 0.0
  %2897 = vmatpush1.msra.mxu0 0.0
  %2898 = vmatprep.subr.mxu0 0.0
  %2899 = vmatpush1.msra.mxu0 0.0
  %2900 = vmatprep.subr.mxu0 0.0
  %2901 = vmatpush1.msra.mxu0 0.0
  %2902 = vmatprep.subr.mxu0 0.0
  %2903 = vmatpush1.msra.mxu0 0.0
  %2904 = vmatprep.subr.mxu0 0.0
  %2905 = vmatpush1.msra.mxu0 0.0
  %2906 = vmatprep.subr.mxu0 0.0
  %2907 = vmatpush1.msra.mxu0 0.0
  %2908 = vmatprep.subr.mxu0 0.0
  %2909 = vmatpush1.msra.mxu0 0.0
  %2910 = vmatprep.subr.mxu0 0.0
  %2911 = vmatpush1.msra.mxu0 0.0
  %2912 = vmatprep.subr.mxu0 0.0
  %2913 = vmatpush1.msra.mxu0 %v2875
  %2914 = vmatprep.subr.mxu0 0.0
  %2915 = vmatpush1.msra.mxu0 %v2874
  %2916 = vmatprep.subr.mxu0 0.0
  %2917 = vmatpush1.msra.mxu0 %v2873
  %2918 = vmatprep.subr.mxu0 0.0
  %2919 = vmatpush1.msra.mxu0 %v2872
  %2920 = vmatprep.subr.mxu0 0.0
  %2921 = vmatpush2.msra.mxu0 0.0
  %2922 = vmatprep.subr.mxu0 0.0
  %2923 = vmatpush2.msra.mxu0 0.0
  %2924 = vmatprep.subr.mxu0 0.0
  %2925 = vmatpush2.msra.mxu0 0.0
  %2926 = vmatprep.subr.mxu0 0.0
  %2927 = vmatpush2.msra.mxu0 0.0
  %2928 = vmatprep.subr.mxu0 0.0
  %2929 = vmatpush2.msra.mxu0 0.0
  %2930 = vmatprep.subr.mxu0 0.0
  %2931 = vmatpush2.msra.mxu0 0.0
  %2932 = vmatprep.subr.mxu0 0.0
  %2933 = vmatpush2.msra.mxu0 0.0
  %2934 = vmatprep.subr.mxu0 0.0
  %2935 = vmatpush2.msra.mxu0 0.0
  %2936 = vmatprep.subr.mxu0 0.0
  %2937 = vmatpush2.msra.mxu0 0.0
  %2938 = vmatprep.subr.mxu0 0.0
  %2939 = vmatpush2.msra.mxu0 0.0
  %2940 = vmatprep.subr.mxu0 0.0
  %2941 = vmatpush2.msra.mxu0 0.0
  %2942 = vmatprep.subr.mxu0 0.0
  %2943 = vmatpush2.msra.mxu0 0.0
  %2944 = vmatprep.subr.mxu0 0.0
  %2945 = vmatpush2.msra.mxu0 0.0
  %2946 = vmatprep.subr.mxu0 0.0
  %2947 = vmatpush2.msra.mxu0 0.0
  %2948 = vmatprep.subr.mxu0 0.0
  %2949 = vmatpush2.msra.mxu0 0.0
  %2950 = vmatprep.subr.mxu0 0.0
  %2951 = vmatpush2.msra.mxu0 0.0
  %2952 = vmatprep.mubr.f32.mxu0 0.0
  %2953 = vmatmul.mubr.f32.gmra.mxu0 %v2886
  %v2954 = vpop.f32.mrf.mxu0
  %v2955 = vadd.f32 %v2881, %v2954
  %v2956 = vpop.f32.mrf.mxu0
  %2957 = vdwg.mxu0
  %2958 = vst.msk [vmem:[%s9] sm:$0xff] %vm114, %v2955
  // Predicated region
  $region38: #{_lstm_model_forward.1} parent=0 // pred_check
    _
  $region39: #{_lstm_model_forward.1} parent=0 // pred_check_branch
    %2960 = sbr.rel (0) target = $region41
  $region40: #{_lstm_model_forward.1} parent=0 // pred_region
    _
  $region41: #{_lstm_model_forward.1} parent=0 // pred_fallthru
    _
  // Predicated region
  $region42: #{_lstm_model_forward.1} parent=0 // pred_check
    _
  $region43: #{_lstm_model_forward.1} parent=0 // pred_check_branch
    %2962 = sbr.rel (0) target = $region45
  $region44: #{_lstm_model_forward.1} parent=0 // pred_region
    _
  $region45: #{_lstm_model_forward.1} parent=0 // pred_fallthru
    _

</llo_original>
